<compile_context>
chip_gen: v7x
topology: tpu7x:2x2x1
jax: 0.10.0
libtpu: 0.0.40
codegen_flags: <defaults>
</compile_context>

<pallas_src>
import math
import functools

import jax
import jax.numpy as jnp
from jax import lax
from jax.experimental import pallas as pl
from jax.experimental.pallas import tpu as pltpu


_VMEM_LIMIT_BYTES = 40 * 1024 * 1024      # safe headroom on v7x (64 MiB) too
_MM_TM, _MM_TN, _MM_TK = 512, 512, 512    # projection matmul tiles
_ATTN_T = 256                             # attention q/kv tile (tq == tk)
_NEG_INF = -0.7 * float(jnp.finfo(jnp.float32).max)


# ----------------------------- tiled matmul -------------------------------- #

def _matmul_kernel(x_ref, w_ref, o_ref, acc_ref):
    @pl.when(pl.program_id(2) == 0)
    def _init():
        acc_ref[...] = jnp.zeros(acc_ref.shape, jnp.float32)

    acc_ref[...] += jnp.dot(x_ref[...], w_ref[...],
                            preferred_element_type=jnp.float32)

    @pl.when(pl.program_id(2) == pl.num_programs(2) - 1)
    def _done():
        o_ref[...] = acc_ref[...].astype(o_ref.dtype)


def matmul_pallas(x, w, *, tm=_MM_TM, tn=_MM_TN, tk=_MM_TK):
    M, K = x.shape
    K2, N = w.shape
    assert K == K2
    tm, tn, tk = min(tm, M), min(tn, N), min(tk, K)
    assert M % tm == 0 and N % tn == 0 and K % tk == 0, (M, N, K, tm, tn, tk)
    return pl.pallas_call(
        _matmul_kernel,
        out_shape=jax.ShapeDtypeStruct((M, N), x.dtype),
        grid=(M // tm, N // tn, K // tk),
        in_specs=[
            pl.BlockSpec((tm, tk), lambda i, j, k: (i, k)),
            pl.BlockSpec((tk, tn), lambda i, j, k: (k, j)),
        ],
        out_specs=pl.BlockSpec((tm, tn), lambda i, j, k: (i, j)),
        scratch_shapes=[pltpu.VMEM((tm, tn), jnp.float32)],
        compiler_params=pltpu.CompilerParams(
            dimension_semantics=("parallel", "parallel", "arbitrary"),
            vmem_limit_bytes=_VMEM_LIMIT_BYTES),
    )(x, w)


# --------- fused RoPE + GQA causal flash attention (online softmax) --------- #

def _flash_kernel(q_ref, k_ref, v_ref, cq_ref, sq_ref, ck_ref, sk_ref, o_ref,
                  m_scr, l_scr, acc_scr, qrot_scr, *,
                  groups, head_dim, scale, softcap):
    qt = pl.program_id(2)
    kv = pl.program_id(3)
    D = head_dim
    half = D // 2
    Tk = k_ref.shape[0]
    rep_k = Tk // 128          # lane-replication factor for the kv width
    rep_d = D // 128           # lane-replication factor for the head width

    def tile_lanes(x, rep):
        return x if rep == 1 else jnp.tile(x, (1, rep))

    @pl.when(kv == 0)
    def _init():
        m_scr[...] = jnp.full(m_scr.shape, _NEG_INF, jnp.float32)
        l_scr[...] = jnp.zeros(l_scr.shape, jnp.float32)
        acc_scr[...] = jnp.zeros(acc_scr.shape, jnp.float32)
        # RoPE (NeoX rotate-half via XLU roll, sign-folded sin) + 1/sqrt(D) scale
        # applied to every query head of this GQA group exactly once per q-tile.
        cos_q = cq_ref[...]
        sin_q = sq_ref[...]
        for gi in range(groups):
            dl = slice(gi * D, (gi + 1) * D)
            qg = q_ref[:, dl].astype(jnp.float32)
            qr = (qg * cos_q + pltpu.roll(qg, shift=half, axis=1) * sin_q) * scale
            qrot_scr[:, dl] = qr.astype(qrot_scr.dtype)

    def _update(masked):
        # Rotate the shared K tile once per kv step (trivial: roll + 2 muls + add).
        cos_k = ck_ref[...]
        sin_k = sk_ref[...]
        k = k_ref[...].astype(jnp.float32)
        k = (k * cos_k + pltpu.roll(k, shift=half, axis=1) * sin_k).astype(k_ref.dtype)
        v = v_ref[...]
        for gi in range(groups):
            ml = slice(gi * 128, (gi + 1) * 128)
            dl = slice(gi * D, (gi + 1) * D)
            q = qrot_scr[:, dl]
            # contract last dims directly (no k.T / XLU transpose)
            s = lax.dot_general(q, k, (((1,), (1,)), ((), ())),
                                preferred_element_type=jnp.float32)   # (Tq, Tk)
            if softcap > 0.0:
                s = softcap * jnp.tanh(s * (1.0 / softcap))
            if masked:   # causal mask only exists on the diagonal block
                row = lax.broadcasted_iota(jnp.int32, s.shape, 0)
                col = lax.broadcasted_iota(jnp.int32, s.shape, 1)
                s = jnp.where(col <= row, s, _NEG_INF)

            m_prev = m_scr[:, ml]                      # lane-replicated (Tq, 128)
            l_prev = l_scr[:, ml]
            m_new = jnp.maximum(m_prev, jnp.max(s, axis=-1, keepdims=True))
            alpha = jnp.exp(m_prev - m_new)
            p = jnp.exp(s - tile_lanes(m_new, rep_k))
            l_scr[:, ml] = alpha * l_prev + jnp.sum(p, axis=-1, keepdims=True)
            acc_scr[:, dl] = tile_lanes(alpha, rep_d) * acc_scr[:, dl] + jnp.dot(
                p.astype(v.dtype), v, preferred_element_type=jnp.float32)
            m_scr[:, ml] = m_new

    @pl.when(kv < qt)            # off-diagonal contributing blocks: no mask
    def _off_diag():
        _update(masked=False)

    @pl.when(kv == qt)           # diagonal block: mask + finalize
    def _diag():
        _update(masked=True)
        for gi in range(groups):
            ml = slice(gi * 128, (gi + 1) * 128)
            dl = slice(gi * D, (gi + 1) * D)
            inv_l = pl.reciprocal(l_scr[:, ml], approx=True)
            o_ref[:, dl] = (acc_scr[:, dl] * tile_lanes(inv_l, rep_d)
                            ).astype(o_ref.dtype)
    # kv > qt: fully-masked block — compute skipped and (thanks to the clamped
    # K/V index_maps) its DMA elided as well.


def flash_attention_pallas(xqkv, cos_full, sin_signed, *, n_heads, n_kv_heads,
                           head_dim, softcap, block=_ATTN_T):
    B, S, packed = xqkv.shape
    D = head_dim
    H, Hkv = n_heads, n_kv_heads
    groups = H // Hkv
    assert packed == (H + 2 * Hkv) * D
    T = min(block, S)
    assert S % T == 0
    nt = S // T
    sq = pl.Squeezed()
    kernel = functools.partial(_flash_kernel, groups=groups, head_dim=D,
                               scale=1.0 / math.sqrt(D), softcap=float(softcap))

    # Q heads of group g are contiguous: packed heads [g*groups, (g+1)*groups).
    def q_map(b, g, qt, kt):  return (b, qt, g)
    # Clamp K/V (and the K-side rope tables) to the diagonal so skipped blocks
    # repeat the previous block index and Pallas elides their DMA.
    def k_map(b, g, qt, kt):  return (b, jnp.minimum(kt, qt), H + g)
    def v_map(b, g, qt, kt):  return (b, jnp.minimum(kt, qt), H + Hkv + g)
    def rq_map(b, g, qt, kt): return (qt, 0)
    def rk_map(b, g, qt, kt): return (jnp.minimum(kt, qt), 0)
    def o_map(b, g, qt, kt):  return (b, qt, g)

    return pl.pallas_call(
        kernel,
        out_shape=jax.ShapeDtypeStruct((B, S, H * D), xqkv.dtype),
        grid=(B, Hkv, nt, nt),
        in_specs=[
            pl.BlockSpec((sq, T, groups * D), q_map),   # Q heads of the group
            pl.BlockSpec((sq, T, D), k_map),            # shared K head (GQA)
            pl.BlockSpec((sq, T, D), v_map),            # shared V head (GQA)
            pl.BlockSpec((T, D), rq_map),               # cos for Q rows
            pl.BlockSpec((T, D), rq_map),               # sin (signed) for Q rows
            pl.BlockSpec((T, D), rk_map),               # cos for K rows
            pl.BlockSpec((T, D), rk_map),               # sin (signed) for K rows
        ],
        out_specs=pl.BlockSpec((sq, T, groups * D), o_map),
        scratch_shapes=[
            pltpu.VMEM((T, groups * 128), jnp.float32),   # running max (lane-dense)
            pltpu.VMEM((T, groups * 128), jnp.float32),   # running denom (lane-dense)
            pltpu.VMEM((T, groups * D), jnp.float32),     # running numerator
            pltpu.VMEM((T, groups * D), xqkv.dtype),      # RoPE'd + scaled Q
        ],
        compiler_params=pltpu.CompilerParams(
            dimension_semantics=("parallel", "parallel", "parallel", "arbitrary"),
            vmem_limit_bytes=_VMEM_LIMIT_BYTES),
    )(xqkv, xqkv, xqkv, cos_full, sin_signed, cos_full, sin_signed)


# ----------------------------- module wrapper ------------------------------- #

class QuantAttentionFusedPallas:
    def __init__(self, hidden_size, n_heads, n_kv_heads, max_seq_len=2048,
                 rope_theta=10000.0, attn_logit_softcapping=0.0, head_dim=None,
                 compute_dtype=jnp.bfloat16, key=None):
        self.hidden_size = hidden_size
        self.n_heads = n_heads
        self.n_kv_heads = n_kv_heads
        self.head_dim = head_dim if head_dim is not None else hidden_size // n_heads
        assert self.head_dim % 128 == 0, "this Pallas port tiles heads at 128 lanes"
        self.n_kv_groups = n_heads // n_kv_heads
        self.rope_theta = rope_theta
        self.softcap = attn_logit_softcapping
        self.max_seq_len = max_seq_len
        self.compute_dtype = compute_dtype
        self.start_pos = 0

        if key is None:
            key = jax.random.PRNGKey(0)
        k1, k2 = jax.random.split(key)
        qkv_out = (n_heads + 2 * n_kv_heads) * self.head_dim
        # Deterministic synthetic dense weights standing in for the AWQ-quantized
        # qkv_proj / o_proj, dequantized once to the bf16 compute dtype.
        # TODO(synk): on-the-fly int4 AWQ dequant (i8/i4 MXU path on v5e/v6e,
        # fp8 on v7x) inside the matmul kernel.
        self.w_qkv_f32 = jax.random.normal(k1, (hidden_size, qkv_out), jnp.float32) * 0.02
        self.w_o_f32 = jax.random.normal(
            k2, (n_heads * self.head_dim, hidden_size), jnp.float32) * 0.02
        self.w_qkv = self.w_qkv_f32.astype(compute_dtype)
        self.w_o = self.w_o_f32.astype(compute_dtype)

    def _rope_tables(self, start_pos, seqlen):
        d = self.head_dim
        inv = 1.0 / (self.rope_theta ** (jnp.arange(0, d, 2, dtype=jnp.float32) / d))
        t = jnp.arange(start_pos, start_pos + seqlen, dtype=jnp.float32)
        ang = jnp.outer(t, inv)                               # (S, d//2)
        cos, sin = jnp.cos(ang), jnp.sin(ang)
        cos_full = jnp.concatenate([cos, cos], axis=-1)       # (S, d)
        sin_signed = jnp.concatenate([-sin, sin], axis=-1)    # (S, d), sign folded
        return cos_full, sin_signed

    def __call__(self, hidden_states):
        bsz, seqlen, _ = hidden_states.shape
        x2d = hidden_states.astype(self.compute_dtype).reshape(
            bsz * seqlen, self.hidden_size)

        # fused QKV projection (tiled, bf16 operands, f32 accumulation)
        xqkv = matmul_pallas(x2d, self.w_qkv)
        xqkv = xqkv.reshape(
            bsz, seqlen, (self.n_heads + 2 * self.n_kv_heads) * self.head_dim)

        # RoPE + 1/sqrt(D) scaling fused into the GQA causal flash attention;
        # output is produced directly in the packed (B, S, H*D) layout.
        cos_full, sin_signed = self._rope_tables(self.start_pos, seqlen)
        attention_weight = flash_attention_pallas(
            xqkv, cos_full, sin_signed, n_heads=self.n_heads,
            n_kv_heads=self.n_kv_heads, head_dim=self.head_dim,
            softcap=self.softcap)

        attn_output = matmul_pallas(
            attention_weight.reshape(bsz * seqlen, -1), self.w_o
        ).reshape(bsz, seqlen, self.hidden_size)

        self.start_pos += seqlen
        # TODO(synk): WindowedCache.update_kv side effect and the seqlen == 1
        # decode path (flash_attn_with_kvcache) are not implemented.
        past_key_value = [jnp.zeros((1, 1, self.start_pos, 1), jnp.float32)]
        return attn_output, attention_weight, past_key_value


# ------------------------------ reference ----------------------------------- #

def _reference_forward(hidden_states, w_qkv, w_o, n_heads, n_kv_heads, head_dim,
                       rope_theta, softcap):
    P = lax.Precision.HIGHEST
    bsz, seqlen, hidden = hidden_states.shape
    xqkv = jnp.dot(hidden_states.reshape(bsz * seqlen, hidden), w_qkv, precision=P)
    xqkv = xqkv.reshape(bsz, seqlen, n_heads + 2 * n_kv_heads, head_dim)
    xq = xqkv[:, :, :n_heads]
    xk = xqkv[:, :, n_heads:n_heads + n_kv_heads]
    xv = xqkv[:, :, n_heads + n_kv_heads:]

    d = head_dim
    inv = 1.0 / (rope_theta ** (jnp.arange(0, d, 2, dtype=jnp.float32) / d))
    t = jnp.arange(seqlen, dtype=jnp.float32)
    ang = jnp.outer(t, inv)
    cos, sin = jnp.cos(ang), jnp.sin(ang)

    def rope(x):  # x: (b, s, h, d)
        xr, xi = x[..., :d // 2], x[..., d // 2:]
        c = cos[None, :, None, :]
        s_ = sin[None, :, None, :]
        return jnp.concatenate([xr * c - xi * s_, xr * s_ + xi * c], axis=-1)

    xq, xk = rope(xq), rope(xk)

    groups = n_heads // n_kv_heads
    xk = jnp.repeat(xk, groups, axis=2)
    xv = jnp.repeat(xv, groups, axis=2)

    q = jnp.transpose(xq, (0, 2, 1, 3))
    k = jnp.transpose(xk, (0, 2, 1, 3))
    v = jnp.transpose(xv, (0, 2, 1, 3))
    s = jnp.einsum("bhqd,bhkd->bhqk", q, k, precision=P) / math.sqrt(head_dim)
    if softcap > 0.0:
        s = softcap * jnp.tanh(s / softcap)
    mask = jnp.tril(jnp.ones((seqlen, seqlen), bool))
    s = jnp.where(mask[None, None], s, -jnp.inf)
    p = jax.nn.softmax(s, axis=-1)
    o = jnp.einsum("bhqk,bhkd->bhqd", p, v, precision=P)
    attn_w = jnp.transpose(o, (0, 2, 1, 3)).reshape(bsz, seqlen, -1)
    attn_out = jnp.dot(attn_w.reshape(bsz * seqlen, -1), w_o,
                       precision=P).reshape(bsz, seqlen, hidden)
    return attn_out, attn_w


# --------------------------------- main -------------------------------------- #

if __name__ == "__main__":
    hidden_size = 512
    n_heads = 4
    n_kv_heads = 2
    head_dim = hidden_size // n_heads      # 128 (lane-aligned)
    bsz, seqlen = 2, 512                   # 2 q-tiles x 2 kv-tiles per kv head

    key = jax.random.PRNGKey(0)
    k_x, k_w = jax.random.split(key)
    hidden_states = jax.random.normal(k_x, (bsz, seqlen, hidden_size), jnp.float32)

    module = QuantAttentionFusedPallas(
        hidden_size=hidden_size, n_heads=n_heads, n_kv_heads=n_kv_heads,
        max_seq_len=1024, rope_theta=10000.0, attn_logit_softcapping=0.0, key=k_w)

    attn_output, attention_weight, past_key_value = module(hidden_states)
    attn_output = jax.block_until_ready(attn_output)
    attention_weight = jax.block_until_ready(attention_weight)

    ref_out, ref_w = _reference_forward(
        hidden_states, module.w_qkv_f32, module.w_o_f32, n_heads, n_kv_heads,
        head_dim, module.rope_theta, module.softcap)

    assert attn_output.shape == (bsz, seqlen, hidden_size)
    assert attention_weight.shape == (bsz, seqlen, n_heads * head_dim)
    assert past_key_value[0].shape == (1, 1, seqlen, 1)

    # bf16 operands + f32 accumulation -> compare against the f32 reference with
    # bf16-level tolerances.
    out_f32 = attn_output.astype(jnp.float32)
    w_f32 = attention_weight.astype(jnp.float32)
    assert jnp.allclose(out_f32, ref_out, atol=2e-2, rtol=2e-2), \
        float(jnp.max(jnp.abs(out_f32 - ref_out)))
    assert jnp.allclose(w_f32, ref_w, atol=2e-2, rtol=2e-2), \
        float(jnp.max(jnp.abs(w_f32 - ref_w)))

    print("KERNEL_OK")
</pallas_src>

<mosaic_0001>
module attributes {stable_mosaic.version = 11 : i64} {
  func.func @_matmul_kernel(%arg0: i32, %arg1: i32, %arg2: i32, %arg3: memref<512x512xbf16, #tpu.memory_space<vmem>>, %arg4: memref<512x512xbf16, #tpu.memory_space<vmem>>, %arg5: memref<512x512xbf16, #tpu.memory_space<vmem>>, %arg6: memref<512x512xf32, #tpu.memory_space<vmem>>) attributes {dimension_semantics = [#tpu.dimension_semantics<parallel>, #tpu.dimension_semantics<parallel>, #tpu.dimension_semantics<arbitrary>], iteration_bounds = array<i64: 2, 2, 1>, scalar_prefetch = 0 : i64, scratch_operands = 1 : i64, tpu.core_type = #tpu.core_type<tc>, window_params = [{transform_indices = @transform_0, window_bounds = array<i64: 512, 512>}, {transform_indices = @transform_1, window_bounds = array<i64: 512, 512>}, {transform_indices = @transform_2, window_bounds = array<i64: 512, 512>}]} {
    %c0_i32 = arith.constant 0 : i32
    %0 = arith.cmpi eq, %arg2, %c0_i32 : i32
    %1 = arith.extui %0 : i1 to i32
    %c0_i32_0 = arith.constant 0 : i32
    %2 = arith.cmpi ne, %1, %c0_i32_0 : i32
    scf.if %2 {
      %cst_10 = arith.constant 0.000000e+00 : f32
      %12 = vector.broadcast %cst_10 : f32 to vector<512x512xf32>
      %c0_11 = arith.constant 0 : index
      %c0_12 = arith.constant 0 : index
      %13 = vector.load %arg6[%c0_11, %c0_12] : memref<512x512xf32, #tpu.memory_space<vmem>>, vector<512x512xf32>
      tpu.vector_store %arg6[%c0_11, %c0_12], %12 {strides = array<i32>} : memref<512x512xf32, #tpu.memory_space<vmem>>, vector<512x512xf32>,
    } else {
    }
    %c0 = arith.constant 0 : index
    %c0_1 = arith.constant 0 : index
    %3 = vector.load %arg6[%c0, %c0_1] : memref<512x512xf32, #tpu.memory_space<vmem>>, vector<512x512xf32>
    %c0_2 = arith.constant 0 : index
    %c0_3 = arith.constant 0 : index
    %4 = vector.load %arg3[%c0_2, %c0_3] : memref<512x512xbf16, #tpu.memory_space<vmem>>, vector<512x512xbf16>
    %c0_4 = arith.constant 0 : index
    %c0_5 = arith.constant 0 : index
    %5 = vector.load %arg4[%c0_4, %c0_5] : memref<512x512xbf16, #tpu.memory_space<vmem>>, vector<512x512xbf16>
    %cst = arith.constant dense<0.000000e+00> : vector<512x512xf32>
    %6 = tpu.matmul %4, %5, %cst {dimension_numbers = #tpu.dot_dimension_numbers<[1], [0], [0], [1], [0, 0, 1, 1], [], []>} : vector<512x512xbf16>, vector<512x512xbf16>, vector<512x512xf32> -> vector<512x512xf32>
    %7 = arith.addf %3, %6 : vector<512x512xf32>
    %c0_6 = arith.constant 0 : index
    %c0_7 = arith.constant 0 : index
    %8 = vector.load %arg6[%c0_6, %c0_7] : memref<512x512xf32, #tpu.memory_space<vmem>>, vector<512x512xf32>
    tpu.vector_store %arg6[%c0_6, %c0_7], %7 {strides = array<i32>} : memref<512x512xf32, #tpu.memory_space<vmem>>, vector<512x512xf32>,
    %c0_i32_8 = arith.constant 0 : i32
    %9 = arith.cmpi eq, %arg2, %c0_i32_8 : i32
    %10 = arith.extui %9 : i1 to i32
    %c0_i32_9 = arith.constant 0 : i32
    %11 = arith.cmpi ne, %10, %c0_i32_9 : i32
    scf.if %11 {
      %c0_10 = arith.constant 0 : index
      %c0_11 = arith.constant 0 : index
      %12 = vector.load %arg6[%c0_10, %c0_11] : memref<512x512xf32, #tpu.memory_space<vmem>>, vector<512x512xf32>
      %13 = arith.truncf %12 : vector<512x512xf32> to vector<512x512xbf16>
      %c0_12 = arith.constant 0 : index
      %c0_13 = arith.constant 0 : index
      %14 = vector.load %arg5[%c0_12, %c0_13] : memref<512x512xbf16, #tpu.memory_space<vmem>>, vector<512x512xbf16>
      tpu.vector_store %arg5[%c0_12, %c0_13], %13 {strides = array<i32>} : memref<512x512xbf16, #tpu.memory_space<vmem>>, vector<512x512xbf16>,
    } else {
    }
    return
  }
  func.func @transform_0(%arg0: i32, %arg1: i32, %arg2: i32) -> (i32, i32) {
    %c0_i32 = arith.constant 0 : i32
    return %arg0, %arg2 : i32, i32
  }
  func.func @transform_1(%arg0: i32, %arg1: i32, %arg2: i32) -> (i32, i32) {
    %c0_i32 = arith.constant 0 : i32
    return %arg2, %arg1 : i32, i32
  }
  func.func @transform_2(%arg0: i32, %arg1: i32, %arg2: i32) -> (i32, i32) {
    %c0_i32 = arith.constant 0 : i32
    return %arg0, %arg1 : i32, i32
  }
}

</mosaic_0001>

<llo_original>
// kernel: tpu_custom_call.1
$region0: #{tpu_custom_call.1}
  #allocation0 [shape = 'u32[]', space=smem, size = 0x4, offset = 0x4, fixed_abs, tag = 'smem constant byte address 0x4 - core index']
  #allocation1 [shape = 'u32[144,128]{1,0:T(1,128)}', space=vmem, size = 0x12000, scoped, tag = 'internal scratch']
  #allocation2 [shape = 'f32[512,512]{1,0:T(8,128)}', space=vmem, size = 0x100000, scoped, tag = 'scratch operand']
  %s0 = inlined_call_operand.hbm [shape: bf16[1024,512], index: 0, kind: input, shape index: {}]
  %s1 = inlined_call_operand.hbm [shape: bf16[512,1024], index: 1, kind: input, shape index: {}]
  %s2 = inlined_call_operand.hbm [shape: bf16[1024,1024], index: 2, kind: output, shape index: {}]
  %s3 = sld [smem:[#allocation0]]
  $region57: #{tpu_custom_call.1} parent=0
    _
  %s5 = ssub.s32 1, %s3
  %s6 = scalar_select 0, %s5, %s3
  $region1: #{tpu_custom_call.1} parent=0
    #allocation3 [shape = 'u8[1048576]{0}', space=vmem, size = 0x100000, scoped, tag = 'input window, operand 0']
    #allocation4 [shape = 's32[2]{0}', space=sflag, size = 0x8, scoped, tag = 'scoped memory for tpu_custom_call.1']
    #allocation5 [shape = 's32[2]{0}', space=sflag, size = 0x8, scoped, tag = 'scoped memory for tpu_custom_call.1']
    #allocation6 [shape = 'u8[1048576]{0}', space=vmem, size = 0x100000, scoped, tag = 'input window, operand 1']
    #allocation7 [shape = 's32[2]{0}', space=sflag, size = 0x8, scoped, tag = 'scoped memory for tpu_custom_call.1']
    #allocation8 [shape = 'u8[1048576]{0}', space=vmem, size = 0x100000, scoped, tag = 'output window, operand 0']
    %7 = vsyncpa [#allocation4], 0
    %s8 = scalar_lea.sflag [#allocation4], 1
    %9 = vsyncpa %s8, 0
    %10 = vsyncpa [#allocation7], 0
    %s11 = scalar_lea.sflag [#allocation7], 1
    %12 = vsyncpa %s11, 0
    %13 = vsyncpa [#allocation5], 0
    %s14 = scalar_lea.sflag [#allocation5], 1
    %15 = vsyncpa %s14, 0
    loop: start=0, step=1, limit=6
    $region2: #{tpu_custom_call.1} parent=1 // loop_pre_header
      _
    $region3: #{tpu_custom_call.1} parent=1 // loop_header
      %s17 = sphi 0, %s21
      %p18 = scmp.ge.s32.totalorder %s17, 6
      %s24 = sphi 0, %s43
      %s25 = sphi 0, %s39
      %s26 = sphi 0, %s35
      %s27 = sphi 0, %s24
      %s28 = sphi 0, %s25
      %s29 = sphi 0, %s26
      %s30 = sphi 0, %s27
      %s31 = sphi 0, %s28
      %s32 = sphi 0, %s29
      %s48 = sphi 0, %s50
      %s51 = sphi 0, %s48
      %s52 = sphi 0, %s51
      %s68 = sphi 0, %s52
      %s76 = sphi 0, %s78
      %s79 = sphi 0, %s76
      %s80 = sphi 0, %s79
      %s96 = sphi 0, %s80
      %s104 = sphi 0, %s106
      %s107 = sphi 0, %s104
      %s108 = sphi 0, %s107
      %s124 = sphi 0, %s108
    $region4: #{tpu_custom_call.1} parent=1 // loop_header_branch
      %20 = sbr.rel (%p18) target = $region8
    $region5: #{tpu_custom_call.1} parent=1 // loop_body
      %s22 = ssub.s32 %s17, 1
      %s23 = ssub.s32 %s17, 2
      %s33 = sadd.s32 1, %s26
      %p34 = scmp.ge.s32.totalorder %s33, 1
      %s35 = scalar_select %p34, 0, %s33
      %s36 = sadd.s32 1, %s25
      %s37 = scalar_select %p34, %s36, %s25
      %p38 = scmp.ge.s32.totalorder %s37, 2
      %s39 = scalar_select %p38, 0, %s37
      %s40 = sadd.s32 1, %s24
      %s41 = scalar_select %p38, %s40, %s24
      %p42 = scmp.ge.s32.totalorder %s41, 2
      %s43 = scalar_select %p42, 0, %s41
      %s44 = ssub.s32 %s24, %s43
      %s45 = ssub.s32 %s26, %s35
      %s46 = sor.u32 %s44, %s45
      %p47 = scmp.eq.s32.totalorder %s46, 0
      %s49 = sadd.s32 %s48, 1
      %s50 = scalar_select %p47, %s48, %s49
      %p53 = pneg %p47
      %p54 = scmp.eq.s32.totalorder %s17, 3
      %p55 = por %p53, %p54
      %p56 = scmp.ne.s32.totalorder %s48, %s51
      %p57 = scmp.eq.s32.totalorder %s17, 0
      %p58 = por %p56, %p57
      %p59 = scmp.ne.s32.totalorder %s48, %s51
      %p60 = scmp.eq.s32.totalorder %s22, 3
      %p61 = por %p59, %p60
      %p62 = scmp.ne.s32.totalorder %s51, %s52
      %p63 = scmp.eq.s32.totalorder %s22, 0
      %p64 = por %p62, %p63
      %p65 = scmp.ne.s32.totalorder %s51, %s52
      %p66 = scmp.eq.s32.totalorder %s23, 3
      %p67 = por %p65, %p66
      %p69 = scmp.ne.s32.totalorder %s52, %s68
      %p70 = scmp.eq.s32.totalorder %s23, 0
      %p71 = por %p69, %p70
      %s72 = ssub.s32 %s26, %s35
      %s73 = ssub.s32 %s25, %s39
      %s74 = sor.u32 %s72, %s73
      %p75 = scmp.eq.s32.totalorder %s74, 0
      %s77 = sadd.s32 %s76, 1
      %s78 = scalar_select %p75, %s76, %s77
      %p81 = pneg %p75
      %p82 = scmp.eq.s32.totalorder %s17, 3
      %p83 = por %p81, %p82
      %p84 = scmp.ne.s32.totalorder %s76, %s79
      %p85 = scmp.eq.s32.totalorder %s17, 0
      %p86 = por %p84, %p85
      %p87 = scmp.ne.s32.totalorder %s76, %s79
      %p88 = scmp.eq.s32.totalorder %s22, 3
      %p89 = por %p87, %p88
      %p90 = scmp.ne.s32.totalorder %s79, %s80
      %p91 = scmp.eq.s32.totalorder %s22, 0
      %p92 = por %p90, %p91
      %p93 = scmp.ne.s32.totalorder %s79, %s80
      %p94 = scmp.eq.s32.totalorder %s23, 3
      %p95 = por %p93, %p94
      %p97 = scmp.ne.s32.totalorder %s80, %s96
      %p98 = scmp.eq.s32.totalorder %s23, 0
      %p99 = por %p97, %p98
      %s100 = ssub.s32 %s24, %s43
      %s101 = ssub.s32 %s25, %s39
      %s102 = sor.u32 %s100, %s101
      %p103 = scmp.eq.s32.totalorder %s102, 0
      %s105 = sadd.s32 %s104, 1
      %s106 = scalar_select %p103, %s104, %s105
      %p109 = pneg %p103
      %p110 = scmp.eq.s32.totalorder %s17, 3
      %p111 = por %p109, %p110
      %p112 = scmp.ne.s32.totalorder %s104, %s107
      %p113 = scmp.eq.s32.totalorder %s17, 0
      %p114 = por %p112, %p113
      %p115 = scmp.ne.s32.totalorder %s104, %s107
      %p116 = scmp.eq.s32.totalorder %s22, 3
      %p117 = por %p115, %p116
      %p118 = scmp.ne.s32.totalorder %s107, %s108
      %p119 = scmp.eq.s32.totalorder %s22, 0
      %p120 = por %p118, %p119
      %p121 = scmp.ne.s32.totalorder %s107, %s108
      %p122 = scmp.eq.s32.totalorder %s23, 3
      %p123 = por %p121, %p122
      %p125 = scmp.ne.s32.totalorder %s108, %s124
      %p126 = scmp.eq.s32.totalorder %s23, 0
      %p127 = por %p125, %p126
      %p128 = scmp.le.s32.totalorder 1, %s17
      %p129 = scmp.lt.s32.totalorder %s17, 5
      %p130 = pnand %p128, %p129
      %p131 = pneg %p130
      // Predicated region
      $region9: #{tpu_custom_call.1} parent=5 // pred_check
        _
      $region10: #{tpu_custom_call.1} parent=5 // pred_check_branch
        %133 = sbr.rel (%p130) target = $region12
      $region11: #{tpu_custom_call.1} parent=5 // pred_region
        %s134 = ssub.s32 %s17, 1
      $region12: #{tpu_custom_call.1} parent=5 // pred_fallthru
        _
      %p135 = scmp.lt.s32.totalorder %s17, 4
      // Predicated region
      $region13: #{tpu_custom_call.1} parent=5 // pred_check
        %p136 = pneg %p135
      $region14: #{tpu_custom_call.1} parent=5 // pred_check_branch
        %138 = sbr.rel (%p136) target = $region16
      $region15: #{tpu_custom_call.1} parent=5 // pred_region
        // Predicated region
        $region17: #{tpu_custom_call.1} parent=15 // pred_check
          %p139 = pneg %p58
        $region18: #{tpu_custom_call.1} parent=15 // pred_check_branch
          %141 = sbr.rel (%p139) target = $region20
        $region19: #{tpu_custom_call.1} parent=15 // pred_region
          %s142 = sand.u32 %s48, 1
          %s143 = scalar_lea.sflag [#allocation4], %s142
          %s144 = sand.u32 %s48, 1
          %s145 = smul.addr %s144, 1024
          %s146 = scalar_lea.vmem [#allocation3], %s145
          %s147 = smul.u32 64, %s24
          %s148 = smul.u32 4, %s26
          %s150 = ssub.s32 16384, 16384
          %151 = vsyncadd %s143, %s150
          %s152 = smul.addr %s147, 4
          %s153 = sadd.s32 %s148, %s152
          %s154 = smul.addr %s153, 64
          %s155 = scalar_lea.hbm %s0, %s154
          %s156 = sshll.u32 %s146, 4
          %s157 = int_to_ptr.vmem [resolvable:$true] %s156
          %162 = dma.hbm_to_vmem [thread:$0]  %s155, 16384, %s157, %s143, 256, 256, 16
        $region20: #{tpu_custom_call.1} parent=15 // pred_fallthru
          _
        // Predicated region
        $region21: #{tpu_custom_call.1} parent=15 // pred_check
          %p163 = pneg %p86
        $region22: #{tpu_custom_call.1} parent=15 // pred_check_branch
          %165 = sbr.rel (%p163) target = $region24
        $region23: #{tpu_custom_call.1} parent=15 // pred_region
          %s166 = sand.u32 %s76, 1
          %s167 = scalar_lea.sflag [#allocation7], %s166
          %s168 = sand.u32 %s76, 1
          %s169 = smul.addr %s168, 1024
          %s170 = scalar_lea.vmem [#allocation6], %s169
          %s171 = smul.u32 64, %s26
          %s172 = smul.u32 4, %s25
          %s174 = ssub.s32 16384, 16384
          %175 = vsyncadd %s167, %s174
          %s176 = smul.addr %s171, 8
          %s177 = sadd.s32 %s172, %s176
          %s178 = smul.addr %s177, 64
          %s179 = scalar_lea.hbm %s1, %s178
          %s180 = sshll.u32 %s170, 4
          %s181 = int_to_ptr.vmem [resolvable:$true] %s180
          %186 = dma.hbm_to_vmem [thread:$0]  %s179, 16384, %s181, %s167, 512, 256, 16
        $region24: #{tpu_custom_call.1} parent=15 // pred_fallthru
          _
      $region16: #{tpu_custom_call.1} parent=5 // pred_fallthru
        _
      %p187 = scmp.le.s32.totalorder 1, %s17
      %p188 = scmp.lt.s32.totalorder %s17, 5
      %p189 = pnand %p187, %p188
      %p190 = pneg %p189
      // Predicated region
      $region25: #{tpu_custom_call.1} parent=5 // pred_check
        _
      $region26: #{tpu_custom_call.1} parent=5 // pred_check_branch
        %192 = sbr.rel (%p189) target = $region28
      $region27: #{tpu_custom_call.1} parent=5 // pred_region
        %s193 = ssub.s32 %s17, 1
        %s194 = sand.u32 %s51, 1
        %s195 = scalar_lea.sflag [#allocation4], %s194
        %s196 = sand.u32 %s51, 1
        %s197 = smul.addr %s196, 1024
        %s198 = scalar_lea.vmem [#allocation3], %s197
        // Predicated region
        $region29: #{tpu_custom_call.1} parent=27 // pred_check
          %p199 = pneg %p64
        $region30: #{tpu_custom_call.1} parent=27 // pred_check_branch
          %201 = sbr.rel (%p199) target = $region32
        $region31: #{tpu_custom_call.1} parent=27 // pred_region
          %202 = dma.done %s195, 16384
        $region32: #{tpu_custom_call.1} parent=27 // pred_fallthru
          _
        %s203 = sand.u32 %s79, 1
        %s204 = scalar_lea.sflag [#allocation7], %s203
        %s205 = sand.u32 %s79, 1
        %s206 = smul.addr %s205, 1024
        %s207 = scalar_lea.vmem [#allocation6], %s206
        // Predicated region
        $region33: #{tpu_custom_call.1} parent=27 // pred_check
          %p208 = pneg %p92
        $region34: #{tpu_custom_call.1} parent=27 // pred_check_branch
          %210 = sbr.rel (%p208) target = $region36
        $region35: #{tpu_custom_call.1} parent=27 // pred_region
          %211 = dma.done %s204, 16384
        $region36: #{tpu_custom_call.1} parent=27 // pred_fallthru
          _
        %s212 = sand.u32 %s51, 1
        %s213 = scalar_lea.sflag [#allocation4], %s212
        %s214 = sand.u32 %s51, 1
        %s215 = smul.addr %s214, 1024
        %s216 = scalar_lea.vmem [#allocation3], %s215
        %p217 = pneg %p64
        %p218 = pneg %p61
        %s219 = sand.u32 %s79, 1
        %s220 = scalar_lea.sflag [#allocation7], %s219
        %s221 = sand.u32 %s79, 1
        %s222 = smul.addr %s221, 1024
        %s223 = scalar_lea.vmem [#allocation6], %s222
        %p224 = pneg %p92
        %p225 = pneg %p89
        %p226 = pneg %p120
        %p227 = pneg %p117
        %s228 = sand.u32 %s107, 1
        %s229 = scalar_lea.sflag [#allocation5], %s228
        %s230 = sand.u32 %s107, 1
        %s231 = smul.addr %s230, 1024
        %s232 = scalar_lea.vmem [#allocation8], %s231
        %s233 = smul.u32 64, %s27
        %s234 = smul.u32 4, %s29
        %s235 = smul.u32 64, %s29
        %s236 = smul.u32 4, %s28
        %s237 = smul.u32 64, %s27
        %s238 = smul.u32 4, %s28
        %p239 = scmp.eq.s32.totalorder %s29, 0
        // Predicated region
        $region37: #{tpu_custom_call.1} parent=27 // pred_check
          %p240 = pneg %p239
        $region38: #{tpu_custom_call.1} parent=27 // pred_check_branch
          %242 = sbr.rel (%p240) target = $region40
        $region39: #{tpu_custom_call.1} parent=27 // pred_region
          %243 = vst [vmem:[#allocation2] sm:$0xff] 0.0
          %244 = vst [vmem:[#allocation2 + $0x8] sm:$0xff] 0.0
          %245 = vst [vmem:[#allocation2 + $0x10] sm:$0xff] 0.0
          %246 = vst [vmem:[#allocation2 + $0x18] sm:$0xff] 0.0
          %247 = vst [vmem:[#allocation2 + $0x20] sm:$0xff] 0.0
          %248 = vst [vmem:[#allocation2 + $0x28] sm:$0xff] 0.0
          %249 = vst [vmem:[#allocation2 + $0x30] sm:$0xff] 0.0
          %250 = vst [vmem:[#allocation2 + $0x38] sm:$0xff] 0.0
          %251 = vst [vmem:[#allocation2 + $0x40] sm:$0xff] 0.0
          %252 = vst [vmem:[#allocation2 + $0x48] sm:$0xff] 0.0
          %253 = vst [vmem:[#allocation2 + $0x50] sm:$0xff] 0.0
          %254 = vst [vmem:[#allocation2 + $0x58] sm:$0xff] 0.0
          %255 = vst [vmem:[#allocation2 + $0x60] sm:$0xff] 0.0
          %256 = vst [vmem:[#allocation2 + $0x68] sm:$0xff] 0.0
          %257 = vst [vmem:[#allocation2 + $0x70] sm:$0xff] 0.0
          %258 = vst [vmem:[#allocation2 + $0x78] sm:$0xff] 0.0
          %259 = vst [vmem:[#allocation2 + $0x80] sm:$0xff] 0.0
          %260 = vst [vmem:[#allocation2 + $0x88] sm:$0xff] 0.0
          %261 = vst [vmem:[#allocation2 + $0x90] sm:$0xff] 0.0
          %262 = vst [vmem:[#allocation2 + $0x98] sm:$0xff] 0.0
          %263 = vst [vmem:[#allocation2 + $0xa0] sm:$0xff] 0.0
          %264 = vst [vmem:[#allocation2 + $0xa8] sm:$0xff] 0.0
          %265 = vst [vmem:[#allocation2 + $0xb0] sm:$0xff] 0.0
          %266 = vst [vmem:[#allocation2 + $0xb8] sm:$0xff] 0.0
          %267 = vst [vmem:[#allocation2 + $0xc0] sm:$0xff] 0.0
          %268 = vst [vmem:[#allocation2 + $0xc8] sm:$0xff] 0.0
          %269 = vst [vmem:[#allocation2 + $0xd0] sm:$0xff] 0.0
          %270 = vst [vmem:[#allocation2 + $0xd8] sm:$0xff] 0.0
          %271 = vst [vmem:[#allocation2 + $0xe0] sm:$0xff] 0.0
          %272 = vst [vmem:[#allocation2 + $0xe8] sm:$0xff] 0.0
          %273 = vst [vmem:[#allocation2 + $0xf0] sm:$0xff] 0.0
          %274 = vst [vmem:[#allocation2 + $0xf8] sm:$0xff] 0.0
          %275 = vst [vmem:[#allocation2 + $0x100] sm:$0xff] 0.0
          %276 = vst [vmem:[#allocation2 + $0x108] sm:$0xff] 0.0
          %277 = vst [vmem:[#allocation2 + $0x110] sm:$0xff] 0.0
          %278 = vst [vmem:[#allocation2 + $0x118] sm:$0xff] 0.0
          %279 = vst [vmem:[#allocation2 + $0x120] sm:$0xff] 0.0
          %280 = vst [vmem:[#allocation2 + $0x128] sm:$0xff] 0.0
          %281 = vst [vmem:[#allocation2 + $0x130] sm:$0xff] 0.0
          %282 = vst [vmem:[#allocation2 + $0x138] sm:$0xff] 0.0
          %283 = vst [vmem:[#allocation2 + $0x140] sm:$0xff] 0.0
          %284 = vst [vmem:[#allocation2 + $0x148] sm:$0xff] 0.0
          %285 = vst [vmem:[#allocation2 + $0x150] sm:$0xff] 0.0
          %286 = vst [vmem:[#allocation2 + $0x158] sm:$0xff] 0.0
          %287 = vst [vmem:[#allocation2 + $0x160] sm:$0xff] 0.0
          %288 = vst [vmem:[#allocation2 + $0x168] sm:$0xff] 0.0
          %289 = vst [vmem:[#allocation2 + $0x170] sm:$0xff] 0.0
          %290 = vst [vmem:[#allocation2 + $0x178] sm:$0xff] 0.0
          %291 = vst [vmem:[#allocation2 + $0x180] sm:$0xff] 0.0
          %292 = vst [vmem:[#allocation2 + $0x188] sm:$0xff] 0.0
          %293 = vst [vmem:[#allocation2 + $0x190] sm:$0xff] 0.0
          %294 = vst [vmem:[#allocation2 + $0x198] sm:$0xff] 0.0
          %295 = vst [vmem:[#allocation2 + $0x1a0] sm:$0xff] 0.0
          %296 = vst [vmem:[#allocation2 + $0x1a8] sm:$0xff] 0.0
          %297 = vst [vmem:[#allocation2 + $0x1b0] sm:$0xff] 0.0
          %298 = vst [vmem:[#allocation2 + $0x1b8] sm:$0xff] 0.0
          %299 = vst [vmem:[#allocation2 + $0x1c0] sm:$0xff] 0.0
          %300 = vst [vmem:[#allocation2 + $0x1c8] sm:$0xff] 0.0
          %301 = vst [vmem:[#allocation2 + $0x1d0] sm:$0xff] 0.0
          %302 = vst [vmem:[#allocation2 + $0x1d8] sm:$0xff] 0.0
          %303 = vst [vmem:[#allocation2 + $0x1e0] sm:$0xff] 0.0
          %304 = vst [vmem:[#allocation2 + $0x1e8] sm:$0xff] 0.0
          %305 = vst [vmem:[#allocation2 + $0x1f0] sm:$0xff] 0.0
          %306 = vst [vmem:[#allocation2 + $0x1f8] sm:$0xff] 0.0
          %307 = vst [vmem:[#allocation2 + $0x200] sm:$0xff] 0.0
          %308 = vst [vmem:[#allocation2 + $0x208] sm:$0xff] 0.0
          %309 = vst [vmem:[#allocation2 + $0x210] sm:$0xff] 0.0
          %310 = vst [vmem:[#allocation2 + $0x218] sm:$0xff] 0.0
          %311 = vst [vmem:[#allocation2 + $0x220] sm:$0xff] 0.0
          %312 = vst [vmem:[#allocation2 + $0x228] sm:$0xff] 0.0
          %313 = vst [vmem:[#allocation2 + $0x230] sm:$0xff] 0.0
          %314 = vst [vmem:[#allocation2 + $0x238] sm:$0xff] 0.0
          %315 = vst [vmem:[#allocation2 + $0x240] sm:$0xff] 0.0
          %316 = vst [vmem:[#allocation2 + $0x248] sm:$0xff] 0.0
          %317 = vst [vmem:[#allocation2 + $0x250] sm:$0xff] 0.0
          %318 = vst [vmem:[#allocation2 + $0x258] sm:$0xff] 0.0
          %319 = vst [vmem:[#allocation2 + $0x260] sm:$0xff] 0.0
          %320 = vst [vmem:[#allocation2 + $0x268] sm:$0xff] 0.0
          %321 = vst [vmem:[#allocation2 + $0x270] sm:$0xff] 0.0
          %322 = vst [vmem:[#allocation2 + $0x278] sm:$0xff] 0.0
          %323 = vst [vmem:[#allocation2 + $0x280] sm:$0xff] 0.0
          %324 = vst [vmem:[#allocation2 + $0x288] sm:$0xff] 0.0
          %325 = vst [vmem:[#allocation2 + $0x290] sm:$0xff] 0.0
          %326 = vst [vmem:[#allocation2 + $0x298] sm:$0xff] 0.0
          %327 = vst [vmem:[#allocation2 + $0x2a0] sm:$0xff] 0.0
          %328 = vst [vmem:[#allocation2 + $0x2a8] sm:$0xff] 0.0
          %329 = vst [vmem:[#allocation2 + $0x2b0] sm:$0xff] 0.0
          %330 = vst [vmem:[#allocation2 + $0x2b8] sm:$0xff] 0.0
          %331 = vst [vmem:[#allocation2 + $0x2c0] sm:$0xff] 0.0
          %332 = vst [vmem:[#allocation2 + $0x2c8] sm:$0xff] 0.0
          %333 = vst [vmem:[#allocation2 + $0x2d0] sm:$0xff] 0.0
          %334 = vst [vmem:[#allocation2 + $0x2d8] sm:$0xff] 0.0
          %335 = vst [vmem:[#allocation2 + $0x2e0] sm:$0xff] 0.0
          %336 = vst [vmem:[#allocation2 + $0x2e8] sm:$0xff] 0.0
          %337 = vst [vmem:[#allocation2 + $0x2f0] sm:$0xff] 0.0
          %338 = vst [vmem:[#allocation2 + $0x2f8] sm:$0xff] 0.0
          %339 = vst [vmem:[#allocation2 + $0x300] sm:$0xff] 0.0
          %340 = vst [vmem:[#allocation2 + $0x308] sm:$0xff] 0.0
          %341 = vst [vmem:[#allocation2 + $0x310] sm:$0xff] 0.0
          %342 = vst [vmem:[#allocation2 + $0x318] sm:$0xff] 0.0
          %343 = vst [vmem:[#allocation2 + $0x320] sm:$0xff] 0.0
          %344 = vst [vmem:[#allocation2 + $0x328] sm:$0xff] 0.0
          %345 = vst [vmem:[#allocation2 + $0x330] sm:$0xff] 0.0
          %346 = vst [vmem:[#allocation2 + $0x338] sm:$0xff] 0.0
          %347 = vst [vmem:[#allocation2 + $0x340] sm:$0xff] 0.0
          %348 = vst [vmem:[#allocation2 + $0x348] sm:$0xff] 0.0
          %349 = vst [vmem:[#allocation2 + $0x350] sm:$0xff] 0.0
          %350 = vst [vmem:[#allocation2 + $0x358] sm:$0xff] 0.0
          %351 = vst [vmem:[#allocation2 + $0x360] sm:$0xff] 0.0
          %352 = vst [vmem:[#allocation2 + $0x368] sm:$0xff] 0.0
          %353 = vst [vmem:[#allocation2 + $0x370] sm:$0xff] 0.0
          %354 = vst [vmem:[#allocation2 + $0x378] sm:$0xff] 0.0
          %355 = vst [vmem:[#allocation2 + $0x380] sm:$0xff] 0.0
          %356 = vst [vmem:[#allocation2 + $0x388] sm:$0xff] 0.0
          %357 = vst [vmem:[#allocation2 + $0x390] sm:$0xff] 0.0
          %358 = vst [vmem:[#allocation2 + $0x398] sm:$0xff] 0.0
          %359 = vst [vmem:[#allocation2 + $0x3a0] sm:$0xff] 0.0
          %360 = vst [vmem:[#allocation2 + $0x3a8] sm:$0xff] 0.0
          %361 = vst [vmem:[#allocation2 + $0x3b0] sm:$0xff] 0.0
          %362 = vst [vmem:[#allocation2 + $0x3b8] sm:$0xff] 0.0
          %363 = vst [vmem:[#allocation2 + $0x3c0] sm:$0xff] 0.0
          %364 = vst [vmem:[#allocation2 + $0x3c8] sm:$0xff] 0.0
          %365 = vst [vmem:[#allocation2 + $0x3d0] sm:$0xff] 0.0
          %366 = vst [vmem:[#allocation2 + $0x3d8] sm:$0xff] 0.0
          %367 = vst [vmem:[#allocation2 + $0x3e0] sm:$0xff] 0.0
          %368 = vst [vmem:[#allocation2 + $0x3e8] sm:$0xff] 0.0
          %369 = vst [vmem:[#allocation2 + $0x3f0] sm:$0xff] 0.0
          %370 = vst [vmem:[#allocation2 + $0x3f8] sm:$0xff] 0.0
          %371 = vst [vmem:[#allocation2 + $0x400] sm:$0xff] 0.0
          %372 = vst [vmem:[#allocation2 + $0x408] sm:$0xff] 0.0
          %373 = vst [vmem:[#allocation2 + $0x410] sm:$0xff] 0.0
          %374 = vst [vmem:[#allocation2 + $0x418] sm:$0xff] 0.0
          %375 = vst [vmem:[#allocation2 + $0x420] sm:$0xff] 0.0
          %376 = vst [vmem:[#allocation2 + $0x428] sm:$0xff] 0.0
          %377 = vst [vmem:[#allocation2 + $0x430] sm:$0xff] 0.0
          %378 = vst [vmem:[#allocation2 + $0x438] sm:$0xff] 0.0
          %379 = vst [vmem:[#allocation2 + $0x440] sm:$0xff] 0.0
          %380 = vst [vmem:[#allocation2 + $0x448] sm:$0xff] 0.0
          %381 = vst [vmem:[#allocation2 + $0x450] sm:$0xff] 0.0
          %382 = vst [vmem:[#allocation2 + $0x458] sm:$0xff] 0.0
          %383 = vst [vmem:[#allocation2 + $0x460] sm:$0xff] 0.0
          %384 = vst [vmem:[#allocation2 + $0x468] sm:$0xff] 0.0
          %385 = vst [vmem:[#allocation2 + $0x470] sm:$0xff] 0.0
          %386 = vst [vmem:[#allocation2 + $0x478] sm:$0xff] 0.0
          %387 = vst [vmem:[#allocation2 + $0x480] sm:$0xff] 0.0
          %388 = vst [vmem:[#allocation2 + $0x488] sm:$0xff] 0.0
          %389 = vst [vmem:[#allocation2 + $0x490] sm:$0xff] 0.0
          %390 = vst [vmem:[#allocation2 + $0x498] sm:$0xff] 0.0
          %391 = vst [vmem:[#allocation2 + $0x4a0] sm:$0xff] 0.0
          %392 = vst [vmem:[#allocation2 + $0x4a8] sm:$0xff] 0.0
          %393 = vst [vmem:[#allocation2 + $0x4b0] sm:$0xff] 0.0
          %394 = vst [vmem:[#allocation2 + $0x4b8] sm:$0xff] 0.0
          %395 = vst [vmem:[#allocation2 + $0x4c0] sm:$0xff] 0.0
          %396 = vst [vmem:[#allocation2 + $0x4c8] sm:$0xff] 0.0
          %397 = vst [vmem:[#allocation2 + $0x4d0] sm:$0xff] 0.0
          %398 = vst [vmem:[#allocation2 + $0x4d8] sm:$0xff] 0.0
          %399 = vst [vmem:[#allocation2 + $0x4e0] sm:$0xff] 0.0
          %400 = vst [vmem:[#allocation2 + $0x4e8] sm:$0xff] 0.0
          %401 = vst [vmem:[#allocation2 + $0x4f0] sm:$0xff] 0.0
          %402 = vst [vmem:[#allocation2 + $0x4f8] sm:$0xff] 0.0
          %403 = vst [vmem:[#allocation2 + $0x500] sm:$0xff] 0.0
          %404 = vst [vmem:[#allocation2 + $0x508] sm:$0xff] 0.0
          %405 = vst [vmem:[#allocation2 + $0x510] sm:$0xff] 0.0
          %406 = vst [vmem:[#allocation2 + $0x518] sm:$0xff] 0.0
          %407 = vst [vmem:[#allocation2 + $0x520] sm:$0xff] 0.0
          %408 = vst [vmem:[#allocation2 + $0x528] sm:$0xff] 0.0
          %409 = vst [vmem:[#allocation2 + $0x530] sm:$0xff] 0.0
          %410 = vst [vmem:[#allocation2 + $0x538] sm:$0xff] 0.0
          %411 = vst [vmem:[#allocation2 + $0x540] sm:$0xff] 0.0
          %412 = vst [vmem:[#allocation2 + $0x548] sm:$0xff] 0.0
          %413 = vst [vmem:[#allocation2 + $0x550] sm:$0xff] 0.0
          %414 = vst [vmem:[#allocation2 + $0x558] sm:$0xff] 0.0
          %415 = vst [vmem:[#allocation2 + $0x560] sm:$0xff] 0.0
          %416 = vst [vmem:[#allocation2 + $0x568] sm:$0xff] 0.0
          %417 = vst [vmem:[#allocation2 + $0x570] sm:$0xff] 0.0
          %418 = vst [vmem:[#allocation2 + $0x578] sm:$0xff] 0.0
          %419 = vst [vmem:[#allocation2 + $0x580] sm:$0xff] 0.0
          %420 = vst [vmem:[#allocation2 + $0x588] sm:$0xff] 0.0
          %421 = vst [vmem:[#allocation2 + $0x590] sm:$0xff] 0.0
          %422 = vst [vmem:[#allocation2 + $0x598] sm:$0xff] 0.0
          %423 = vst [vmem:[#allocation2 + $0x5a0] sm:$0xff] 0.0
          %424 = vst [vmem:[#allocation2 + $0x5a8] sm:$0xff] 0.0
          %425 = vst [vmem:[#allocation2 + $0x5b0] sm:$0xff] 0.0
          %426 = vst [vmem:[#allocation2 + $0x5b8] sm:$0xff] 0.0
          %427 = vst [vmem:[#allocation2 + $0x5c0] sm:$0xff] 0.0
          %428 = vst [vmem:[#allocation2 + $0x5c8] sm:$0xff] 0.0
          %429 = vst [vmem:[#allocation2 + $0x5d0] sm:$0xff] 0.0
          %430 = vst [vmem:[#allocation2 + $0x5d8] sm:$0xff] 0.0
          %431 = vst [vmem:[#allocation2 + $0x5e0] sm:$0xff] 0.0
          %432 = vst [vmem:[#allocation2 + $0x5e8] sm:$0xff] 0.0
          %433 = vst [vmem:[#allocation2 + $0x5f0] sm:$0xff] 0.0
          %434 = vst [vmem:[#allocation2 + $0x5f8] sm:$0xff] 0.0
          %435 = vst [vmem:[#allocation2 + $0x600] sm:$0xff] 0.0
          %436 = vst [vmem:[#allocation2 + $0x608] sm:$0xff] 0.0
          %437 = vst [vmem:[#allocation2 + $0x610] sm:$0xff] 0.0
          %438 = vst [vmem:[#allocation2 + $0x618] sm:$0xff] 0.0
          %439 = vst [vmem:[#allocation2 + $0x620] sm:$0xff] 0.0
          %440 = vst [vmem:[#allocation2 + $0x628] sm:$0xff] 0.0
          %441 = vst [vmem:[#allocation2 + $0x630] sm:$0xff] 0.0
          %442 = vst [vmem:[#allocation2 + $0x638] sm:$0xff] 0.0
          %443 = vst [vmem:[#allocation2 + $0x640] sm:$0xff] 0.0
          %444 = vst [vmem:[#allocation2 + $0x648] sm:$0xff] 0.0
          %445 = vst [vmem:[#allocation2 + $0x650] sm:$0xff] 0.0
          %446 = vst [vmem:[#allocation2 + $0x658] sm:$0xff] 0.0
          %447 = vst [vmem:[#allocation2 + $0x660] sm:$0xff] 0.0
          %448 = vst [vmem:[#allocation2 + $0x668] sm:$0xff] 0.0
          %449 = vst [vmem:[#allocation2 + $0x670] sm:$0xff] 0.0
          %450 = vst [vmem:[#allocation2 + $0x678] sm:$0xff] 0.0
          %451 = vst [vmem:[#allocation2 + $0x680] sm:$0xff] 0.0
          %452 = vst [vmem:[#allocation2 + $0x688] sm:$0xff] 0.0
          %453 = vst [vmem:[#allocation2 + $0x690] sm:$0xff] 0.0
          %454 = vst [vmem:[#allocation2 + $0x698] sm:$0xff] 0.0
          %455 = vst [vmem:[#allocation2 + $0x6a0] sm:$0xff] 0.0
          %456 = vst [vmem:[#allocation2 + $0x6a8] sm:$0xff] 0.0
          %457 = vst [vmem:[#allocation2 + $0x6b0] sm:$0xff] 0.0
          %458 = vst [vmem:[#allocation2 + $0x6b8] sm:$0xff] 0.0
          %459 = vst [vmem:[#allocation2 + $0x6c0] sm:$0xff] 0.0
          %460 = vst [vmem:[#allocation2 + $0x6c8] sm:$0xff] 0.0
          %461 = vst [vmem:[#allocation2 + $0x6d0] sm:$0xff] 0.0
          %462 = vst [vmem:[#allocation2 + $0x6d8] sm:$0xff] 0.0
          %463 = vst [vmem:[#allocation2 + $0x6e0] sm:$0xff] 0.0
          %464 = vst [vmem:[#allocation2 + $0x6e8] sm:$0xff] 0.0
          %465 = vst [vmem:[#allocation2 + $0x6f0] sm:$0xff] 0.0
          %466 = vst [vmem:[#allocation2 + $0x6f8] sm:$0xff] 0.0
          %467 = vst [vmem:[#allocation2 + $0x700] sm:$0xff] 0.0
          %468 = vst [vmem:[#allocation2 + $0x708] sm:$0xff] 0.0
          %469 = vst [vmem:[#allocation2 + $0x710] sm:$0xff] 0.0
          %470 = vst [vmem:[#allocation2 + $0x718] sm:$0xff] 0.0
          %471 = vst [vmem:[#allocation2 + $0x720] sm:$0xff] 0.0
          %472 = vst [vmem:[#allocation2 + $0x728] sm:$0xff] 0.0
          %473 = vst [vmem:[#allocation2 + $0x730] sm:$0xff] 0.0
          %474 = vst [vmem:[#allocation2 + $0x738] sm:$0xff] 0.0
          %475 = vst [vmem:[#allocation2 + $0x740] sm:$0xff] 0.0
          %476 = vst [vmem:[#allocation2 + $0x748] sm:$0xff] 0.0
          %477 = vst [vmem:[#allocation2 + $0x750] sm:$0xff] 0.0
          %478 = vst [vmem:[#allocation2 + $0x758] sm:$0xff] 0.0
          %479 = vst [vmem:[#allocation2 + $0x760] sm:$0xff] 0.0
          %480 = vst [vmem:[#allocation2 + $0x768] sm:$0xff] 0.0
          %481 = vst [vmem:[#allocation2 + $0x770] sm:$0xff] 0.0
          %482 = vst [vmem:[#allocation2 + $0x778] sm:$0xff] 0.0
          %483 = vst [vmem:[#allocation2 + $0x780] sm:$0xff] 0.0
          %484 = vst [vmem:[#allocation2 + $0x788] sm:$0xff] 0.0
          %485 = vst [vmem:[#allocation2 + $0x790] sm:$0xff] 0.0
          %486 = vst [vmem:[#allocation2 + $0x798] sm:$0xff] 0.0
          %487 = vst [vmem:[#allocation2 + $0x7a0] sm:$0xff] 0.0
          %488 = vst [vmem:[#allocation2 + $0x7a8] sm:$0xff] 0.0
          %489 = vst [vmem:[#allocation2 + $0x7b0] sm:$0xff] 0.0
          %490 = vst [vmem:[#allocation2 + $0x7b8] sm:$0xff] 0.0
          %491 = vst [vmem:[#allocation2 + $0x7c0] sm:$0xff] 0.0
          %492 = vst [vmem:[#allocation2 + $0x7c8] sm:$0xff] 0.0
          %493 = vst [vmem:[#allocation2 + $0x7d0] sm:$0xff] 0.0
          %494 = vst [vmem:[#allocation2 + $0x7d8] sm:$0xff] 0.0
          %495 = vst [vmem:[#allocation2 + $0x7e0] sm:$0xff] 0.0
          %496 = vst [vmem:[#allocation2 + $0x7e8] sm:$0xff] 0.0
          %497 = vst [vmem:[#allocation2 + $0x7f0] sm:$0xff] 0.0
          %498 = vst [vmem:[#allocation2 + $0x7f8] sm:$0xff] 0.0
        $region40: #{tpu_custom_call.1} parent=27 // pred_fallthru
          _
        %v499 = vld [vmem:[#allocation2] sm:$0xff]
        %v500 = vld [vmem:[#allocation2 + $0x8] sm:$0xff]
        %v501 = vld [vmem:[#allocation2 + $0x10] sm:$0xff]
        %v502 = vld [vmem:[#allocation2 + $0x18] sm:$0xff]
        %v503 = vld [vmem:[#allocation2 + $0x20] sm:$0xff]
        %v504 = vld [vmem:[#allocation2 + $0x28] sm:$0xff]
        %v505 = vld [vmem:[#allocation2 + $0x30] sm:$0xff]
        %v506 = vld [vmem:[#allocation2 + $0x38] sm:$0xff]
        %v507 = vld [vmem:[#allocation2 + $0x40] sm:$0xff]
        %v508 = vld [vmem:[#allocation2 + $0x48] sm:$0xff]
        %v509 = vld [vmem:[#allocation2 + $0x50] sm:$0xff]
        %v510 = vld [vmem:[#allocation2 + $0x58] sm:$0xff]
        %v511 = vld [vmem:[#allocation2 + $0x60] sm:$0xff]
        %v512 = vld [vmem:[#allocation2 + $0x68] sm:$0xff]
        %v513 = vld [vmem:[#allocation2 + $0x70] sm:$0xff]
        %v514 = vld [vmem:[#allocation2 + $0x78] sm:$0xff]
        %v515 = vld [vmem:[#allocation2 + $0x80] sm:$0xff]
        %v516 = vld [vmem:[#allocation2 + $0x88] sm:$0xff]
        %v517 = vld [vmem:[#allocation2 + $0x90] sm:$0xff]
        %v518 = vld [vmem:[#allocation2 + $0x98] sm:$0xff]
        %v519 = vld [vmem:[#allocation2 + $0xa0] sm:$0xff]
        %v520 = vld [vmem:[#allocation2 + $0xa8] sm:$0xff]
        %v521 = vld [vmem:[#allocation2 + $0xb0] sm:$0xff]
        %v522 = vld [vmem:[#allocation2 + $0xb8] sm:$0xff]
        %v523 = vld [vmem:[#allocation2 + $0xc0] sm:$0xff]
        %v524 = vld [vmem:[#allocation2 + $0xc8] sm:$0xff]
        %v525 = vld [vmem:[#allocation2 + $0xd0] sm:$0xff]
        %v526 = vld [vmem:[#allocation2 + $0xd8] sm:$0xff]
        %v527 = vld [vmem:[#allocation2 + $0xe0] sm:$0xff]
        %v528 = vld [vmem:[#allocation2 + $0xe8] sm:$0xff]
        %v529 = vld [vmem:[#allocation2 + $0xf0] sm:$0xff]
        %v530 = vld [vmem:[#allocation2 + $0xf8] sm:$0xff]
        %v531 = vld [vmem:[#allocation2 + $0x100] sm:$0xff]
        %v532 = vld [vmem:[#allocation2 + $0x108] sm:$0xff]
        %v533 = vld [vmem:[#allocation2 + $0x110] sm:$0xff]
        %v534 = vld [vmem:[#allocation2 + $0x118] sm:$0xff]
        %v535 = vld [vmem:[#allocation2 + $0x120] sm:$0xff]
        %v536 = vld [vmem:[#allocation2 + $0x128] sm:$0xff]
        %v537 = vld [vmem:[#allocation2 + $0x130] sm:$0xff]
        %v538 = vld [vmem:[#allocation2 + $0x138] sm:$0xff]
        %v539 = vld [vmem:[#allocation2 + $0x140] sm:$0xff]
        %v540 = vld [vmem:[#allocation2 + $0x148] sm:$0xff]
        %v541 = vld [vmem:[#allocation2 + $0x150] sm:$0xff]
        %v542 = vld [vmem:[#allocation2 + $0x158] sm:$0xff]
        %v543 = vld [vmem:[#allocation2 + $0x160] sm:$0xff]
        %v544 = vld [vmem:[#allocation2 + $0x168] sm:$0xff]
        %v545 = vld [vmem:[#allocation2 + $0x170] sm:$0xff]
        %v546 = vld [vmem:[#allocation2 + $0x178] sm:$0xff]
        %v547 = vld [vmem:[#allocation2 + $0x180] sm:$0xff]
        %v548 = vld [vmem:[#allocation2 + $0x188] sm:$0xff]
        %v549 = vld [vmem:[#allocation2 + $0x190] sm:$0xff]
        %v550 = vld [vmem:[#allocation2 + $0x198] sm:$0xff]
        %v551 = vld [vmem:[#allocation2 + $0x1a0] sm:$0xff]
        %v552 = vld [vmem:[#allocation2 + $0x1a8] sm:$0xff]
        %v553 = vld [vmem:[#allocation2 + $0x1b0] sm:$0xff]
        %v554 = vld [vmem:[#allocation2 + $0x1b8] sm:$0xff]
        %v555 = vld [vmem:[#allocation2 + $0x1c0] sm:$0xff]
        %v556 = vld [vmem:[#allocation2 + $0x1c8] sm:$0xff]
        %v557 = vld [vmem:[#allocation2 + $0x1d0] sm:$0xff]
        %v558 = vld [vmem:[#allocation2 + $0x1d8] sm:$0xff]
        %v559 = vld [vmem:[#allocation2 + $0x1e0] sm:$0xff]
        %v560 = vld [vmem:[#allocation2 + $0x1e8] sm:$0xff]
        %v561 = vld [vmem:[#allocation2 + $0x1f0] sm:$0xff]
        %v562 = vld [vmem:[#allocation2 + $0x1f8] sm:$0xff]
        %v563 = vld [vmem:[#allocation2 + $0x200] sm:$0xff]
        %v564 = vld [vmem:[#allocation2 + $0x208] sm:$0xff]
        %v565 = vld [vmem:[#allocation2 + $0x210] sm:$0xff]
        %v566 = vld [vmem:[#allocation2 + $0x218] sm:$0xff]
        %v567 = vld [vmem:[#allocation2 + $0x220] sm:$0xff]
        %v568 = vld [vmem:[#allocation2 + $0x228] sm:$0xff]
        %v569 = vld [vmem:[#allocation2 + $0x230] sm:$0xff]
        %v570 = vld [vmem:[#allocation2 + $0x238] sm:$0xff]
        %v571 = vld [vmem:[#allocation2 + $0x240] sm:$0xff]
        %v572 = vld [vmem:[#allocation2 + $0x248] sm:$0xff]
        %v573 = vld [vmem:[#allocation2 + $0x250] sm:$0xff]
        %v574 = vld [vmem:[#allocation2 + $0x258] sm:$0xff]
        %v575 = vld [vmem:[#allocation2 + $0x260] sm:$0xff]
        %v576 = vld [vmem:[#allocation2 + $0x268] sm:$0xff]
        %v577 = vld [vmem:[#allocation2 + $0x270] sm:$0xff]
        %v578 = vld [vmem:[#allocation2 + $0x278] sm:$0xff]
        %v579 = vld [vmem:[#allocation2 + $0x280] sm:$0xff]
        %v580 = vld [vmem:[#allocation2 + $0x288] sm:$0xff]
        %v581 = vld [vmem:[#allocation2 + $0x290] sm:$0xff]
        %v582 = vld [vmem:[#allocation2 + $0x298] sm:$0xff]
        %v583 = vld [vmem:[#allocation2 + $0x2a0] sm:$0xff]
        %v584 = vld [vmem:[#allocation2 + $0x2a8] sm:$0xff]
        %v585 = vld [vmem:[#allocation2 + $0x2b0] sm:$0xff]
        %v586 = vld [vmem:[#allocation2 + $0x2b8] sm:$0xff]
        %v587 = vld [vmem:[#allocation2 + $0x2c0] sm:$0xff]
        %v588 = vld [vmem:[#allocation2 + $0x2c8] sm:$0xff]
        %v589 = vld [vmem:[#allocation2 + $0x2d0] sm:$0xff]
        %v590 = vld [vmem:[#allocation2 + $0x2d8] sm:$0xff]
        %v591 = vld [vmem:[#allocation2 + $0x2e0] sm:$0xff]
        %v592 = vld [vmem:[#allocation2 + $0x2e8] sm:$0xff]
        %v593 = vld [vmem:[#allocation2 + $0x2f0] sm:$0xff]
        %v594 = vld [vmem:[#allocation2 + $0x2f8] sm:$0xff]
        %v595 = vld [vmem:[#allocation2 + $0x300] sm:$0xff]
        %v596 = vld [vmem:[#allocation2 + $0x308] sm:$0xff]
        %v597 = vld [vmem:[#allocation2 + $0x310] sm:$0xff]
        %v598 = vld [vmem:[#allocation2 + $0x318] sm:$0xff]
        %v599 = vld [vmem:[#allocation2 + $0x320] sm:$0xff]
        %v600 = vld [vmem:[#allocation2 + $0x328] sm:$0xff]
        %v601 = vld [vmem:[#allocation2 + $0x330] sm:$0xff]
        %v602 = vld [vmem:[#allocation2 + $0x338] sm:$0xff]
        %v603 = vld [vmem:[#allocation2 + $0x340] sm:$0xff]
        %v604 = vld [vmem:[#allocation2 + $0x348] sm:$0xff]
        %v605 = vld [vmem:[#allocation2 + $0x350] sm:$0xff]
        %v606 = vld [vmem:[#allocation2 + $0x358] sm:$0xff]
        %v607 = vld [vmem:[#allocation2 + $0x360] sm:$0xff]
        %v608 = vld [vmem:[#allocation2 + $0x368] sm:$0xff]
        %v609 = vld [vmem:[#allocation2 + $0x370] sm:$0xff]
        %v610 = vld [vmem:[#allocation2 + $0x378] sm:$0xff]
        %v611 = vld [vmem:[#allocation2 + $0x380] sm:$0xff]
        %v612 = vld [vmem:[#allocation2 + $0x388] sm:$0xff]
        %v613 = vld [vmem:[#allocation2 + $0x390] sm:$0xff]
        %v614 = vld [vmem:[#allocation2 + $0x398] sm:$0xff]
        %v615 = vld [vmem:[#allocation2 + $0x3a0] sm:$0xff]
        %v616 = vld [vmem:[#allocation2 + $0x3a8] sm:$0xff]
        %v617 = vld [vmem:[#allocation2 + $0x3b0] sm:$0xff]
        %v618 = vld [vmem:[#allocation2 + $0x3b8] sm:$0xff]
        %v619 = vld [vmem:[#allocation2 + $0x3c0] sm:$0xff]
        %v620 = vld [vmem:[#allocation2 + $0x3c8] sm:$0xff]
        %v621 = vld [vmem:[#allocation2 + $0x3d0] sm:$0xff]
        %v622 = vld [vmem:[#allocation2 + $0x3d8] sm:$0xff]
        %v623 = vld [vmem:[#allocation2 + $0x3e0] sm:$0xff]
        %v624 = vld [vmem:[#allocation2 + $0x3e8] sm:$0xff]
        %v625 = vld [vmem:[#allocation2 + $0x3f0] sm:$0xff]
        %v626 = vld [vmem:[#allocation2 + $0x3f8] sm:$0xff]
        %v627 = vld [vmem:[#allocation2 + $0x400] sm:$0xff]
        %v628 = vld [vmem:[#allocation2 + $0x408] sm:$0xff]
        %v629 = vld [vmem:[#allocation2 + $0x410] sm:$0xff]
        %v630 = vld [vmem:[#allocation2 + $0x418] sm:$0xff]
        %v631 = vld [vmem:[#allocation2 + $0x420] sm:$0xff]
        %v632 = vld [vmem:[#allocation2 + $0x428] sm:$0xff]
        %v633 = vld [vmem:[#allocation2 + $0x430] sm:$0xff]
        %v634 = vld [vmem:[#allocation2 + $0x438] sm:$0xff]
        %v635 = vld [vmem:[#allocation2 + $0x440] sm:$0xff]
        %v636 = vld [vmem:[#allocation2 + $0x448] sm:$0xff]
        %v637 = vld [vmem:[#allocation2 + $0x450] sm:$0xff]
        %v638 = vld [vmem:[#allocation2 + $0x458] sm:$0xff]
        %v639 = vld [vmem:[#allocation2 + $0x460] sm:$0xff]
        %v640 = vld [vmem:[#allocation2 + $0x468] sm:$0xff]
        %v641 = vld [vmem:[#allocation2 + $0x470] sm:$0xff]
        %v642 = vld [vmem:[#allocation2 + $0x478] sm:$0xff]
        %v643 = vld [vmem:[#allocation2 + $0x480] sm:$0xff]
        %v644 = vld [vmem:[#allocation2 + $0x488] sm:$0xff]
        %v645 = vld [vmem:[#allocation2 + $0x490] sm:$0xff]
        %v646 = vld [vmem:[#allocation2 + $0x498] sm:$0xff]
        %v647 = vld [vmem:[#allocation2 + $0x4a0] sm:$0xff]
        %v648 = vld [vmem:[#allocation2 + $0x4a8] sm:$0xff]
        %v649 = vld [vmem:[#allocation2 + $0x4b0] sm:$0xff]
        %v650 = vld [vmem:[#allocation2 + $0x4b8] sm:$0xff]
        %v651 = vld [vmem:[#allocation2 + $0x4c0] sm:$0xff]
        %v652 = vld [vmem:[#allocation2 + $0x4c8] sm:$0xff]
        %v653 = vld [vmem:[#allocation2 + $0x4d0] sm:$0xff]
        %v654 = vld [vmem:[#allocation2 + $0x4d8] sm:$0xff]
        %v655 = vld [vmem:[#allocation2 + $0x4e0] sm:$0xff]
        %v656 = vld [vmem:[#allocation2 + $0x4e8] sm:$0xff]
        %v657 = vld [vmem:[#allocation2 + $0x4f0] sm:$0xff]
        %v658 = vld [vmem:[#allocation2 + $0x4f8] sm:$0xff]
        %v659 = vld [vmem:[#allocation2 + $0x500] sm:$0xff]
        %v660 = vld [vmem:[#allocation2 + $0x508] sm:$0xff]
        %v661 = vld [vmem:[#allocation2 + $0x510] sm:$0xff]
        %v662 = vld [vmem:[#allocation2 + $0x518] sm:$0xff]
        %v663 = vld [vmem:[#allocation2 + $0x520] sm:$0xff]
        %v664 = vld [vmem:[#allocation2 + $0x528] sm:$0xff]
        %v665 = vld [vmem:[#allocation2 + $0x530] sm:$0xff]
        %v666 = vld [vmem:[#allocation2 + $0x538] sm:$0xff]
        %v667 = vld [vmem:[#allocation2 + $0x540] sm:$0xff]
        %v668 = vld [vmem:[#allocation2 + $0x548] sm:$0xff]
        %v669 = vld [vmem:[#allocation2 + $0x550] sm:$0xff]
        %v670 = vld [vmem:[#allocation2 + $0x558] sm:$0xff]
        %v671 = vld [vmem:[#allocation2 + $0x560] sm:$0xff]
        %v672 = vld [vmem:[#allocation2 + $0x568] sm:$0xff]
        %v673 = vld [vmem:[#allocation2 + $0x570] sm:$0xff]
        %v674 = vld [vmem:[#allocation2 + $0x578] sm:$0xff]
        %v675 = vld [vmem:[#allocation2 + $0x580] sm:$0xff]
        %v676 = vld [vmem:[#allocation2 + $0x588] sm:$0xff]
        %v677 = vld [vmem:[#allocation2 + $0x590] sm:$0xff]
        %v678 = vld [vmem:[#allocation2 + $0x598] sm:$0xff]
        %v679 = vld [vmem:[#allocation2 + $0x5a0] sm:$0xff]
        %v680 = vld [vmem:[#allocation2 + $0x5a8] sm:$0xff]
        %v681 = vld [vmem:[#allocation2 + $0x5b0] sm:$0xff]
        %v682 = vld [vmem:[#allocation2 + $0x5b8] sm:$0xff]
        %v683 = vld [vmem:[#allocation2 + $0x5c0] sm:$0xff]
        %v684 = vld [vmem:[#allocation2 + $0x5c8] sm:$0xff]
        %v685 = vld [vmem:[#allocation2 + $0x5d0] sm:$0xff]
        %v686 = vld [vmem:[#allocation2 + $0x5d8] sm:$0xff]
        %v687 = vld [vmem:[#allocation2 + $0x5e0] sm:$0xff]
        %v688 = vld [vmem:[#allocation2 + $0x5e8] sm:$0xff]
        %v689 = vld [vmem:[#allocation2 + $0x5f0] sm:$0xff]
        %v690 = vld [vmem:[#allocation2 + $0x5f8] sm:$0xff]
        %v691 = vld [vmem:[#allocation2 + $0x600] sm:$0xff]
        %v692 = vld [vmem:[#allocation2 + $0x608] sm:$0xff]
        %v693 = vld [vmem:[#allocation2 + $0x610] sm:$0xff]
        %v694 = vld [vmem:[#allocation2 + $0x618] sm:$0xff]
        %v695 = vld [vmem:[#allocation2 + $0x620] sm:$0xff]
        %v696 = vld [vmem:[#allocation2 + $0x628] sm:$0xff]
        %v697 = vld [vmem:[#allocation2 + $0x630] sm:$0xff]
        %v698 = vld [vmem:[#allocation2 + $0x638] sm:$0xff]
        %v699 = vld [vmem:[#allocation2 + $0x640] sm:$0xff]
        %v700 = vld [vmem:[#allocation2 + $0x648] sm:$0xff]
        %v701 = vld [vmem:[#allocation2 + $0x650] sm:$0xff]
        %v702 = vld [vmem:[#allocation2 + $0x658] sm:$0xff]
        %v703 = vld [vmem:[#allocation2 + $0x660] sm:$0xff]
        %v704 = vld [vmem:[#allocation2 + $0x668] sm:$0xff]
        %v705 = vld [vmem:[#allocation2 + $0x670] sm:$0xff]
        %v706 = vld [vmem:[#allocation2 + $0x678] sm:$0xff]
        %v707 = vld [vmem:[#allocation2 + $0x680] sm:$0xff]
        %v708 = vld [vmem:[#allocation2 + $0x688] sm:$0xff]
        %v709 = vld [vmem:[#allocation2 + $0x690] sm:$0xff]
        %v710 = vld [vmem:[#allocation2 + $0x698] sm:$0xff]
        %v711 = vld [vmem:[#allocation2 + $0x6a0] sm:$0xff]
        %v712 = vld [vmem:[#allocation2 + $0x6a8] sm:$0xff]
        %v713 = vld [vmem:[#allocation2 + $0x6b0] sm:$0xff]
        %v714 = vld [vmem:[#allocation2 + $0x6b8] sm:$0xff]
        %v715 = vld [vmem:[#allocation2 + $0x6c0] sm:$0xff]
        %v716 = vld [vmem:[#allocation2 + $0x6c8] sm:$0xff]
        %v717 = vld [vmem:[#allocation2 + $0x6d0] sm:$0xff]
        %v718 = vld [vmem:[#allocation2 + $0x6d8] sm:$0xff]
        %v719 = vld [vmem:[#allocation2 + $0x6e0] sm:$0xff]
        %v720 = vld [vmem:[#allocation2 + $0x6e8] sm:$0xff]
        %v721 = vld [vmem:[#allocation2 + $0x6f0] sm:$0xff]
        %v722 = vld [vmem:[#allocation2 + $0x6f8] sm:$0xff]
        %v723 = vld [vmem:[#allocation2 + $0x700] sm:$0xff]
        %v724 = vld [vmem:[#allocation2 + $0x708] sm:$0xff]
        %v725 = vld [vmem:[#allocation2 + $0x710] sm:$0xff]
        %v726 = vld [vmem:[#allocation2 + $0x718] sm:$0xff]
        %v727 = vld [vmem:[#allocation2 + $0x720] sm:$0xff]
        %v728 = vld [vmem:[#allocation2 + $0x728] sm:$0xff]
        %v729 = vld [vmem:[#allocation2 + $0x730] sm:$0xff]
        %v730 = vld [vmem:[#allocation2 + $0x738] sm:$0xff]
        %v731 = vld [vmem:[#allocation2 + $0x740] sm:$0xff]
        %v732 = vld [vmem:[#allocation2 + $0x748] sm:$0xff]
        %v733 = vld [vmem:[#allocation2 + $0x750] sm:$0xff]
        %v734 = vld [vmem:[#allocation2 + $0x758] sm:$0xff]
        %v735 = vld [vmem:[#allocation2 + $0x760] sm:$0xff]
        %v736 = vld [vmem:[#allocation2 + $0x768] sm:$0xff]
        %v737 = vld [vmem:[#allocation2 + $0x770] sm:$0xff]
        %v738 = vld [vmem:[#allocation2 + $0x778] sm:$0xff]
        %v739 = vld [vmem:[#allocation2 + $0x780] sm:$0xff]
        %v740 = vld [vmem:[#allocation2 + $0x788] sm:$0xff]
        %v741 = vld [vmem:[#allocation2 + $0x790] sm:$0xff]
        %v742 = vld [vmem:[#allocation2 + $0x798] sm:$0xff]
        %v743 = vld [vmem:[#allocation2 + $0x7a0] sm:$0xff]
        %v744 = vld [vmem:[#allocation2 + $0x7a8] sm:$0xff]
        %v745 = vld [vmem:[#allocation2 + $0x7b0] sm:$0xff]
        %v746 = vld [vmem:[#allocation2 + $0x7b8] sm:$0xff]
        %v747 = vld [vmem:[#allocation2 + $0x7c0] sm:$0xff]
        %v748 = vld [vmem:[#allocation2 + $0x7c8] sm:$0xff]
        %v749 = vld [vmem:[#allocation2 + $0x7d0] sm:$0xff]
        %v750 = vld [vmem:[#allocation2 + $0x7d8] sm:$0xff]
        %v751 = vld [vmem:[#allocation2 + $0x7e0] sm:$0xff]
        %v752 = vld [vmem:[#allocation2 + $0x7e8] sm:$0xff]
        %v753 = vld [vmem:[#allocation2 + $0x7f0] sm:$0xff]
        %v754 = vld [vmem:[#allocation2 + $0x7f8] sm:$0xff]
        %v755 = vld [vmem:[%s198] sm:$0xff]
        %v756 = vld [vmem:[%s198 + $0x8] sm:$0xff]
        %v757 = vld [vmem:[%s198 + $0x10] sm:$0xff]
        %v758 = vld [vmem:[%s198 + $0x18] sm:$0xff]
        %v759 = vld [vmem:[%s198 + $0x20] sm:$0xff]
        %v760 = vld [vmem:[%s198 + $0x28] sm:$0xff]
        %v761 = vld [vmem:[%s198 + $0x30] sm:$0xff]
        %v762 = vld [vmem:[%s198 + $0x38] sm:$0xff]
        %v763 = vld [vmem:[%s198 + $0x40] sm:$0xff]
        %v764 = vld [vmem:[%s198 + $0x48] sm:$0xff]
        %v765 = vld [vmem:[%s198 + $0x50] sm:$0xff]
        %v766 = vld [vmem:[%s198 + $0x58] sm:$0xff]
        %v767 = vld [vmem:[%s198 + $0x60] sm:$0xff]
        %v768 = vld [vmem:[%s198 + $0x68] sm:$0xff]
        %v769 = vld [vmem:[%s198 + $0x70] sm:$0xff]
        %v770 = vld [vmem:[%s198 + $0x78] sm:$0xff]
        %v771 = vld [vmem:[%s198 + $0x80] sm:$0xff]
        %v772 = vld [vmem:[%s198 + $0x88] sm:$0xff]
        %v773 = vld [vmem:[%s198 + $0x90] sm:$0xff]
        %v774 = vld [vmem:[%s198 + $0x98] sm:$0xff]
        %v775 = vld [vmem:[%s198 + $0xa0] sm:$0xff]
        %v776 = vld [vmem:[%s198 + $0xa8] sm:$0xff]
        %v777 = vld [vmem:[%s198 + $0xb0] sm:$0xff]
        %v778 = vld [vmem:[%s198 + $0xb8] sm:$0xff]
        %v779 = vld [vmem:[%s198 + $0xc0] sm:$0xff]
        %v780 = vld [vmem:[%s198 + $0xc8] sm:$0xff]
        %v781 = vld [vmem:[%s198 + $0xd0] sm:$0xff]
        %v782 = vld [vmem:[%s198 + $0xd8] sm:$0xff]
        %v783 = vld [vmem:[%s198 + $0xe0] sm:$0xff]
        %v784 = vld [vmem:[%s198 + $0xe8] sm:$0xff]
        %v785 = vld [vmem:[%s198 + $0xf0] sm:$0xff]
        %v786 = vld [vmem:[%s198 + $0xf8] sm:$0xff]
        %v787 = vld [vmem:[%s198 + $0x100] sm:$0xff]
        %v788 = vld [vmem:[%s198 + $0x108] sm:$0xff]
        %v789 = vld [vmem:[%s198 + $0x110] sm:$0xff]
        %v790 = vld [vmem:[%s198 + $0x118] sm:$0xff]
        %v791 = vld [vmem:[%s198 + $0x120] sm:$0xff]
        %v792 = vld [vmem:[%s198 + $0x128] sm:$0xff]
        %v793 = vld [vmem:[%s198 + $0x130] sm:$0xff]
        %v794 = vld [vmem:[%s198 + $0x138] sm:$0xff]
        %v795 = vld [vmem:[%s198 + $0x140] sm:$0xff]
        %v796 = vld [vmem:[%s198 + $0x148] sm:$0xff]
        %v797 = vld [vmem:[%s198 + $0x150] sm:$0xff]
        %v798 = vld [vmem:[%s198 + $0x158] sm:$0xff]
        %v799 = vld [vmem:[%s198 + $0x160] sm:$0xff]
        %v800 = vld [vmem:[%s198 + $0x168] sm:$0xff]
        %v801 = vld [vmem:[%s198 + $0x170] sm:$0xff]
        %v802 = vld [vmem:[%s198 + $0x178] sm:$0xff]
        %v803 = vld [vmem:[%s198 + $0x180] sm:$0xff]
        %v804 = vld [vmem:[%s198 + $0x188] sm:$0xff]
        %v805 = vld [vmem:[%s198 + $0x190] sm:$0xff]
        %v806 = vld [vmem:[%s198 + $0x198] sm:$0xff]
        %v807 = vld [vmem:[%s198 + $0x1a0] sm:$0xff]
        %v808 = vld [vmem:[%s198 + $0x1a8] sm:$0xff]
        %v809 = vld [vmem:[%s198 + $0x1b0] sm:$0xff]
        %v810 = vld [vmem:[%s198 + $0x1b8] sm:$0xff]
        %v811 = vld [vmem:[%s198 + $0x1c0] sm:$0xff]
        %v812 = vld [vmem:[%s198 + $0x1c8] sm:$0xff]
        %v813 = vld [vmem:[%s198 + $0x1d0] sm:$0xff]
        %v814 = vld [vmem:[%s198 + $0x1d8] sm:$0xff]
        %v815 = vld [vmem:[%s198 + $0x1e0] sm:$0xff]
        %v816 = vld [vmem:[%s198 + $0x1e8] sm:$0xff]
        %v817 = vld [vmem:[%s198 + $0x1f0] sm:$0xff]
        %v818 = vld [vmem:[%s198 + $0x1f8] sm:$0xff]
        %v819 = vld [vmem:[%s198 + $0x200] sm:$0xff]
        %v820 = vld [vmem:[%s198 + $0x208] sm:$0xff]
        %v821 = vld [vmem:[%s198 + $0x210] sm:$0xff]
        %v822 = vld [vmem:[%s198 + $0x218] sm:$0xff]
        %v823 = vld [vmem:[%s198 + $0x220] sm:$0xff]
        %v824 = vld [vmem:[%s198 + $0x228] sm:$0xff]
        %v825 = vld [vmem:[%s198 + $0x230] sm:$0xff]
        %v826 = vld [vmem:[%s198 + $0x238] sm:$0xff]
        %v827 = vld [vmem:[%s198 + $0x240] sm:$0xff]
        %v828 = vld [vmem:[%s198 + $0x248] sm:$0xff]
        %v829 = vld [vmem:[%s198 + $0x250] sm:$0xff]
        %v830 = vld [vmem:[%s198 + $0x258] sm:$0xff]
        %v831 = vld [vmem:[%s198 + $0x260] sm:$0xff]
        %v832 = vld [vmem:[%s198 + $0x268] sm:$0xff]
        %v833 = vld [vmem:[%s198 + $0x270] sm:$0xff]
        %v834 = vld [vmem:[%s198 + $0x278] sm:$0xff]
        %v835 = vld [vmem:[%s198 + $0x280] sm:$0xff]
        %v836 = vld [vmem:[%s198 + $0x288] sm:$0xff]
        %v837 = vld [vmem:[%s198 + $0x290] sm:$0xff]
        %v838 = vld [vmem:[%s198 + $0x298] sm:$0xff]
        %v839 = vld [vmem:[%s198 + $0x2a0] sm:$0xff]
        %v840 = vld [vmem:[%s198 + $0x2a8] sm:$0xff]
        %v841 = vld [vmem:[%s198 + $0x2b0] sm:$0xff]
        %v842 = vld [vmem:[%s198 + $0x2b8] sm:$0xff]
        %v843 = vld [vmem:[%s198 + $0x2c0] sm:$0xff]
        %v844 = vld [vmem:[%s198 + $0x2c8] sm:$0xff]
        %v845 = vld [vmem:[%s198 + $0x2d0] sm:$0xff]
        %v846 = vld [vmem:[%s198 + $0x2d8] sm:$0xff]
        %v847 = vld [vmem:[%s198 + $0x2e0] sm:$0xff]
        %v848 = vld [vmem:[%s198 + $0x2e8] sm:$0xff]
        %v849 = vld [vmem:[%s198 + $0x2f0] sm:$0xff]
        %v850 = vld [vmem:[%s198 + $0x2f8] sm:$0xff]
        %v851 = vld [vmem:[%s198 + $0x300] sm:$0xff]
        %v852 = vld [vmem:[%s198 + $0x308] sm:$0xff]
        %v853 = vld [vmem:[%s198 + $0x310] sm:$0xff]
        %v854 = vld [vmem:[%s198 + $0x318] sm:$0xff]
        %v855 = vld [vmem:[%s198 + $0x320] sm:$0xff]
        %v856 = vld [vmem:[%s198 + $0x328] sm:$0xff]
        %v857 = vld [vmem:[%s198 + $0x330] sm:$0xff]
        %v858 = vld [vmem:[%s198 + $0x338] sm:$0xff]
        %v859 = vld [vmem:[%s198 + $0x340] sm:$0xff]
        %v860 = vld [vmem:[%s198 + $0x348] sm:$0xff]
        %v861 = vld [vmem:[%s198 + $0x350] sm:$0xff]
        %v862 = vld [vmem:[%s198 + $0x358] sm:$0xff]
        %v863 = vld [vmem:[%s198 + $0x360] sm:$0xff]
        %v864 = vld [vmem:[%s198 + $0x368] sm:$0xff]
        %v865 = vld [vmem:[%s198 + $0x370] sm:$0xff]
        %v866 = vld [vmem:[%s198 + $0x378] sm:$0xff]
        %v867 = vld [vmem:[%s198 + $0x380] sm:$0xff]
        %v868 = vld [vmem:[%s198 + $0x388] sm:$0xff]
        %v869 = vld [vmem:[%s198 + $0x390] sm:$0xff]
        %v870 = vld [vmem:[%s198 + $0x398] sm:$0xff]
        %v871 = vld [vmem:[%s198 + $0x3a0] sm:$0xff]
        %v872 = vld [vmem:[%s198 + $0x3a8] sm:$0xff]
        %v873 = vld [vmem:[%s198 + $0x3b0] sm:$0xff]
        %v874 = vld [vmem:[%s198 + $0x3b8] sm:$0xff]
        %v875 = vld [vmem:[%s198 + $0x3c0] sm:$0xff]
        %v876 = vld [vmem:[%s198 + $0x3c8] sm:$0xff]
        %v877 = vld [vmem:[%s198 + $0x3d0] sm:$0xff]
        %v878 = vld [vmem:[%s198 + $0x3d8] sm:$0xff]
        %v879 = vld [vmem:[%s198 + $0x3e0] sm:$0xff]
        %v880 = vld [vmem:[%s198 + $0x3e8] sm:$0xff]
        %v881 = vld [vmem:[%s198 + $0x3f0] sm:$0xff]
        %v882 = vld [vmem:[%s198 + $0x3f8] sm:$0xff]
        %v883 = vld [vmem:[%s207] sm:$0xff]
        %v884 = vld [vmem:[%s207 + $0x8] sm:$0xff]
        %v885 = vld [vmem:[%s207 + $0x10] sm:$0xff]
        %v886 = vld [vmem:[%s207 + $0x18] sm:$0xff]
        %v887 = vld [vmem:[%s207 + $0x20] sm:$0xff]
        %v888 = vld [vmem:[%s207 + $0x28] sm:$0xff]
        %v889 = vld [vmem:[%s207 + $0x30] sm:$0xff]
        %v890 = vld [vmem:[%s207 + $0x38] sm:$0xff]
        %v891 = vld [vmem:[%s207 + $0x40] sm:$0xff]
        %v892 = vld [vmem:[%s207 + $0x48] sm:$0xff]
        %v893 = vld [vmem:[%s207 + $0x50] sm:$0xff]
        %v894 = vld [vmem:[%s207 + $0x58] sm:$0xff]
        %v895 = vld [vmem:[%s207 + $0x60] sm:$0xff]
        %v896 = vld [vmem:[%s207 + $0x68] sm:$0xff]
        %v897 = vld [vmem:[%s207 + $0x70] sm:$0xff]
        %v898 = vld [vmem:[%s207 + $0x78] sm:$0xff]
        %v899 = vld [vmem:[%s207 + $0x80] sm:$0xff]
        %v900 = vld [vmem:[%s207 + $0x88] sm:$0xff]
        %v901 = vld [vmem:[%s207 + $0x90] sm:$0xff]
        %v902 = vld [vmem:[%s207 + $0x98] sm:$0xff]
        %v903 = vld [vmem:[%s207 + $0xa0] sm:$0xff]
        %v904 = vld [vmem:[%s207 + $0xa8] sm:$0xff]
        %v905 = vld [vmem:[%s207 + $0xb0] sm:$0xff]
        %v906 = vld [vmem:[%s207 + $0xb8] sm:$0xff]
        %v907 = vld [vmem:[%s207 + $0xc0] sm:$0xff]
        %v908 = vld [vmem:[%s207 + $0xc8] sm:$0xff]
        %v909 = vld [vmem:[%s207 + $0xd0] sm:$0xff]
        %v910 = vld [vmem:[%s207 + $0xd8] sm:$0xff]
        %v911 = vld [vmem:[%s207 + $0xe0] sm:$0xff]
        %v912 = vld [vmem:[%s207 + $0xe8] sm:$0xff]
        %v913 = vld [vmem:[%s207 + $0xf0] sm:$0xff]
        %v914 = vld [vmem:[%s207 + $0xf8] sm:$0xff]
        %v915 = vld [vmem:[%s207 + $0x100] sm:$0xff]
        %v916 = vld [vmem:[%s207 + $0x108] sm:$0xff]
        %v917 = vld [vmem:[%s207 + $0x110] sm:$0xff]
        %v918 = vld [vmem:[%s207 + $0x118] sm:$0xff]
        %v919 = vld [vmem:[%s207 + $0x120] sm:$0xff]
        %v920 = vld [vmem:[%s207 + $0x128] sm:$0xff]
        %v921 = vld [vmem:[%s207 + $0x130] sm:$0xff]
        %v922 = vld [vmem:[%s207 + $0x138] sm:$0xff]
        %v923 = vld [vmem:[%s207 + $0x140] sm:$0xff]
        %v924 = vld [vmem:[%s207 + $0x148] sm:$0xff]
        %v925 = vld [vmem:[%s207 + $0x150] sm:$0xff]
        %v926 = vld [vmem:[%s207 + $0x158] sm:$0xff]
        %v927 = vld [vmem:[%s207 + $0x160] sm:$0xff]
        %v928 = vld [vmem:[%s207 + $0x168] sm:$0xff]
        %v929 = vld [vmem:[%s207 + $0x170] sm:$0xff]
        %v930 = vld [vmem:[%s207 + $0x178] sm:$0xff]
        %v931 = vld [vmem:[%s207 + $0x180] sm:$0xff]
        %v932 = vld [vmem:[%s207 + $0x188] sm:$0xff]
        %v933 = vld [vmem:[%s207 + $0x190] sm:$0xff]
        %v934 = vld [vmem:[%s207 + $0x198] sm:$0xff]
        %v935 = vld [vmem:[%s207 + $0x1a0] sm:$0xff]
        %v936 = vld [vmem:[%s207 + $0x1a8] sm:$0xff]
        %v937 = vld [vmem:[%s207 + $0x1b0] sm:$0xff]
        %v938 = vld [vmem:[%s207 + $0x1b8] sm:$0xff]
        %v939 = vld [vmem:[%s207 + $0x1c0] sm:$0xff]
        %v940 = vld [vmem:[%s207 + $0x1c8] sm:$0xff]
        %v941 = vld [vmem:[%s207 + $0x1d0] sm:$0xff]
        %v942 = vld [vmem:[%s207 + $0x1d8] sm:$0xff]
        %v943 = vld [vmem:[%s207 + $0x1e0] sm:$0xff]
        %v944 = vld [vmem:[%s207 + $0x1e8] sm:$0xff]
        %v945 = vld [vmem:[%s207 + $0x1f0] sm:$0xff]
        %v946 = vld [vmem:[%s207 + $0x1f8] sm:$0xff]
        %v947 = vld [vmem:[%s207 + $0x200] sm:$0xff]
        %v948 = vld [vmem:[%s207 + $0x208] sm:$0xff]
        %v949 = vld [vmem:[%s207 + $0x210] sm:$0xff]
        %v950 = vld [vmem:[%s207 + $0x218] sm:$0xff]
        %v951 = vld [vmem:[%s207 + $0x220] sm:$0xff]
        %v952 = vld [vmem:[%s207 + $0x228] sm:$0xff]
        %v953 = vld [vmem:[%s207 + $0x230] sm:$0xff]
        %v954 = vld [vmem:[%s207 + $0x238] sm:$0xff]
        %v955 = vld [vmem:[%s207 + $0x240] sm:$0xff]
        %v956 = vld [vmem:[%s207 + $0x248] sm:$0xff]
        %v957 = vld [vmem:[%s207 + $0x250] sm:$0xff]
        %v958 = vld [vmem:[%s207 + $0x258] sm:$0xff]
        %v959 = vld [vmem:[%s207 + $0x260] sm:$0xff]
        %v960 = vld [vmem:[%s207 + $0x268] sm:$0xff]
        %v961 = vld [vmem:[%s207 + $0x270] sm:$0xff]
        %v962 = vld [vmem:[%s207 + $0x278] sm:$0xff]
        %v963 = vld [vmem:[%s207 + $0x280] sm:$0xff]
        %v964 = vld [vmem:[%s207 + $0x288] sm:$0xff]
        %v965 = vld [vmem:[%s207 + $0x290] sm:$0xff]
        %v966 = vld [vmem:[%s207 + $0x298] sm:$0xff]
        %v967 = vld [vmem:[%s207 + $0x2a0] sm:$0xff]
        %v968 = vld [vmem:[%s207 + $0x2a8] sm:$0xff]
        %v969 = vld [vmem:[%s207 + $0x2b0] sm:$0xff]
        %v970 = vld [vmem:[%s207 + $0x2b8] sm:$0xff]
        %v971 = vld [vmem:[%s207 + $0x2c0] sm:$0xff]
        %v972 = vld [vmem:[%s207 + $0x2c8] sm:$0xff]
        %v973 = vld [vmem:[%s207 + $0x2d0] sm:$0xff]
        %v974 = vld [vmem:[%s207 + $0x2d8] sm:$0xff]
        %v975 = vld [vmem:[%s207 + $0x2e0] sm:$0xff]
        %v976 = vld [vmem:[%s207 + $0x2e8] sm:$0xff]
        %v977 = vld [vmem:[%s207 + $0x2f0] sm:$0xff]
        %v978 = vld [vmem:[%s207 + $0x2f8] sm:$0xff]
        %v979 = vld [vmem:[%s207 + $0x300] sm:$0xff]
        %v980 = vld [vmem:[%s207 + $0x308] sm:$0xff]
        %v981 = vld [vmem:[%s207 + $0x310] sm:$0xff]
        %v982 = vld [vmem:[%s207 + $0x318] sm:$0xff]
        %v983 = vld [vmem:[%s207 + $0x320] sm:$0xff]
        %v984 = vld [vmem:[%s207 + $0x328] sm:$0xff]
        %v985 = vld [vmem:[%s207 + $0x330] sm:$0xff]
        %v986 = vld [vmem:[%s207 + $0x338] sm:$0xff]
        %v987 = vld [vmem:[%s207 + $0x340] sm:$0xff]
        %v988 = vld [vmem:[%s207 + $0x348] sm:$0xff]
        %v989 = vld [vmem:[%s207 + $0x350] sm:$0xff]
        %v990 = vld [vmem:[%s207 + $0x358] sm:$0xff]
        %v991 = vld [vmem:[%s207 + $0x360] sm:$0xff]
        %v992 = vld [vmem:[%s207 + $0x368] sm:$0xff]
        %v993 = vld [vmem:[%s207 + $0x370] sm:$0xff]
        %v994 = vld [vmem:[%s207 + $0x378] sm:$0xff]
        %v995 = vld [vmem:[%s207 + $0x380] sm:$0xff]
        %v996 = vld [vmem:[%s207 + $0x388] sm:$0xff]
        %v997 = vld [vmem:[%s207 + $0x390] sm:$0xff]
        %v998 = vld [vmem:[%s207 + $0x398] sm:$0xff]
        %v999 = vld [vmem:[%s207 + $0x3a0] sm:$0xff]
        %v1000 = vld [vmem:[%s207 + $0x3a8] sm:$0xff]
        %v1001 = vld [vmem:[%s207 + $0x3b0] sm:$0xff]
        %v1002 = vld [vmem:[%s207 + $0x3b8] sm:$0xff]
        %v1003 = vld [vmem:[%s207 + $0x3c0] sm:$0xff]
        %v1004 = vld [vmem:[%s207 + $0x3c8] sm:$0xff]
        %v1005 = vld [vmem:[%s207 + $0x3d0] sm:$0xff]
        %v1006 = vld [vmem:[%s207 + $0x3d8] sm:$0xff]
        %v1007 = vld [vmem:[%s207 + $0x3e0] sm:$0xff]
        %v1008 = vld [vmem:[%s207 + $0x3e8] sm:$0xff]
        %v1009 = vld [vmem:[%s207 + $0x3f0] sm:$0xff]
        %v1010 = vld [vmem:[%s207 + $0x3f8] sm:$0xff]
        %v1139 = vunpack.c.l.b16 %v755
        %v1140 = vunpack.c.h.b16 %v755
        %v1141 = vunpack.c.l.b16 %v756
        %v1142 = vunpack.c.h.b16 %v756
        %v1143 = vunpack.c.l.b16 %v757
        %v1144 = vunpack.c.h.b16 %v757
        %v1145 = vunpack.c.l.b16 %v758
        %v1146 = vunpack.c.h.b16 %v758
        %v1147 = vunpack.c.l.b16 %v759
        %v1148 = vunpack.c.h.b16 %v759
        %v1149 = vunpack.c.l.b16 %v760
        %v1150 = vunpack.c.h.b16 %v760
        %v1151 = vunpack.c.l.b16 %v761
        %v1152 = vunpack.c.h.b16 %v761
        %v1153 = vunpack.c.l.b16 %v762
        %v1154 = vunpack.c.h.b16 %v762
        %v1155 = vunpack.c.l.b16 %v763
        %v1156 = vunpack.c.h.b16 %v763
        %v1157 = vunpack.c.l.b16 %v764
        %v1158 = vunpack.c.h.b16 %v764
        %v1159 = vunpack.c.l.b16 %v765
        %v1160 = vunpack.c.h.b16 %v765
        %v1161 = vunpack.c.l.b16 %v766
        %v1162 = vunpack.c.h.b16 %v766
        %v1163 = vunpack.c.l.b16 %v767
        %v1164 = vunpack.c.h.b16 %v767
        %v1165 = vunpack.c.l.b16 %v768
        %v1166 = vunpack.c.h.b16 %v768
        %v1167 = vunpack.c.l.b16 %v769
        %v1168 = vunpack.c.h.b16 %v769
        %v1169 = vunpack.c.l.b16 %v770
        %v1170 = vunpack.c.h.b16 %v770
        %v1171 = vunpack.c.l.b16 %v771
        %v1172 = vunpack.c.h.b16 %v771
        %v1173 = vunpack.c.l.b16 %v772
        %v1174 = vunpack.c.h.b16 %v772
        %v1175 = vunpack.c.l.b16 %v773
        %v1176 = vunpack.c.h.b16 %v773
        %v1177 = vunpack.c.l.b16 %v774
        %v1178 = vunpack.c.h.b16 %v774
        %v1179 = vunpack.c.l.b16 %v775
        %v1180 = vunpack.c.h.b16 %v775
        %v1181 = vunpack.c.l.b16 %v776
        %v1182 = vunpack.c.h.b16 %v776
        %v1183 = vunpack.c.l.b16 %v777
        %v1184 = vunpack.c.h.b16 %v777
        %v1185 = vunpack.c.l.b16 %v778
        %v1186 = vunpack.c.h.b16 %v778
        %v1187 = vunpack.c.l.b16 %v779
        %v1188 = vunpack.c.h.b16 %v779
        %v1189 = vunpack.c.l.b16 %v780
        %v1190 = vunpack.c.h.b16 %v780
        %v1191 = vunpack.c.l.b16 %v781
        %v1192 = vunpack.c.h.b16 %v781
        %v1193 = vunpack.c.l.b16 %v782
        %v1194 = vunpack.c.h.b16 %v782
        %v1195 = vunpack.c.l.b16 %v783
        %v1196 = vunpack.c.h.b16 %v783
        %v1197 = vunpack.c.l.b16 %v784
        %v1198 = vunpack.c.h.b16 %v784
        %v1199 = vunpack.c.l.b16 %v785
        %v1200 = vunpack.c.h.b16 %v785
        %v1201 = vunpack.c.l.b16 %v786
        %v1202 = vunpack.c.h.b16 %v786
        %v1203 = vunpack.c.l.b16 %v787
        %v1204 = vunpack.c.h.b16 %v787
        %v1205 = vunpack.c.l.b16 %v788
        %v1206 = vunpack.c.h.b16 %v788
        %v1207 = vunpack.c.l.b16 %v789
        %v1208 = vunpack.c.h.b16 %v789
        %v1209 = vunpack.c.l.b16 %v790
        %v1210 = vunpack.c.h.b16 %v790
        %v1211 = vunpack.c.l.b16 %v791
        %v1212 = vunpack.c.h.b16 %v791
        %v1213 = vunpack.c.l.b16 %v792
        %v1214 = vunpack.c.h.b16 %v792
        %v1215 = vunpack.c.l.b16 %v793
        %v1216 = vunpack.c.h.b16 %v793
        %v1217 = vunpack.c.l.b16 %v794
        %v1218 = vunpack.c.h.b16 %v794
        %v1219 = vunpack.c.l.b16 %v795
        %v1220 = vunpack.c.h.b16 %v795
        %v1221 = vunpack.c.l.b16 %v796
        %v1222 = vunpack.c.h.b16 %v796
        %v1223 = vunpack.c.l.b16 %v797
        %v1224 = vunpack.c.h.b16 %v797
        %v1225 = vunpack.c.l.b16 %v798
        %v1226 = vunpack.c.h.b16 %v798
        %v1227 = vunpack.c.l.b16 %v799
        %v1228 = vunpack.c.h.b16 %v799
        %v1229 = vunpack.c.l.b16 %v800
        %v1230 = vunpack.c.h.b16 %v800
        %v1231 = vunpack.c.l.b16 %v801
        %v1232 = vunpack.c.h.b16 %v801
        %v1233 = vunpack.c.l.b16 %v802
        %v1234 = vunpack.c.h.b16 %v802
        %v1235 = vunpack.c.l.b16 %v803
        %v1236 = vunpack.c.h.b16 %v803
        %v1237 = vunpack.c.l.b16 %v804
        %v1238 = vunpack.c.h.b16 %v804
        %v1239 = vunpack.c.l.b16 %v805
        %v1240 = vunpack.c.h.b16 %v805
        %v1241 = vunpack.c.l.b16 %v806
        %v1242 = vunpack.c.h.b16 %v806
        %v1243 = vunpack.c.l.b16 %v807
        %v1244 = vunpack.c.h.b16 %v807
        %v1245 = vunpack.c.l.b16 %v808
        %v1246 = vunpack.c.h.b16 %v808
        %v1247 = vunpack.c.l.b16 %v809
        %v1248 = vunpack.c.h.b16 %v809
        %v1249 = vunpack.c.l.b16 %v810
        %v1250 = vunpack.c.h.b16 %v810
        %v1251 = vunpack.c.l.b16 %v811
        %v1252 = vunpack.c.h.b16 %v811
        %v1253 = vunpack.c.l.b16 %v812
        %v1254 = vunpack.c.h.b16 %v812
        %v1255 = vunpack.c.l.b16 %v813
        %v1256 = vunpack.c.h.b16 %v813
        %v1257 = vunpack.c.l.b16 %v814
        %v1258 = vunpack.c.h.b16 %v814
        %v1259 = vunpack.c.l.b16 %v815
        %v1260 = vunpack.c.h.b16 %v815
        %v1261 = vunpack.c.l.b16 %v816
        %v1262 = vunpack.c.h.b16 %v816
        %v1263 = vunpack.c.l.b16 %v817
        %v1264 = vunpack.c.h.b16 %v817
        %v1265 = vunpack.c.l.b16 %v818
        %v1266 = vunpack.c.h.b16 %v818
        %v1267 = vunpack.c.l.b16 %v819
        %v1268 = vunpack.c.h.b16 %v819
        %v1269 = vunpack.c.l.b16 %v820
        %v1270 = vunpack.c.h.b16 %v820
        %v1271 = vunpack.c.l.b16 %v821
        %v1272 = vunpack.c.h.b16 %v821
        %v1273 = vunpack.c.l.b16 %v822
        %v1274 = vunpack.c.h.b16 %v822
        %v1275 = vunpack.c.l.b16 %v823
        %v1276 = vunpack.c.h.b16 %v823
        %v1277 = vunpack.c.l.b16 %v824
        %v1278 = vunpack.c.h.b16 %v824
        %v1279 = vunpack.c.l.b16 %v825
        %v1280 = vunpack.c.h.b16 %v825
        %v1281 = vunpack.c.l.b16 %v826
        %v1282 = vunpack.c.h.b16 %v826
        %v1283 = vunpack.c.l.b16 %v827
        %v1284 = vunpack.c.h.b16 %v827
        %v1285 = vunpack.c.l.b16 %v828
        %v1286 = vunpack.c.h.b16 %v828
        %v1287 = vunpack.c.l.b16 %v829
        %v1288 = vunpack.c.h.b16 %v829
        %v1289 = vunpack.c.l.b16 %v830
        %v1290 = vunpack.c.h.b16 %v830
        %v1291 = vunpack.c.l.b16 %v831
        %v1292 = vunpack.c.h.b16 %v831
        %v1293 = vunpack.c.l.b16 %v832
        %v1294 = vunpack.c.h.b16 %v832
        %v1295 = vunpack.c.l.b16 %v833
        %v1296 = vunpack.c.h.b16 %v833
        %v1297 = vunpack.c.l.b16 %v834
        %v1298 = vunpack.c.h.b16 %v834
        %v1299 = vunpack.c.l.b16 %v835
        %v1300 = vunpack.c.h.b16 %v835
        %v1301 = vunpack.c.l.b16 %v836
        %v1302 = vunpack.c.h.b16 %v836
        %v1303 = vunpack.c.l.b16 %v837
        %v1304 = vunpack.c.h.b16 %v837
        %v1305 = vunpack.c.l.b16 %v838
        %v1306 = vunpack.c.h.b16 %v838
        %v1307 = vunpack.c.l.b16 %v839
        %v1308 = vunpack.c.h.b16 %v839
        %v1309 = vunpack.c.l.b16 %v840
        %v1310 = vunpack.c.h.b16 %v840
        %v1311 = vunpack.c.l.b16 %v841
        %v1312 = vunpack.c.h.b16 %v841
        %v1313 = vunpack.c.l.b16 %v842
        %v1314 = vunpack.c.h.b16 %v842
        %v1315 = vunpack.c.l.b16 %v843
        %v1316 = vunpack.c.h.b16 %v843
        %v1317 = vunpack.c.l.b16 %v844
        %v1318 = vunpack.c.h.b16 %v844
        %v1319 = vunpack.c.l.b16 %v845
        %v1320 = vunpack.c.h.b16 %v845
        %v1321 = vunpack.c.l.b16 %v846
        %v1322 = vunpack.c.h.b16 %v846
        %v1323 = vunpack.c.l.b16 %v847
        %v1324 = vunpack.c.h.b16 %v847
        %v1325 = vunpack.c.l.b16 %v848
        %v1326 = vunpack.c.h.b16 %v848
        %v1327 = vunpack.c.l.b16 %v849
        %v1328 = vunpack.c.h.b16 %v849
        %v1329 = vunpack.c.l.b16 %v850
        %v1330 = vunpack.c.h.b16 %v850
        %v1331 = vunpack.c.l.b16 %v851
        %v1332 = vunpack.c.h.b16 %v851
        %v1333 = vunpack.c.l.b16 %v852
        %v1334 = vunpack.c.h.b16 %v852
        %v1335 = vunpack.c.l.b16 %v853
        %v1336 = vunpack.c.h.b16 %v853
        %v1337 = vunpack.c.l.b16 %v854
        %v1338 = vunpack.c.h.b16 %v854
        %v1339 = vunpack.c.l.b16 %v855
        %v1340 = vunpack.c.h.b16 %v855
        %v1341 = vunpack.c.l.b16 %v856
        %v1342 = vunpack.c.h.b16 %v856
        %v1343 = vunpack.c.l.b16 %v857
        %v1344 = vunpack.c.h.b16 %v857
        %v1345 = vunpack.c.l.b16 %v858
        %v1346 = vunpack.c.h.b16 %v858
        %v1347 = vunpack.c.l.b16 %v859
        %v1348 = vunpack.c.h.b16 %v859
        %v1349 = vunpack.c.l.b16 %v860
        %v1350 = vunpack.c.h.b16 %v860
        %v1351 = vunpack.c.l.b16 %v861
        %v1352 = vunpack.c.h.b16 %v861
        %v1353 = vunpack.c.l.b16 %v862
        %v1354 = vunpack.c.h.b16 %v862
        %v1355 = vunpack.c.l.b16 %v863
        %v1356 = vunpack.c.h.b16 %v863
        %v1357 = vunpack.c.l.b16 %v864
        %v1358 = vunpack.c.h.b16 %v864
        %v1359 = vunpack.c.l.b16 %v865
        %v1360 = vunpack.c.h.b16 %v865
        %v1361 = vunpack.c.l.b16 %v866
        %v1362 = vunpack.c.h.b16 %v866
        %v1363 = vunpack.c.l.b16 %v867
        %v1364 = vunpack.c.h.b16 %v867
        %v1365 = vunpack.c.l.b16 %v868
        %v1366 = vunpack.c.h.b16 %v868
        %v1367 = vunpack.c.l.b16 %v869
        %v1368 = vunpack.c.h.b16 %v869
        %v1369 = vunpack.c.l.b16 %v870
        %v1370 = vunpack.c.h.b16 %v870
        %v1371 = vunpack.c.l.b16 %v871
        %v1372 = vunpack.c.h.b16 %v871
        %v1373 = vunpack.c.l.b16 %v872
        %v1374 = vunpack.c.h.b16 %v872
        %v1375 = vunpack.c.l.b16 %v873
        %v1376 = vunpack.c.h.b16 %v873
        %v1377 = vunpack.c.l.b16 %v874
        %v1378 = vunpack.c.h.b16 %v874
        %v1379 = vunpack.c.l.b16 %v875
        %v1380 = vunpack.c.h.b16 %v875
        %v1381 = vunpack.c.l.b16 %v876
        %v1382 = vunpack.c.h.b16 %v876
        %v1383 = vunpack.c.l.b16 %v877
        %v1384 = vunpack.c.h.b16 %v877
        %v1385 = vunpack.c.l.b16 %v878
        %v1386 = vunpack.c.h.b16 %v878
        %v1387 = vunpack.c.l.b16 %v879
        %v1388 = vunpack.c.h.b16 %v879
        %v1389 = vunpack.c.l.b16 %v880
        %v1390 = vunpack.c.h.b16 %v880
        %v1391 = vunpack.c.l.b16 %v881
        %v1392 = vunpack.c.h.b16 %v881
        %v1393 = vunpack.c.l.b16 %v882
        %v1394 = vunpack.c.h.b16 %v882
        %v1395 = vpack.c.b16 %v1143, %v1139
        %v1396 = vpack.c.b16 %v1144, %v1140
        %v1397 = vpack.c.b16 %v1145, %v1141
        %v1398 = vpack.c.b16 %v1146, %v1142
        %v1399 = vpack.c.b16 %v1151, %v1147
        %v1400 = vpack.c.b16 %v1152, %v1148
        %v1401 = vpack.c.b16 %v1153, %v1149
        %v1402 = vpack.c.b16 %v1154, %v1150
        %v1403 = vpack.c.b16 %v1159, %v1155
        %v1404 = vpack.c.b16 %v1160, %v1156
        %v1405 = vpack.c.b16 %v1161, %v1157
        %v1406 = vpack.c.b16 %v1162, %v1158
        %v1407 = vpack.c.b16 %v1167, %v1163
        %v1408 = vpack.c.b16 %v1168, %v1164
        %v1409 = vpack.c.b16 %v1169, %v1165
        %v1410 = vpack.c.b16 %v1170, %v1166
        %v1411 = vpack.c.b16 %v1175, %v1171
        %v1412 = vpack.c.b16 %v1176, %v1172
        %v1413 = vpack.c.b16 %v1177, %v1173
        %v1414 = vpack.c.b16 %v1178, %v1174
        %v1415 = vpack.c.b16 %v1183, %v1179
        %v1416 = vpack.c.b16 %v1184, %v1180
        %v1417 = vpack.c.b16 %v1185, %v1181
        %v1418 = vpack.c.b16 %v1186, %v1182
        %v1419 = vpack.c.b16 %v1191, %v1187
        %v1420 = vpack.c.b16 %v1192, %v1188
        %v1421 = vpack.c.b16 %v1193, %v1189
        %v1422 = vpack.c.b16 %v1194, %v1190
        %v1423 = vpack.c.b16 %v1199, %v1195
        %v1424 = vpack.c.b16 %v1200, %v1196
        %v1425 = vpack.c.b16 %v1201, %v1197
        %v1426 = vpack.c.b16 %v1202, %v1198
        %v1427 = vpack.c.b16 %v1207, %v1203
        %v1428 = vpack.c.b16 %v1208, %v1204
        %v1429 = vpack.c.b16 %v1209, %v1205
        %v1430 = vpack.c.b16 %v1210, %v1206
        %v1431 = vpack.c.b16 %v1215, %v1211
        %v1432 = vpack.c.b16 %v1216, %v1212
        %v1433 = vpack.c.b16 %v1217, %v1213
        %v1434 = vpack.c.b16 %v1218, %v1214
        %v1435 = vpack.c.b16 %v1223, %v1219
        %v1436 = vpack.c.b16 %v1224, %v1220
        %v1437 = vpack.c.b16 %v1225, %v1221
        %v1438 = vpack.c.b16 %v1226, %v1222
        %v1439 = vpack.c.b16 %v1231, %v1227
        %v1440 = vpack.c.b16 %v1232, %v1228
        %v1441 = vpack.c.b16 %v1233, %v1229
        %v1442 = vpack.c.b16 %v1234, %v1230
        %v1443 = vpack.c.b16 %v1239, %v1235
        %v1444 = vpack.c.b16 %v1240, %v1236
        %v1445 = vpack.c.b16 %v1241, %v1237
        %v1446 = vpack.c.b16 %v1242, %v1238
        %v1447 = vpack.c.b16 %v1247, %v1243
        %v1448 = vpack.c.b16 %v1248, %v1244
        %v1449 = vpack.c.b16 %v1249, %v1245
        %v1450 = vpack.c.b16 %v1250, %v1246
        %v1451 = vpack.c.b16 %v1255, %v1251
        %v1452 = vpack.c.b16 %v1256, %v1252
        %v1453 = vpack.c.b16 %v1257, %v1253
        %v1454 = vpack.c.b16 %v1258, %v1254
        %v1455 = vpack.c.b16 %v1263, %v1259
        %v1456 = vpack.c.b16 %v1264, %v1260
        %v1457 = vpack.c.b16 %v1265, %v1261
        %v1458 = vpack.c.b16 %v1266, %v1262
        %v1459 = vpack.c.b16 %v1271, %v1267
        %v1460 = vpack.c.b16 %v1272, %v1268
        %v1461 = vpack.c.b16 %v1273, %v1269
        %v1462 = vpack.c.b16 %v1274, %v1270
        %v1463 = vpack.c.b16 %v1279, %v1275
        %v1464 = vpack.c.b16 %v1280, %v1276
        %v1465 = vpack.c.b16 %v1281, %v1277
        %v1466 = vpack.c.b16 %v1282, %v1278
        %v1467 = vpack.c.b16 %v1287, %v1283
        %v1468 = vpack.c.b16 %v1288, %v1284
        %v1469 = vpack.c.b16 %v1289, %v1285
        %v1470 = vpack.c.b16 %v1290, %v1286
        %v1471 = vpack.c.b16 %v1295, %v1291
        %v1472 = vpack.c.b16 %v1296, %v1292
        %v1473 = vpack.c.b16 %v1297, %v1293
        %v1474 = vpack.c.b16 %v1298, %v1294
        %v1475 = vpack.c.b16 %v1303, %v1299
        %v1476 = vpack.c.b16 %v1304, %v1300
        %v1477 = vpack.c.b16 %v1305, %v1301
        %v1478 = vpack.c.b16 %v1306, %v1302
        %v1479 = vpack.c.b16 %v1311, %v1307
        %v1480 = vpack.c.b16 %v1312, %v1308
        %v1481 = vpack.c.b16 %v1313, %v1309
        %v1482 = vpack.c.b16 %v1314, %v1310
        %v1483 = vpack.c.b16 %v1319, %v1315
        %v1484 = vpack.c.b16 %v1320, %v1316
        %v1485 = vpack.c.b16 %v1321, %v1317
        %v1486 = vpack.c.b16 %v1322, %v1318
        %v1487 = vpack.c.b16 %v1327, %v1323
        %v1488 = vpack.c.b16 %v1328, %v1324
        %v1489 = vpack.c.b16 %v1329, %v1325
        %v1490 = vpack.c.b16 %v1330, %v1326
        %v1491 = vpack.c.b16 %v1335, %v1331
        %v1492 = vpack.c.b16 %v1336, %v1332
        %v1493 = vpack.c.b16 %v1337, %v1333
        %v1494 = vpack.c.b16 %v1338, %v1334
        %v1495 = vpack.c.b16 %v1343, %v1339
        %v1496 = vpack.c.b16 %v1344, %v1340
        %v1497 = vpack.c.b16 %v1345, %v1341
        %v1498 = vpack.c.b16 %v1346, %v1342
        %v1499 = vpack.c.b16 %v1351, %v1347
        %v1500 = vpack.c.b16 %v1352, %v1348
        %v1501 = vpack.c.b16 %v1353, %v1349
        %v1502 = vpack.c.b16 %v1354, %v1350
        %v1503 = vpack.c.b16 %v1359, %v1355
        %v1504 = vpack.c.b16 %v1360, %v1356
        %v1505 = vpack.c.b16 %v1361, %v1357
        %v1506 = vpack.c.b16 %v1362, %v1358
        %v1507 = vpack.c.b16 %v1367, %v1363
        %v1508 = vpack.c.b16 %v1368, %v1364
        %v1509 = vpack.c.b16 %v1369, %v1365
        %v1510 = vpack.c.b16 %v1370, %v1366
        %v1511 = vpack.c.b16 %v1375, %v1371
        %v1512 = vpack.c.b16 %v1376, %v1372
        %v1513 = vpack.c.b16 %v1377, %v1373
        %v1514 = vpack.c.b16 %v1378, %v1374
        %v1515 = vpack.c.b16 %v1383, %v1379
        %v1516 = vpack.c.b16 %v1384, %v1380
        %v1517 = vpack.c.b16 %v1385, %v1381
        %v1518 = vpack.c.b16 %v1386, %v1382
        %v1519 = vpack.c.b16 %v1391, %v1387
        %v1520 = vpack.c.b16 %v1392, %v1388
        %v1521 = vpack.c.b16 %v1393, %v1389
        %v1522 = vpack.c.b16 %v1394, %v1390
        %v1779 = vunpack.c.l.b16 %v883
        %v1780 = vunpack.c.h.b16 %v883
        %v1781 = vunpack.c.l.b16 %v884
        %v1782 = vunpack.c.h.b16 %v884
        %v1783 = vunpack.c.l.b16 %v885
        %v1784 = vunpack.c.h.b16 %v885
        %v1785 = vunpack.c.l.b16 %v886
        %v1786 = vunpack.c.h.b16 %v886
        %v1787 = vunpack.c.l.b16 %v887
        %v1788 = vunpack.c.h.b16 %v887
        %v1789 = vunpack.c.l.b16 %v888
        %v1790 = vunpack.c.h.b16 %v888
        %v1791 = vunpack.c.l.b16 %v889
        %v1792 = vunpack.c.h.b16 %v889
        %v1793 = vunpack.c.l.b16 %v890
        %v1794 = vunpack.c.h.b16 %v890
        %v1795 = vunpack.c.l.b16 %v891
        %v1796 = vunpack.c.h.b16 %v891
        %v1797 = vunpack.c.l.b16 %v892
        %v1798 = vunpack.c.h.b16 %v892
        %v1799 = vunpack.c.l.b16 %v893
        %v1800 = vunpack.c.h.b16 %v893
        %v1801 = vunpack.c.l.b16 %v894
        %v1802 = vunpack.c.h.b16 %v894
        %v1803 = vunpack.c.l.b16 %v895
        %v1804 = vunpack.c.h.b16 %v895
        %v1805 = vunpack.c.l.b16 %v896
        %v1806 = vunpack.c.h.b16 %v896
        %v1807 = vunpack.c.l.b16 %v897
        %v1808 = vunpack.c.h.b16 %v897
        %v1809 = vunpack.c.l.b16 %v898
        %v1810 = vunpack.c.h.b16 %v898
        %v1811 = vunpack.c.l.b16 %v899
        %v1812 = vunpack.c.h.b16 %v899
        %v1813 = vunpack.c.l.b16 %v900
        %v1814 = vunpack.c.h.b16 %v900
        %v1815 = vunpack.c.l.b16 %v901
        %v1816 = vunpack.c.h.b16 %v901
        %v1817 = vunpack.c.l.b16 %v902
        %v1818 = vunpack.c.h.b16 %v902
        %v1819 = vunpack.c.l.b16 %v903
        %v1820 = vunpack.c.h.b16 %v903
        %v1821 = vunpack.c.l.b16 %v904
        %v1822 = vunpack.c.h.b16 %v904
        %v1823 = vunpack.c.l.b16 %v905
        %v1824 = vunpack.c.h.b16 %v905
        %v1825 = vunpack.c.l.b16 %v906
        %v1826 = vunpack.c.h.b16 %v906
        %v1827 = vunpack.c.l.b16 %v907
        %v1828 = vunpack.c.h.b16 %v907
        %v1829 = vunpack.c.l.b16 %v908
        %v1830 = vunpack.c.h.b16 %v908
        %v1831 = vunpack.c.l.b16 %v909
        %v1832 = vunpack.c.h.b16 %v909
        %v1833 = vunpack.c.l.b16 %v910
        %v1834 = vunpack.c.h.b16 %v910
        %v1835 = vunpack.c.l.b16 %v911
        %v1836 = vunpack.c.h.b16 %v911
        %v1837 = vunpack.c.l.b16 %v912
        %v1838 = vunpack.c.h.b16 %v912
        %v1839 = vunpack.c.l.b16 %v913
        %v1840 = vunpack.c.h.b16 %v913
        %v1841 = vunpack.c.l.b16 %v914
        %v1842 = vunpack.c.h.b16 %v914
        %v1843 = vunpack.c.l.b16 %v915
        %v1844 = vunpack.c.h.b16 %v915
        %v1845 = vunpack.c.l.b16 %v916
        %v1846 = vunpack.c.h.b16 %v916
        %v1847 = vunpack.c.l.b16 %v917
        %v1848 = vunpack.c.h.b16 %v917
        %v1849 = vunpack.c.l.b16 %v918
        %v1850 = vunpack.c.h.b16 %v918
        %v1851 = vunpack.c.l.b16 %v919
        %v1852 = vunpack.c.h.b16 %v919
        %v1853 = vunpack.c.l.b16 %v920
        %v1854 = vunpack.c.h.b16 %v920
        %v1855 = vunpack.c.l.b16 %v921
        %v1856 = vunpack.c.h.b16 %v921
        %v1857 = vunpack.c.l.b16 %v922
        %v1858 = vunpack.c.h.b16 %v922
        %v1859 = vunpack.c.l.b16 %v923
        %v1860 = vunpack.c.h.b16 %v923
        %v1861 = vunpack.c.l.b16 %v924
        %v1862 = vunpack.c.h.b16 %v924
        %v1863 = vunpack.c.l.b16 %v925
        %v1864 = vunpack.c.h.b16 %v925
        %v1865 = vunpack.c.l.b16 %v926
        %v1866 = vunpack.c.h.b16 %v926
        %v1867 = vunpack.c.l.b16 %v927
        %v1868 = vunpack.c.h.b16 %v927
        %v1869 = vunpack.c.l.b16 %v928
        %v1870 = vunpack.c.h.b16 %v928
        %v1871 = vunpack.c.l.b16 %v929
        %v1872 = vunpack.c.h.b16 %v929
        %v1873 = vunpack.c.l.b16 %v930
        %v1874 = vunpack.c.h.b16 %v930
        %v1875 = vunpack.c.l.b16 %v931
        %v1876 = vunpack.c.h.b16 %v931
        %v1877 = vunpack.c.l.b16 %v932
        %v1878 = vunpack.c.h.b16 %v932
        %v1879 = vunpack.c.l.b16 %v933
        %v1880 = vunpack.c.h.b16 %v933
        %v1881 = vunpack.c.l.b16 %v934
        %v1882 = vunpack.c.h.b16 %v934
        %v1883 = vunpack.c.l.b16 %v935
        %v1884 = vunpack.c.h.b16 %v935
        %v1885 = vunpack.c.l.b16 %v936
        %v1886 = vunpack.c.h.b16 %v936
        %v1887 = vunpack.c.l.b16 %v937
        %v1888 = vunpack.c.h.b16 %v937
        %v1889 = vunpack.c.l.b16 %v938
        %v1890 = vunpack.c.h.b16 %v938
        %v1891 = vunpack.c.l.b16 %v939
        %v1892 = vunpack.c.h.b16 %v939
        %v1893 = vunpack.c.l.b16 %v940
        %v1894 = vunpack.c.h.b16 %v940
        %v1895 = vunpack.c.l.b16 %v941
        %v1896 = vunpack.c.h.b16 %v941
        %v1897 = vunpack.c.l.b16 %v942
        %v1898 = vunpack.c.h.b16 %v942
        %v1899 = vunpack.c.l.b16 %v943
        %v1900 = vunpack.c.h.b16 %v943
        %v1901 = vunpack.c.l.b16 %v944
        %v1902 = vunpack.c.h.b16 %v944
        %v1903 = vunpack.c.l.b16 %v945
        %v1904 = vunpack.c.h.b16 %v945
        %v1905 = vunpack.c.l.b16 %v946
        %v1906 = vunpack.c.h.b16 %v946
        %v1907 = vunpack.c.l.b16 %v947
        %v1908 = vunpack.c.h.b16 %v947
        %v1909 = vunpack.c.l.b16 %v948
        %v1910 = vunpack.c.h.b16 %v948
        %v1911 = vunpack.c.l.b16 %v949
        %v1912 = vunpack.c.h.b16 %v949
        %v1913 = vunpack.c.l.b16 %v950
        %v1914 = vunpack.c.h.b16 %v950
        %v1915 = vunpack.c.l.b16 %v951
        %v1916 = vunpack.c.h.b16 %v951
        %v1917 = vunpack.c.l.b16 %v952
        %v1918 = vunpack.c.h.b16 %v952
        %v1919 = vunpack.c.l.b16 %v953
        %v1920 = vunpack.c.h.b16 %v953
        %v1921 = vunpack.c.l.b16 %v954
        %v1922 = vunpack.c.h.b16 %v954
        %v1923 = vunpack.c.l.b16 %v955
        %v1924 = vunpack.c.h.b16 %v955
        %v1925 = vunpack.c.l.b16 %v956
        %v1926 = vunpack.c.h.b16 %v956
        %v1927 = vunpack.c.l.b16 %v957
        %v1928 = vunpack.c.h.b16 %v957
        %v1929 = vunpack.c.l.b16 %v958
        %v1930 = vunpack.c.h.b16 %v958
        %v1931 = vunpack.c.l.b16 %v959
        %v1932 = vunpack.c.h.b16 %v959
        %v1933 = vunpack.c.l.b16 %v960
        %v1934 = vunpack.c.h.b16 %v960
        %v1935 = vunpack.c.l.b16 %v961
        %v1936 = vunpack.c.h.b16 %v961
        %v1937 = vunpack.c.l.b16 %v962
        %v1938 = vunpack.c.h.b16 %v962
        %v1939 = vunpack.c.l.b16 %v963
        %v1940 = vunpack.c.h.b16 %v963
        %v1941 = vunpack.c.l.b16 %v964
        %v1942 = vunpack.c.h.b16 %v964
        %v1943 = vunpack.c.l.b16 %v965
        %v1944 = vunpack.c.h.b16 %v965
        %v1945 = vunpack.c.l.b16 %v966
        %v1946 = vunpack.c.h.b16 %v966
        %v1947 = vunpack.c.l.b16 %v967
        %v1948 = vunpack.c.h.b16 %v967
        %v1949 = vunpack.c.l.b16 %v968
        %v1950 = vunpack.c.h.b16 %v968
        %v1951 = vunpack.c.l.b16 %v969
        %v1952 = vunpack.c.h.b16 %v969
        %v1953 = vunpack.c.l.b16 %v970
        %v1954 = vunpack.c.h.b16 %v970
        %v1955 = vunpack.c.l.b16 %v971
        %v1956 = vunpack.c.h.b16 %v971
        %v1957 = vunpack.c.l.b16 %v972
        %v1958 = vunpack.c.h.b16 %v972
        %v1959 = vunpack.c.l.b16 %v973
        %v1960 = vunpack.c.h.b16 %v973
        %v1961 = vunpack.c.l.b16 %v974
        %v1962 = vunpack.c.h.b16 %v974
        %v1963 = vunpack.c.l.b16 %v975
        %v1964 = vunpack.c.h.b16 %v975
        %v1965 = vunpack.c.l.b16 %v976
        %v1966 = vunpack.c.h.b16 %v976
        %v1967 = vunpack.c.l.b16 %v977
        %v1968 = vunpack.c.h.b16 %v977
        %v1969 = vunpack.c.l.b16 %v978
        %v1970 = vunpack.c.h.b16 %v978
        %v1971 = vunpack.c.l.b16 %v979
        %v1972 = vunpack.c.h.b16 %v979
        %v1973 = vunpack.c.l.b16 %v980
        %v1974 = vunpack.c.h.b16 %v980
        %v1975 = vunpack.c.l.b16 %v981
        %v1976 = vunpack.c.h.b16 %v981
        %v1977 = vunpack.c.l.b16 %v982
        %v1978 = vunpack.c.h.b16 %v982
        %v1979 = vunpack.c.l.b16 %v983
        %v1980 = vunpack.c.h.b16 %v983
        %v1981 = vunpack.c.l.b16 %v984
        %v1982 = vunpack.c.h.b16 %v984
        %v1983 = vunpack.c.l.b16 %v985
        %v1984 = vunpack.c.h.b16 %v985
        %v1985 = vunpack.c.l.b16 %v986
        %v1986 = vunpack.c.h.b16 %v986
        %v1987 = vunpack.c.l.b16 %v987
        %v1988 = vunpack.c.h.b16 %v987
        %v1989 = vunpack.c.l.b16 %v988
        %v1990 = vunpack.c.h.b16 %v988
        %v1991 = vunpack.c.l.b16 %v989
        %v1992 = vunpack.c.h.b16 %v989
        %v1993 = vunpack.c.l.b16 %v990
        %v1994 = vunpack.c.h.b16 %v990
        %v1995 = vunpack.c.l.b16 %v991
        %v1996 = vunpack.c.h.b16 %v991
        %v1997 = vunpack.c.l.b16 %v992
        %v1998 = vunpack.c.h.b16 %v992
        %v1999 = vunpack.c.l.b16 %v993
        %v2000 = vunpack.c.h.b16 %v993
        %v2001 = vunpack.c.l.b16 %v994
        %v2002 = vunpack.c.h.b16 %v994
        %v2003 = vunpack.c.l.b16 %v995
        %v2004 = vunpack.c.h.b16 %v995
        %v2005 = vunpack.c.l.b16 %v996
        %v2006 = vunpack.c.h.b16 %v996
        %v2007 = vunpack.c.l.b16 %v997
        %v2008 = vunpack.c.h.b16 %v997
        %v2009 = vunpack.c.l.b16 %v998
        %v2010 = vunpack.c.h.b16 %v998
        %v2011 = vunpack.c.l.b16 %v999
        %v2012 = vunpack.c.h.b16 %v999
        %v2013 = vunpack.c.l.b16 %v1000
        %v2014 = vunpack.c.h.b16 %v1000
        %v2015 = vunpack.c.l.b16 %v1001
        %v2016 = vunpack.c.h.b16 %v1001
        %v2017 = vunpack.c.l.b16 %v1002
        %v2018 = vunpack.c.h.b16 %v1002
        %v2019 = vunpack.c.l.b16 %v1003
        %v2020 = vunpack.c.h.b16 %v1003
        %v2021 = vunpack.c.l.b16 %v1004
        %v2022 = vunpack.c.h.b16 %v1004
        %v2023 = vunpack.c.l.b16 %v1005
        %v2024 = vunpack.c.h.b16 %v1005
        %v2025 = vunpack.c.l.b16 %v1006
        %v2026 = vunpack.c.h.b16 %v1006
        %v2027 = vunpack.c.l.b16 %v1007
        %v2028 = vunpack.c.h.b16 %v1007
        %v2029 = vunpack.c.l.b16 %v1008
        %v2030 = vunpack.c.h.b16 %v1008
        %v2031 = vunpack.c.l.b16 %v1009
        %v2032 = vunpack.c.h.b16 %v1009
        %v2033 = vunpack.c.l.b16 %v1010
        %v2034 = vunpack.c.h.b16 %v1010
        %v2035 = vpack.c.b16 %v1783, %v1779
        %v2036 = vpack.c.b16 %v1784, %v1780
        %v2037 = vpack.c.b16 %v1785, %v1781
        %v2038 = vpack.c.b16 %v1786, %v1782
        %v2039 = vpack.c.b16 %v1791, %v1787
        %v2040 = vpack.c.b16 %v1792, %v1788
        %v2041 = vpack.c.b16 %v1793, %v1789
        %v2042 = vpack.c.b16 %v1794, %v1790
        %v2043 = vpack.c.b16 %v1799, %v1795
        %v2044 = vpack.c.b16 %v1800, %v1796
        %v2045 = vpack.c.b16 %v1801, %v1797
        %v2046 = vpack.c.b16 %v1802, %v1798
        %v2047 = vpack.c.b16 %v1807, %v1803
        %v2048 = vpack.c.b16 %v1808, %v1804
        %v2049 = vpack.c.b16 %v1809, %v1805
        %v2050 = vpack.c.b16 %v1810, %v1806
        %v2051 = vpack.c.b16 %v1815, %v1811
        %v2052 = vpack.c.b16 %v1816, %v1812
        %v2053 = vpack.c.b16 %v1817, %v1813
        %v2054 = vpack.c.b16 %v1818, %v1814
        %v2055 = vpack.c.b16 %v1823, %v1819
        %v2056 = vpack.c.b16 %v1824, %v1820
        %v2057 = vpack.c.b16 %v1825, %v1821
        %v2058 = vpack.c.b16 %v1826, %v1822
        %v2059 = vpack.c.b16 %v1831, %v1827
        %v2060 = vpack.c.b16 %v1832, %v1828
        %v2061 = vpack.c.b16 %v1833, %v1829
        %v2062 = vpack.c.b16 %v1834, %v1830
        %v2063 = vpack.c.b16 %v1839, %v1835
        %v2064 = vpack.c.b16 %v1840, %v1836
        %v2065 = vpack.c.b16 %v1841, %v1837
        %v2066 = vpack.c.b16 %v1842, %v1838
        %v2067 = vpack.c.b16 %v1847, %v1843
        %v2068 = vpack.c.b16 %v1848, %v1844
        %v2069 = vpack.c.b16 %v1849, %v1845
        %v2070 = vpack.c.b16 %v1850, %v1846
        %v2071 = vpack.c.b16 %v1855, %v1851
        %v2072 = vpack.c.b16 %v1856, %v1852
        %v2073 = vpack.c.b16 %v1857, %v1853
        %v2074 = vpack.c.b16 %v1858, %v1854
        %v2075 = vpack.c.b16 %v1863, %v1859
        %v2076 = vpack.c.b16 %v1864, %v1860
        %v2077 = vpack.c.b16 %v1865, %v1861
        %v2078 = vpack.c.b16 %v1866, %v1862
        %v2079 = vpack.c.b16 %v1871, %v1867
        %v2080 = vpack.c.b16 %v1872, %v1868
        %v2081 = vpack.c.b16 %v1873, %v1869
        %v2082 = vpack.c.b16 %v1874, %v1870
        %v2083 = vpack.c.b16 %v1879, %v1875
        %v2084 = vpack.c.b16 %v1880, %v1876
        %v2085 = vpack.c.b16 %v1881, %v1877
        %v2086 = vpack.c.b16 %v1882, %v1878
        %v2087 = vpack.c.b16 %v1887, %v1883
        %v2088 = vpack.c.b16 %v1888, %v1884
        %v2089 = vpack.c.b16 %v1889, %v1885
        %v2090 = vpack.c.b16 %v1890, %v1886
        %v2091 = vpack.c.b16 %v1895, %v1891
        %v2092 = vpack.c.b16 %v1896, %v1892
        %v2093 = vpack.c.b16 %v1897, %v1893
        %v2094 = vpack.c.b16 %v1898, %v1894
        %v2095 = vpack.c.b16 %v1903, %v1899
        %v2096 = vpack.c.b16 %v1904, %v1900
        %v2097 = vpack.c.b16 %v1905, %v1901
        %v2098 = vpack.c.b16 %v1906, %v1902
        %v2099 = vpack.c.b16 %v1911, %v1907
        %v2100 = vpack.c.b16 %v1912, %v1908
        %v2101 = vpack.c.b16 %v1913, %v1909
        %v2102 = vpack.c.b16 %v1914, %v1910
        %v2103 = vpack.c.b16 %v1919, %v1915
        %v2104 = vpack.c.b16 %v1920, %v1916
        %v2105 = vpack.c.b16 %v1921, %v1917
        %v2106 = vpack.c.b16 %v1922, %v1918
        %v2107 = vpack.c.b16 %v1927, %v1923
        %v2108 = vpack.c.b16 %v1928, %v1924
        %v2109 = vpack.c.b16 %v1929, %v1925
        %v2110 = vpack.c.b16 %v1930, %v1926
        %v2111 = vpack.c.b16 %v1935, %v1931
        %v2112 = vpack.c.b16 %v1936, %v1932
        %v2113 = vpack.c.b16 %v1937, %v1933
        %v2114 = vpack.c.b16 %v1938, %v1934
        %v2115 = vpack.c.b16 %v1943, %v1939
        %v2116 = vpack.c.b16 %v1944, %v1940
        %v2117 = vpack.c.b16 %v1945, %v1941
        %v2118 = vpack.c.b16 %v1946, %v1942
        %v2119 = vpack.c.b16 %v1951, %v1947
        %v2120 = vpack.c.b16 %v1952, %v1948
        %v2121 = vpack.c.b16 %v1953, %v1949
        %v2122 = vpack.c.b16 %v1954, %v1950
        %v2123 = vpack.c.b16 %v1959, %v1955
        %v2124 = vpack.c.b16 %v1960, %v1956
        %v2125 = vpack.c.b16 %v1961, %v1957
        %v2126 = vpack.c.b16 %v1962, %v1958
        %v2127 = vpack.c.b16 %v1967, %v1963
        %v2128 = vpack.c.b16 %v1968, %v1964
        %v2129 = vpack.c.b16 %v1969, %v1965
        %v2130 = vpack.c.b16 %v1970, %v1966
        %v2131 = vpack.c.b16 %v1975, %v1971
        %v2132 = vpack.c.b16 %v1976, %v1972
        %v2133 = vpack.c.b16 %v1977, %v1973
        %v2134 = vpack.c.b16 %v1978, %v1974
        %v2135 = vpack.c.b16 %v1983, %v1979
        %v2136 = vpack.c.b16 %v1984, %v1980
        %v2137 = vpack.c.b16 %v1985, %v1981
        %v2138 = vpack.c.b16 %v1986, %v1982
        %v2139 = vpack.c.b16 %v1991, %v1987
        %v2140 = vpack.c.b16 %v1992, %v1988
        %v2141 = vpack.c.b16 %v1993, %v1989
        %v2142 = vpack.c.b16 %v1994, %v1990
        %v2143 = vpack.c.b16 %v1999, %v1995
        %v2144 = vpack.c.b16 %v2000, %v1996
        %v2145 = vpack.c.b16 %v2001, %v1997
        %v2146 = vpack.c.b16 %v2002, %v1998
        %v2147 = vpack.c.b16 %v2007, %v2003
        %v2148 = vpack.c.b16 %v2008, %v2004
        %v2149 = vpack.c.b16 %v2009, %v2005
        %v2150 = vpack.c.b16 %v2010, %v2006
        %v2151 = vpack.c.b16 %v2015, %v2011
        %v2152 = vpack.c.b16 %v2016, %v2012
        %v2153 = vpack.c.b16 %v2017, %v2013
        %v2154 = vpack.c.b16 %v2018, %v2014
        %v2155 = vpack.c.b16 %v2023, %v2019
        %v2156 = vpack.c.b16 %v2024, %v2020
        %v2157 = vpack.c.b16 %v2025, %v2021
        %v2158 = vpack.c.b16 %v2026, %v2022
        %v2159 = vpack.c.b16 %v2031, %v2027
        %v2160 = vpack.c.b16 %v2032, %v2028
        %v2161 = vpack.c.b16 %v2033, %v2029
        %v2162 = vpack.c.b16 %v2034, %v2030
        %2291 = vmatprep.subr.bf16.mxu0 %v2036
        %2292 = vmatpush1.bf16.msra.mxu0 %v2035
        %2293 = vmatprep.subr.bf16.mxu0 %v2040
        %2294 = vmatpush1.bf16.msra.mxu0 %v2039
        %2295 = vmatprep.subr.bf16.mxu0 %v2044
        %2296 = vmatpush1.bf16.msra.mxu0 %v2043
        %2297 = vmatprep.subr.bf16.mxu0 %v2048
        %2298 = vmatpush1.bf16.msra.mxu0 %v2047
        %2299 = vmatprep.subr.bf16.mxu0 %v2052
        %2300 = vmatpush1.bf16.msra.mxu0 %v2051
        %2301 = vmatprep.subr.bf16.mxu0 %v2056
        %2302 = vmatpush1.bf16.msra.mxu0 %v2055
        %2303 = vmatprep.subr.bf16.mxu0 %v2060
        %2304 = vmatpush1.bf16.msra.mxu0 %v2059
        %2305 = vmatprep.subr.bf16.mxu0 %v2064
        %2306 = vmatpush1.bf16.msra.mxu0 %v2063
        %2307 = vmatprep.subr.bf16.mxu0 %v2068
        %2308 = vmatpush1.bf16.msra.mxu0 %v2067
        %2309 = vmatprep.subr.bf16.mxu0 %v2072
        %2310 = vmatpush1.bf16.msra.mxu0 %v2071
        %2311 = vmatprep.subr.bf16.mxu0 %v2076
        %2312 = vmatpush1.bf16.msra.mxu0 %v2075
        %2313 = vmatprep.subr.bf16.mxu0 %v2080
        %2314 = vmatpush1.bf16.msra.mxu0 %v2079
        %2315 = vmatprep.subr.bf16.mxu0 %v2084
        %2316 = vmatpush1.bf16.msra.mxu0 %v2083
        %2317 = vmatprep.subr.bf16.mxu0 %v2088
        %2318 = vmatpush1.bf16.msra.mxu0 %v2087
        %2319 = vmatprep.subr.bf16.mxu0 %v2092
        %2320 = vmatpush1.bf16.msra.mxu0 %v2091
        %2321 = vmatprep.subr.bf16.mxu0 %v2096
        %2322 = vmatpush1.bf16.msra.mxu0 %v2095
        %2323 = vmatprep.mubr.bf16.mxu0 %v1396
        %2324 = vmatmul.mubr.bf16.gmra.mrb[0].mxu0 %v1395
        %v2325 = vpop.f32.mrb[0].mxu0
        %v2326 = vadd.f32 0.0, %v2325
        %v2327 = vpop.f32.mrb[0].mxu0
        %v2328 = vadd.f32 0.0, %v2327
        %v2329 = vpop.f32.mrb[0].mxu0
        %v2330 = vadd.f32 0.0, %v2329
        %v2331 = vpop.f32.mrb[0].mxu0
        %v2332 = vadd.f32 0.0, %v2331
        %2333 = vmatprep.mubr.bf16.mxu0 %v1400
        %2334 = vmatmul.mubr.bf16.gmra.mrb[0].mxu0 %v1399
        %v2335 = vpop.f32.mrb[0].mxu0
        %v2336 = vadd.f32 0.0, %v2335
        %v2337 = vpop.f32.mrb[0].mxu0
        %v2338 = vadd.f32 0.0, %v2337
        %v2339 = vpop.f32.mrb[0].mxu0
        %v2340 = vadd.f32 0.0, %v2339
        %v2341 = vpop.f32.mrb[0].mxu0
        %v2342 = vadd.f32 0.0, %v2341
        %2343 = vmatprep.mubr.bf16.mxu0 %v1404
        %2344 = vmatmul.mubr.bf16.gmra.mrb[0].mxu0 %v1403
        %v2345 = vpop.f32.mrb[0].mxu0
        %v2346 = vadd.f32 0.0, %v2345
        %v2347 = vpop.f32.mrb[0].mxu0
        %v2348 = vadd.f32 0.0, %v2347
        %v2349 = vpop.f32.mrb[0].mxu0
        %v2350 = vadd.f32 0.0, %v2349
        %v2351 = vpop.f32.mrb[0].mxu0
        %v2352 = vadd.f32 0.0, %v2351
        %2353 = vmatprep.mubr.bf16.mxu0 %v1408
        %2354 = vmatmul.mubr.bf16.gmra.mrb[0].mxu0 %v1407
        %v2355 = vpop.f32.mrb[0].mxu0
        %v2356 = vadd.f32 0.0, %v2355
        %v2357 = vpop.f32.mrb[0].mxu0
        %v2358 = vadd.f32 0.0, %v2357
        %v2359 = vpop.f32.mrb[0].mxu0
        %v2360 = vadd.f32 0.0, %v2359
        %v2361 = vpop.f32.mrb[0].mxu0
        %v2362 = vadd.f32 0.0, %v2361
        %2363 = vmatprep.mubr.bf16.mxu0 %v1412
        %2364 = vmatmul.mubr.bf16.gmra.mrb[0].mxu0 %v1411
        %v2365 = vpop.f32.mrb[0].mxu0
        %v2366 = vadd.f32 0.0, %v2365
        %v2367 = vpop.f32.mrb[0].mxu0
        %v2368 = vadd.f32 0.0, %v2367
        %v2369 = vpop.f32.mrb[0].mxu0
        %v2370 = vadd.f32 0.0, %v2369
        %v2371 = vpop.f32.mrb[0].mxu0
        %v2372 = vadd.f32 0.0, %v2371
        %2373 = vmatprep.mubr.bf16.mxu0 %v1416
        %2374 = vmatmul.mubr.bf16.gmra.mrb[0].mxu0 %v1415
        %v2375 = vpop.f32.mrb[0].mxu0
        %v2376 = vadd.f32 0.0, %v2375
        %v2377 = vpop.f32.mrb[0].mxu0
        %v2378 = vadd.f32 0.0, %v2377
        %v2379 = vpop.f32.mrb[0].mxu0
        %v2380 = vadd.f32 0.0, %v2379
        %v2381 = vpop.f32.mrb[0].mxu0
        %v2382 = vadd.f32 0.0, %v2381
        %2383 = vmatprep.mubr.bf16.mxu0 %v1420
        %2384 = vmatmul.mubr.bf16.gmra.mrb[0].mxu0 %v1419
        %v2385 = vpop.f32.mrb[0].mxu0
        %v2386 = vadd.f32 0.0, %v2385
        %v2387 = vpop.f32.mrb[0].mxu0
        %v2388 = vadd.f32 0.0, %v2387
        %v2389 = vpop.f32.mrb[0].mxu0
        %v2390 = vadd.f32 0.0, %v2389
        %v2391 = vpop.f32.mrb[0].mxu0
        %v2392 = vadd.f32 0.0, %v2391
        %2393 = vmatprep.mubr.bf16.mxu0 %v1424
        %2394 = vmatmul.mubr.bf16.gmra.mrb[0].mxu0 %v1423
        %v2395 = vpop.f32.mrb[0].mxu0
        %v2396 = vadd.f32 0.0, %v2395
        %v2397 = vpop.f32.mrb[0].mxu0
        %v2398 = vadd.f32 0.0, %v2397
        %v2399 = vpop.f32.mrb[0].mxu0
        %v2400 = vadd.f32 0.0, %v2399
        %v2401 = vpop.f32.mrb[0].mxu0
        %v2402 = vadd.f32 0.0, %v2401
        %2403 = vmatprep.mubr.bf16.mxu0 %v1428
        %2404 = vmatmul.mubr.bf16.gmra.mrb[0].mxu0 %v1427
        %v2405 = vpop.f32.mrb[0].mxu0
        %v2406 = vadd.f32 0.0, %v2405
        %v2407 = vpop.f32.mrb[0].mxu0
        %v2408 = vadd.f32 0.0, %v2407
        %v2409 = vpop.f32.mrb[0].mxu0
        %v2410 = vadd.f32 0.0, %v2409
        %v2411 = vpop.f32.mrb[0].mxu0
        %v2412 = vadd.f32 0.0, %v2411
        %2413 = vmatprep.mubr.bf16.mxu0 %v1432
        %2414 = vmatmul.mubr.bf16.gmra.mrb[0].mxu0 %v1431
        %v2415 = vpop.f32.mrb[0].mxu0
        %v2416 = vadd.f32 0.0, %v2415
        %v2417 = vpop.f32.mrb[0].mxu0
        %v2418 = vadd.f32 0.0, %v2417
        %v2419 = vpop.f32.mrb[0].mxu0
        %v2420 = vadd.f32 0.0, %v2419
        %v2421 = vpop.f32.mrb[0].mxu0
        %v2422 = vadd.f32 0.0, %v2421
        %2423 = vmatprep.mubr.bf16.mxu0 %v1436
        %2424 = vmatmul.mubr.bf16.gmra.mrb[0].mxu0 %v1435
        %v2425 = vpop.f32.mrb[0].mxu0
        %v2426 = vadd.f32 0.0, %v2425
        %v2427 = vpop.f32.mrb[0].mxu0
        %v2428 = vadd.f32 0.0, %v2427
        %v2429 = vpop.f32.mrb[0].mxu0
        %v2430 = vadd.f32 0.0, %v2429
        %v2431 = vpop.f32.mrb[0].mxu0
        %v2432 = vadd.f32 0.0, %v2431
        %2433 = vmatprep.mubr.bf16.mxu0 %v1440
        %2434 = vmatmul.mubr.bf16.gmra.mrb[0].mxu0 %v1439
        %v2435 = vpop.f32.mrb[0].mxu0
        %v2436 = vadd.f32 0.0, %v2435
        %v2437 = vpop.f32.mrb[0].mxu0
        %v2438 = vadd.f32 0.0, %v2437
        %v2439 = vpop.f32.mrb[0].mxu0
        %v2440 = vadd.f32 0.0, %v2439
        %v2441 = vpop.f32.mrb[0].mxu0
        %v2442 = vadd.f32 0.0, %v2441
        %2443 = vmatprep.mubr.bf16.mxu0 %v1444
        %2444 = vmatmul.mubr.bf16.gmra.mrb[0].mxu0 %v1443
        %v2445 = vpop.f32.mrb[0].mxu0
        %v2446 = vadd.f32 0.0, %v2445
        %v2447 = vpop.f32.mrb[0].mxu0
        %v2448 = vadd.f32 0.0, %v2447
        %v2449 = vpop.f32.mrb[0].mxu0
        %v2450 = vadd.f32 0.0, %v2449
        %v2451 = vpop.f32.mrb[0].mxu0
        %v2452 = vadd.f32 0.0, %v2451
        %2453 = vmatprep.mubr.bf16.mxu0 %v1448
        %2454 = vmatmul.mubr.bf16.gmra.mrb[0].mxu0 %v1447
        %v2455 = vpop.f32.mrb[0].mxu0
        %v2456 = vadd.f32 0.0, %v2455
        %v2457 = vpop.f32.mrb[0].mxu0
        %v2458 = vadd.f32 0.0, %v2457
        %v2459 = vpop.f32.mrb[0].mxu0
        %v2460 = vadd.f32 0.0, %v2459
        %v2461 = vpop.f32.mrb[0].mxu0
        %v2462 = vadd.f32 0.0, %v2461
        %2463 = vmatprep.mubr.bf16.mxu0 %v1452
        %2464 = vmatmul.mubr.bf16.gmra.mrb[0].mxu0 %v1451
        %v2465 = vpop.f32.mrb[0].mxu0
        %v2466 = vadd.f32 0.0, %v2465
        %v2467 = vpop.f32.mrb[0].mxu0
        %v2468 = vadd.f32 0.0, %v2467
        %v2469 = vpop.f32.mrb[0].mxu0
        %v2470 = vadd.f32 0.0, %v2469
        %v2471 = vpop.f32.mrb[0].mxu0
        %v2472 = vadd.f32 0.0, %v2471
        %2473 = vmatprep.mubr.bf16.mxu0 %v1456
        %2474 = vmatmul.mubr.bf16.gmra.mrb[0].mxu0 %v1455
        %v2475 = vpop.f32.mrb[0].mxu0
        %v2476 = vadd.f32 0.0, %v2475
        %v2477 = vpop.f32.mrb[0].mxu0
        %v2478 = vadd.f32 0.0, %v2477
        %v2479 = vpop.f32.mrb[0].mxu0
        %v2480 = vadd.f32 0.0, %v2479
        %v2481 = vpop.f32.mrb[0].mxu0
        %v2482 = vadd.f32 0.0, %v2481
        %2483 = vmatprep.mubr.bf16.mxu0 %v1460
        %2484 = vmatmul.mubr.bf16.gmra.mrb[0].mxu0 %v1459
        %v2485 = vpop.f32.mrb[0].mxu0
        %v2486 = vadd.f32 0.0, %v2485
        %v2487 = vpop.f32.mrb[0].mxu0
        %v2488 = vadd.f32 0.0, %v2487
        %v2489 = vpop.f32.mrb[0].mxu0
        %v2490 = vadd.f32 0.0, %v2489
        %v2491 = vpop.f32.mrb[0].mxu0
        %v2492 = vadd.f32 0.0, %v2491
        %2493 = vmatprep.mubr.bf16.mxu0 %v1464
        %2494 = vmatmul.mubr.bf16.gmra.mrb[0].mxu0 %v1463
        %v2495 = vpop.f32.mrb[0].mxu0
        %v2496 = vadd.f32 0.0, %v2495
        %v2497 = vpop.f32.mrb[0].mxu0
        %v2498 = vadd.f32 0.0, %v2497
        %v2499 = vpop.f32.mrb[0].mxu0
        %v2500 = vadd.f32 0.0, %v2499
        %v2501 = vpop.f32.mrb[0].mxu0
        %v2502 = vadd.f32 0.0, %v2501
        %2503 = vmatprep.mubr.bf16.mxu0 %v1468
        %2504 = vmatmul.mubr.bf16.gmra.mrb[0].mxu0 %v1467
        %v2505 = vpop.f32.mrb[0].mxu0
        %v2506 = vadd.f32 0.0, %v2505
        %v2507 = vpop.f32.mrb[0].mxu0
        %v2508 = vadd.f32 0.0, %v2507
        %v2509 = vpop.f32.mrb[0].mxu0
        %v2510 = vadd.f32 0.0, %v2509
        %v2511 = vpop.f32.mrb[0].mxu0
        %v2512 = vadd.f32 0.0, %v2511
        %2513 = vmatprep.mubr.bf16.mxu0 %v1472
        %2514 = vmatmul.mubr.bf16.gmra.mrb[0].mxu0 %v1471
        %v2515 = vpop.f32.mrb[0].mxu0
        %v2516 = vadd.f32 0.0, %v2515
        %v2517 = vpop.f32.mrb[0].mxu0
        %v2518 = vadd.f32 0.0, %v2517
        %v2519 = vpop.f32.mrb[0].mxu0
        %v2520 = vadd.f32 0.0, %v2519
        %v2521 = vpop.f32.mrb[0].mxu0
        %v2522 = vadd.f32 0.0, %v2521
        %2523 = vmatprep.mubr.bf16.mxu0 %v1476
        %2524 = vmatmul.mubr.bf16.gmra.mrb[0].mxu0 %v1475
        %v2525 = vpop.f32.mrb[0].mxu0
        %v2526 = vadd.f32 0.0, %v2525
        %v2527 = vpop.f32.mrb[0].mxu0
        %v2528 = vadd.f32 0.0, %v2527
        %v2529 = vpop.f32.mrb[0].mxu0
        %v2530 = vadd.f32 0.0, %v2529
        %v2531 = vpop.f32.mrb[0].mxu0
        %v2532 = vadd.f32 0.0, %v2531
        %2533 = vmatprep.mubr.bf16.mxu0 %v1480
        %2534 = vmatmul.mubr.bf16.gmra.mrb[0].mxu0 %v1479
        %v2535 = vpop.f32.mrb[0].mxu0
        %v2536 = vadd.f32 0.0, %v2535
        %v2537 = vpop.f32.mrb[0].mxu0
        %v2538 = vadd.f32 0.0, %v2537
        %v2539 = vpop.f32.mrb[0].mxu0
        %v2540 = vadd.f32 0.0, %v2539
        %v2541 = vpop.f32.mrb[0].mxu0
        %v2542 = vadd.f32 0.0, %v2541
        %2543 = vmatprep.mubr.bf16.mxu0 %v1484
        %2544 = vmatmul.mubr.bf16.gmra.mrb[0].mxu0 %v1483
        %v2545 = vpop.f32.mrb[0].mxu0
        %v2546 = vadd.f32 0.0, %v2545
        %v2547 = vpop.f32.mrb[0].mxu0
        %v2548 = vadd.f32 0.0, %v2547
        %v2549 = vpop.f32.mrb[0].mxu0
        %v2550 = vadd.f32 0.0, %v2549
        %v2551 = vpop.f32.mrb[0].mxu0
        %v2552 = vadd.f32 0.0, %v2551
        %2553 = vmatprep.mubr.bf16.mxu0 %v1488
        %2554 = vmatmul.mubr.bf16.gmra.mrb[0].mxu0 %v1487
        %v2555 = vpop.f32.mrb[0].mxu0
        %v2556 = vadd.f32 0.0, %v2555
        %v2557 = vpop.f32.mrb[0].mxu0
        %v2558 = vadd.f32 0.0, %v2557
        %v2559 = vpop.f32.mrb[0].mxu0
        %v2560 = vadd.f32 0.0, %v2559
        %v2561 = vpop.f32.mrb[0].mxu0
        %v2562 = vadd.f32 0.0, %v2561
        %2563 = vmatprep.mubr.bf16.mxu0 %v1492
        %2564 = vmatmul.mubr.bf16.gmra.mrb[0].mxu0 %v1491
        %v2565 = vpop.f32.mrb[0].mxu0
        %v2566 = vadd.f32 0.0, %v2565
        %v2567 = vpop.f32.mrb[0].mxu0
        %v2568 = vadd.f32 0.0, %v2567
        %v2569 = vpop.f32.mrb[0].mxu0
        %v2570 = vadd.f32 0.0, %v2569
        %v2571 = vpop.f32.mrb[0].mxu0
        %v2572 = vadd.f32 0.0, %v2571
        %2573 = vmatprep.mubr.bf16.mxu0 %v1496
        %2574 = vmatmul.mubr.bf16.gmra.mrb[0].mxu0 %v1495
        %v2575 = vpop.f32.mrb[0].mxu0
        %v2576 = vadd.f32 0.0, %v2575
        %v2577 = vpop.f32.mrb[0].mxu0
        %v2578 = vadd.f32 0.0, %v2577
        %v2579 = vpop.f32.mrb[0].mxu0
        %v2580 = vadd.f32 0.0, %v2579
        %v2581 = vpop.f32.mrb[0].mxu0
        %v2582 = vadd.f32 0.0, %v2581
        %2583 = vmatprep.mubr.bf16.mxu0 %v1500
        %2584 = vmatmul.mubr.bf16.gmra.mrb[0].mxu0 %v1499
        %v2585 = vpop.f32.mrb[0].mxu0
        %v2586 = vadd.f32 0.0, %v2585
        %v2587 = vpop.f32.mrb[0].mxu0
        %v2588 = vadd.f32 0.0, %v2587
        %v2589 = vpop.f32.mrb[0].mxu0
        %v2590 = vadd.f32 0.0, %v2589
        %v2591 = vpop.f32.mrb[0].mxu0
        %v2592 = vadd.f32 0.0, %v2591
        %2593 = vmatprep.mubr.bf16.mxu0 %v1504
        %2594 = vmatmul.mubr.bf16.gmra.mrb[0].mxu0 %v1503
        %v2595 = vpop.f32.mrb[0].mxu0
        %v2596 = vadd.f32 0.0, %v2595
        %v2597 = vpop.f32.mrb[0].mxu0
        %v2598 = vadd.f32 0.0, %v2597
        %v2599 = vpop.f32.mrb[0].mxu0
        %v2600 = vadd.f32 0.0, %v2599
        %v2601 = vpop.f32.mrb[0].mxu0
        %v2602 = vadd.f32 0.0, %v2601
        %2603 = vmatprep.mubr.bf16.mxu0 %v1508
        %2604 = vmatmul.mubr.bf16.gmra.mrb[0].mxu0 %v1507
        %v2605 = vpop.f32.mrb[0].mxu0
        %v2606 = vadd.f32 0.0, %v2605
        %v2607 = vpop.f32.mrb[0].mxu0
        %v2608 = vadd.f32 0.0, %v2607
        %v2609 = vpop.f32.mrb[0].mxu0
        %v2610 = vadd.f32 0.0, %v2609
        %v2611 = vpop.f32.mrb[0].mxu0
        %v2612 = vadd.f32 0.0, %v2611
        %2613 = vmatprep.mubr.bf16.mxu0 %v1512
        %2614 = vmatmul.mubr.bf16.gmra.mrb[0].mxu0 %v1511
        %v2615 = vpop.f32.mrb[0].mxu0
        %v2616 = vadd.f32 0.0, %v2615
        %v2617 = vpop.f32.mrb[0].mxu0
        %v2618 = vadd.f32 0.0, %v2617
        %v2619 = vpop.f32.mrb[0].mxu0
        %v2620 = vadd.f32 0.0, %v2619
        %v2621 = vpop.f32.mrb[0].mxu0
        %v2622 = vadd.f32 0.0, %v2621
        %2623 = vmatprep.mubr.bf16.mxu0 %v1516
        %2624 = vmatmul.mubr.bf16.gmra.mrb[0].mxu0 %v1515
        %v2625 = vpop.f32.mrb[0].mxu0
        %v2626 = vadd.f32 0.0, %v2625
        %v2627 = vpop.f32.mrb[0].mxu0
        %v2628 = vadd.f32 0.0, %v2627
        %v2629 = vpop.f32.mrb[0].mxu0
        %v2630 = vadd.f32 0.0, %v2629
        %v2631 = vpop.f32.mrb[0].mxu0
        %v2632 = vadd.f32 0.0, %v2631
        %2633 = vmatprep.mubr.bf16.mxu0 %v1520
        %2634 = vmatmul.mubr.bf16.gmra.mrb[0].mxu0 %v1519
        %v2635 = vpop.f32.mrb[0].mxu0
        %v2636 = vadd.f32 0.0, %v2635
        %v2637 = vpop.f32.mrb[0].mxu0
        %v2638 = vadd.f32 0.0, %v2637
        %v2639 = vpop.f32.mrb[0].mxu0
        %v2640 = vadd.f32 0.0, %v2639
        %v2641 = vpop.f32.mrb[0].mxu0
        %v2642 = vadd.f32 0.0, %v2641
        %2643 = vdwg.mxu0
        %2644 = vmatprep.subr.bf16.mxu0 %v2100
        %2645 = vmatpush1.bf16.msra.mxu0 %v2099
        %2646 = vmatprep.subr.bf16.mxu0 %v2104
        %2647 = vmatpush1.bf16.msra.mxu0 %v2103
        %2648 = vmatprep.subr.bf16.mxu0 %v2108
        %2649 = vmatpush1.bf16.msra.mxu0 %v2107
        %2650 = vmatprep.subr.bf16.mxu0 %v2112
        %2651 = vmatpush1.bf16.msra.mxu0 %v2111
        %2652 = vmatprep.subr.bf16.mxu0 %v2116
        %2653 = vmatpush1.bf16.msra.mxu0 %v2115
        %2654 = vmatprep.subr.bf16.mxu0 %v2120
        %2655 = vmatpush1.bf16.msra.mxu0 %v2119
        %2656 = vmatprep.subr.bf16.mxu0 %v2124
        %2657 = vmatpush1.bf16.msra.mxu0 %v2123
        %2658 = vmatprep.subr.bf16.mxu0 %v2128
        %2659 = vmatpush1.bf16.msra.mxu0 %v2127
        %2660 = vmatprep.subr.bf16.mxu0 %v2132
        %2661 = vmatpush1.bf16.msra.mxu0 %v2131
        %2662 = vmatprep.subr.bf16.mxu0 %v2136
        %2663 = vmatpush1.bf16.msra.mxu0 %v2135
        %2664 = vmatprep.subr.bf16.mxu0 %v2140
        %2665 = vmatpush1.bf16.msra.mxu0 %v2139
        %2666 = vmatprep.subr.bf16.mxu0 %v2144
        %2667 = vmatpush1.bf16.msra.mxu0 %v2143
        %2668 = vmatprep.subr.bf16.mxu0 %v2148
        %2669 = vmatpush1.bf16.msra.mxu0 %v2147
        %2670 = vmatprep.subr.bf16.mxu0 %v2152
        %2671 = vmatpush1.bf16.msra.mxu0 %v2151
        %2672 = vmatprep.subr.bf16.mxu0 %v2156
        %2673 = vmatpush1.bf16.msra.mxu0 %v2155
        %2674 = vmatprep.subr.bf16.mxu0 %v2160
        %2675 = vmatpush1.bf16.msra.mxu0 %v2159
        %2676 = vmatprep.mubr.bf16.mxu0 %v1398
        %2677 = vmatmul.mubr.bf16.gmra.mrb[0].mxu0 %v1397
        %v2678 = vpop.f32.mrb[0].mxu0
        %v2679 = vadd.f32 %v2326, %v2678
        %v2680 = vpop.f32.mrb[0].mxu0
        %v2681 = vadd.f32 %v2328, %v2680
        %v2682 = vpop.f32.mrb[0].mxu0
        %v2683 = vadd.f32 %v2330, %v2682
        %v2684 = vpop.f32.mrb[0].mxu0
        %v2685 = vadd.f32 %v2332, %v2684
        %2686 = vmatprep.mubr.bf16.mxu0 %v1402
        %2687 = vmatmul.mubr.bf16.gmra.mrb[0].mxu0 %v1401
        %v2688 = vpop.f32.mrb[0].mxu0
        %v2689 = vadd.f32 %v2336, %v2688
        %v2690 = vpop.f32.mrb[0].mxu0
        %v2691 = vadd.f32 %v2338, %v2690
        %v2692 = vpop.f32.mrb[0].mxu0
        %v2693 = vadd.f32 %v2340, %v2692
        %v2694 = vpop.f32.mrb[0].mxu0
        %v2695 = vadd.f32 %v2342, %v2694
        %2696 = vmatprep.mubr.bf16.mxu0 %v1406
        %2697 = vmatmul.mubr.bf16.gmra.mrb[0].mxu0 %v1405
        %v2698 = vpop.f32.mrb[0].mxu0
        %v2699 = vadd.f32 %v2346, %v2698
        %v2700 = vpop.f32.mrb[0].mxu0
        %v2701 = vadd.f32 %v2348, %v2700
        %v2702 = vpop.f32.mrb[0].mxu0
        %v2703 = vadd.f32 %v2350, %v2702
        %v2704 = vpop.f32.mrb[0].mxu0
        %v2705 = vadd.f32 %v2352, %v2704
        %2706 = vmatprep.mubr.bf16.mxu0 %v1410
        %2707 = vmatmul.mubr.bf16.gmra.mrb[0].mxu0 %v1409
        %v2708 = vpop.f32.mrb[0].mxu0
        %v2709 = vadd.f32 %v2356, %v2708
        %v2710 = vpop.f32.mrb[0].mxu0
        %v2711 = vadd.f32 %v2358, %v2710
        %v2712 = vpop.f32.mrb[0].mxu0
        %v2713 = vadd.f32 %v2360, %v2712
        %v2714 = vpop.f32.mrb[0].mxu0
        %v2715 = vadd.f32 %v2362, %v2714
        %2716 = vmatprep.mubr.bf16.mxu0 %v1414
        %2717 = vmatmul.mubr.bf16.gmra.mrb[0].mxu0 %v1413
        %v2718 = vpop.f32.mrb[0].mxu0
        %v2719 = vadd.f32 %v2366, %v2718
        %v2720 = vpop.f32.mrb[0].mxu0
        %v2721 = vadd.f32 %v2368, %v2720
        %v2722 = vpop.f32.mrb[0].mxu0
        %v2723 = vadd.f32 %v2370, %v2722
        %v2724 = vpop.f32.mrb[0].mxu0
        %v2725 = vadd.f32 %v2372, %v2724
        %2726 = vmatprep.mubr.bf16.mxu0 %v1418
        %2727 = vmatmul.mubr.bf16.gmra.mrb[0].mxu0 %v1417
        %v2728 = vpop.f32.mrb[0].mxu0
        %v2729 = vadd.f32 %v2376, %v2728
        %v2730 = vpop.f32.mrb[0].mxu0
        %v2731 = vadd.f32 %v2378, %v2730
        %v2732 = vpop.f32.mrb[0].mxu0
        %v2733 = vadd.f32 %v2380, %v2732
        %v2734 = vpop.f32.mrb[0].mxu0
        %v2735 = vadd.f32 %v2382, %v2734
        %2736 = vmatprep.mubr.bf16.mxu0 %v1422
        %2737 = vmatmul.mubr.bf16.gmra.mrb[0].mxu0 %v1421
        %v2738 = vpop.f32.mrb[0].mxu0
        %v2739 = vadd.f32 %v2386, %v2738
        %v2740 = vpop.f32.mrb[0].mxu0
        %v2741 = vadd.f32 %v2388, %v2740
        %v2742 = vpop.f32.mrb[0].mxu0
        %v2743 = vadd.f32 %v2390, %v2742
        %v2744 = vpop.f32.mrb[0].mxu0
        %v2745 = vadd.f32 %v2392, %v2744
        %2746 = vmatprep.mubr.bf16.mxu0 %v1426
        %2747 = vmatmul.mubr.bf16.gmra.mrb[0].mxu0 %v1425
        %v2748 = vpop.f32.mrb[0].mxu0
        %v2749 = vadd.f32 %v2396, %v2748
        %v2750 = vpop.f32.mrb[0].mxu0
        %v2751 = vadd.f32 %v2398, %v2750
        %v2752 = vpop.f32.mrb[0].mxu0
        %v2753 = vadd.f32 %v2400, %v2752
        %v2754 = vpop.f32.mrb[0].mxu0
        %v2755 = vadd.f32 %v2402, %v2754
        %2756 = vmatprep.mubr.bf16.mxu0 %v1430
        %2757 = vmatmul.mubr.bf16.gmra.mrb[0].mxu0 %v1429
        %v2758 = vpop.f32.mrb[0].mxu0
        %v2759 = vadd.f32 %v2406, %v2758
        %v2760 = vpop.f32.mrb[0].mxu0
        %v2761 = vadd.f32 %v2408, %v2760
        %v2762 = vpop.f32.mrb[0].mxu0
        %v2763 = vadd.f32 %v2410, %v2762
        %v2764 = vpop.f32.mrb[0].mxu0
        %v2765 = vadd.f32 %v2412, %v2764
        %2766 = vmatprep.mubr.bf16.mxu0 %v1434
        %2767 = vmatmul.mubr.bf16.gmra.mrb[0].mxu0 %v1433
        %v2768 = vpop.f32.mrb[0].mxu0
        %v2769 = vadd.f32 %v2416, %v2768
        %v2770 = vpop.f32.mrb[0].mxu0
        %v2771 = vadd.f32 %v2418, %v2770
        %v2772 = vpop.f32.mrb[0].mxu0
        %v2773 = vadd.f32 %v2420, %v2772
        %v2774 = vpop.f32.mrb[0].mxu0
        %v2775 = vadd.f32 %v2422, %v2774
        %2776 = vmatprep.mubr.bf16.mxu0 %v1438
        %2777 = vmatmul.mubr.bf16.gmra.mrb[0].mxu0 %v1437
        %v2778 = vpop.f32.mrb[0].mxu0
        %v2779 = vadd.f32 %v2426, %v2778
        %v2780 = vpop.f32.mrb[0].mxu0
        %v2781 = vadd.f32 %v2428, %v2780
        %v2782 = vpop.f32.mrb[0].mxu0
        %v2783 = vadd.f32 %v2430, %v2782
        %v2784 = vpop.f32.mrb[0].mxu0
        %v2785 = vadd.f32 %v2432, %v2784
        %2786 = vmatprep.mubr.bf16.mxu0 %v1442
        %2787 = vmatmul.mubr.bf16.gmra.mrb[0].mxu0 %v1441
        %v2788 = vpop.f32.mrb[0].mxu0
        %v2789 = vadd.f32 %v2436, %v2788
        %v2790 = vpop.f32.mrb[0].mxu0
        %v2791 = vadd.f32 %v2438, %v2790
        %v2792 = vpop.f32.mrb[0].mxu0
        %v2793 = vadd.f32 %v2440, %v2792
        %v2794 = vpop.f32.mrb[0].mxu0
        %v2795 = vadd.f32 %v2442, %v2794
        %2796 = vmatprep.mubr.bf16.mxu0 %v1446
        %2797 = vmatmul.mubr.bf16.gmra.mrb[0].mxu0 %v1445
        %v2798 = vpop.f32.mrb[0].mxu0
        %v2799 = vadd.f32 %v2446, %v2798
        %v2800 = vpop.f32.mrb[0].mxu0
        %v2801 = vadd.f32 %v2448, %v2800
        %v2802 = vpop.f32.mrb[0].mxu0
        %v2803 = vadd.f32 %v2450, %v2802
        %v2804 = vpop.f32.mrb[0].mxu0
        %v2805 = vadd.f32 %v2452, %v2804
        %2806 = vmatprep.mubr.bf16.mxu0 %v1450
        %2807 = vmatmul.mubr.bf16.gmra.mrb[0].mxu0 %v1449
        %v2808 = vpop.f32.mrb[0].mxu0
        %v2809 = vadd.f32 %v2456, %v2808
        %v2810 = vpop.f32.mrb[0].mxu0
        %v2811 = vadd.f32 %v2458, %v2810
        %v2812 = vpop.f32.mrb[0].mxu0
        %v2813 = vadd.f32 %v2460, %v2812
        %v2814 = vpop.f32.mrb[0].mxu0
        %v2815 = vadd.f32 %v2462, %v2814
        %2816 = vmatprep.mubr.bf16.mxu0 %v1454
        %2817 = vmatmul.mubr.bf16.gmra.mrb[0].mxu0 %v1453
        %v2818 = vpop.f32.mrb[0].mxu0
        %v2819 = vadd.f32 %v2466, %v2818
        %v2820 = vpop.f32.mrb[0].mxu0
        %v2821 = vadd.f32 %v2468, %v2820
        %v2822 = vpop.f32.mrb[0].mxu0
        %v2823 = vadd.f32 %v2470, %v2822
        %v2824 = vpop.f32.mrb[0].mxu0
        %v2825 = vadd.f32 %v2472, %v2824
        %2826 = vmatprep.mubr.bf16.mxu0 %v1458
        %2827 = vmatmul.mubr.bf16.gmra.mrb[0].mxu0 %v1457
        %v2828 = vpop.f32.mrb[0].mxu0
        %v2829 = vadd.f32 %v2476, %v2828
        %v2830 = vpop.f32.mrb[0].mxu0
        %v2831 = vadd.f32 %v2478, %v2830
        %v2832 = vpop.f32.mrb[0].mxu0
        %v2833 = vadd.f32 %v2480, %v2832
        %v2834 = vpop.f32.mrb[0].mxu0
        %v2835 = vadd.f32 %v2482, %v2834
        %2836 = vmatprep.mubr.bf16.mxu0 %v1462
        %2837 = vmatmul.mubr.bf16.gmra.mrb[0].mxu0 %v1461
        %v2838 = vpop.f32.mrb[0].mxu0
        %v2839 = vadd.f32 %v2486, %v2838
        %v2840 = vpop.f32.mrb[0].mxu0
        %v2841 = vadd.f32 %v2488, %v2840
        %v2842 = vpop.f32.mrb[0].mxu0
        %v2843 = vadd.f32 %v2490, %v2842
        %v2844 = vpop.f32.mrb[0].mxu0
        %v2845 = vadd.f32 %v2492, %v2844
        %2846 = vmatprep.mubr.bf16.mxu0 %v1466
        %2847 = vmatmul.mubr.bf16.gmra.mrb[0].mxu0 %v1465
        %v2848 = vpop.f32.mrb[0].mxu0
        %v2849 = vadd.f32 %v2496, %v2848
        %v2850 = vpop.f32.mrb[0].mxu0
        %v2851 = vadd.f32 %v2498, %v2850
        %v2852 = vpop.f32.mrb[0].mxu0
        %v2853 = vadd.f32 %v2500, %v2852
        %v2854 = vpop.f32.mrb[0].mxu0
        %v2855 = vadd.f32 %v2502, %v2854
        %2856 = vmatprep.mubr.bf16.mxu0 %v1470
        %2857 = vmatmul.mubr.bf16.gmra.mrb[0].mxu0 %v1469
        %v2858 = vpop.f32.mrb[0].mxu0
        %v2859 = vadd.f32 %v2506, %v2858
        %v2860 = vpop.f32.mrb[0].mxu0
        %v2861 = vadd.f32 %v2508, %v2860
        %v2862 = vpop.f32.mrb[0].mxu0
        %v2863 = vadd.f32 %v2510, %v2862
        %v2864 = vpop.f32.mrb[0].mxu0
        %v2865 = vadd.f32 %v2512, %v2864
        %2866 = vmatprep.mubr.bf16.mxu0 %v1474
        %2867 = vmatmul.mubr.bf16.gmra.mrb[0].mxu0 %v1473
        %v2868 = vpop.f32.mrb[0].mxu0
        %v2869 = vadd.f32 %v2516, %v2868
        %v2870 = vpop.f32.mrb[0].mxu0
        %v2871 = vadd.f32 %v2518, %v2870
        %v2872 = vpop.f32.mrb[0].mxu0
        %v2873 = vadd.f32 %v2520, %v2872
        %v2874 = vpop.f32.mrb[0].mxu0
        %v2875 = vadd.f32 %v2522, %v2874
        %2876 = vmatprep.mubr.bf16.mxu0 %v1478
        %2877 = vmatmul.mubr.bf16.gmra.mrb[0].mxu0 %v1477
        %v2878 = vpop.f32.mrb[0].mxu0
        %v2879 = vadd.f32 %v2526, %v2878
        %v2880 = vpop.f32.mrb[0].mxu0
        %v2881 = vadd.f32 %v2528, %v2880
        %v2882 = vpop.f32.mrb[0].mxu0
        %v2883 = vadd.f32 %v2530, %v2882
        %v2884 = vpop.f32.mrb[0].mxu0
        %v2885 = vadd.f32 %v2532, %v2884
        %2886 = vmatprep.mubr.bf16.mxu0 %v1482
        %2887 = vmatmul.mubr.bf16.gmra.mrb[0].mxu0 %v1481
        %v2888 = vpop.f32.mrb[0].mxu0
        %v2889 = vadd.f32 %v2536, %v2888
        %v2890 = vpop.f32.mrb[0].mxu0
        %v2891 = vadd.f32 %v2538, %v2890
        %v2892 = vpop.f32.mrb[0].mxu0
        %v2893 = vadd.f32 %v2540, %v2892
        %v2894 = vpop.f32.mrb[0].mxu0
        %v2895 = vadd.f32 %v2542, %v2894
        %2896 = vmatprep.mubr.bf16.mxu0 %v1486
        %2897 = vmatmul.mubr.bf16.gmra.mrb[0].mxu0 %v1485
        %v2898 = vpop.f32.mrb[0].mxu0
        %v2899 = vadd.f32 %v2546, %v2898
        %v2900 = vpop.f32.mrb[0].mxu0
        %v2901 = vadd.f32 %v2548, %v2900
        %v2902 = vpop.f32.mrb[0].mxu0
        %v2903 = vadd.f32 %v2550, %v2902
        %v2904 = vpop.f32.mrb[0].mxu0
        %v2905 = vadd.f32 %v2552, %v2904
        %2906 = vmatprep.mubr.bf16.mxu0 %v1490
        %2907 = vmatmul.mubr.bf16.gmra.mrb[0].mxu0 %v1489
        %v2908 = vpop.f32.mrb[0].mxu0
        %v2909 = vadd.f32 %v2556, %v2908
        %v2910 = vpop.f32.mrb[0].mxu0
        %v2911 = vadd.f32 %v2558, %v2910
        %v2912 = vpop.f32.mrb[0].mxu0
        %v2913 = vadd.f32 %v2560, %v2912
        %v2914 = vpop.f32.mrb[0].mxu0
        %v2915 = vadd.f32 %v2562, %v2914
        %2916 = vmatprep.mubr.bf16.mxu0 %v1494
        %2917 = vmatmul.mubr.bf16.gmra.mrb[0].mxu0 %v1493
        %v2918 = vpop.f32.mrb[0].mxu0
        %v2919 = vadd.f32 %v2566, %v2918
        %v2920 = vpop.f32.mrb[0].mxu0
        %v2921 = vadd.f32 %v2568, %v2920
        %v2922 = vpop.f32.mrb[0].mxu0
        %v2923 = vadd.f32 %v2570, %v2922
        %v2924 = vpop.f32.mrb[0].mxu0
        %v2925 = vadd.f32 %v2572, %v2924
        %2926 = vmatprep.mubr.bf16.mxu0 %v1498
        %2927 = vmatmul.mubr.bf16.gmra.mrb[0].mxu0 %v1497
        %v2928 = vpop.f32.mrb[0].mxu0
        %v2929 = vadd.f32 %v2576, %v2928
        %v2930 = vpop.f32.mrb[0].mxu0
        %v2931 = vadd.f32 %v2578, %v2930
        %v2932 = vpop.f32.mrb[0].mxu0
        %v2933 = vadd.f32 %v2580, %v2932
        %v2934 = vpop.f32.mrb[0].mxu0
        %v2935 = vadd.f32 %v2582, %v2934
        %2936 = vmatprep.mubr.bf16.mxu0 %v1502
        %2937 = vmatmul.mubr.bf16.gmra.mrb[0].mxu0 %v1501
        %v2938 = vpop.f32.mrb[0].mxu0
        %v2939 = vadd.f32 %v2586, %v2938
        %v2940 = vpop.f32.mrb[0].mxu0
        %v2941 = vadd.f32 %v2588, %v2940
        %v2942 = vpop.f32.mrb[0].mxu0
        %v2943 = vadd.f32 %v2590, %v2942
        %v2944 = vpop.f32.mrb[0].mxu0
        %v2945 = vadd.f32 %v2592, %v2944
        %2946 = vmatprep.mubr.bf16.mxu0 %v1506
        %2947 = vmatmul.mubr.bf16.gmra.mrb[0].mxu0 %v1505
        %v2948 = vpop.f32.mrb[0].mxu0
        %v2949 = vadd.f32 %v2596, %v2948
        %v2950 = vpop.f32.mrb[0].mxu0
        %v2951 = vadd.f32 %v2598, %v2950
        %v2952 = vpop.f32.mrb[0].mxu0
        %v2953 = vadd.f32 %v2600, %v2952
        %v2954 = vpop.f32.mrb[0].mxu0
        %v2955 = vadd.f32 %v2602, %v2954
        %2956 = vmatprep.mubr.bf16.mxu0 %v1510
        %2957 = vmatmul.mubr.bf16.gmra.mrb[0].mxu0 %v1509
        %v2958 = vpop.f32.mrb[0].mxu0
        %v2959 = vadd.f32 %v2606, %v2958
        %v2960 = vpop.f32.mrb[0].mxu0
        %v2961 = vadd.f32 %v2608, %v2960
        %v2962 = vpop.f32.mrb[0].mxu0
        %v2963 = vadd.f32 %v2610, %v2962
        %v2964 = vpop.f32.mrb[0].mxu0
        %v2965 = vadd.f32 %v2612, %v2964
        %2966 = vmatprep.mubr.bf16.mxu0 %v1514
        %2967 = vmatmul.mubr.bf16.gmra.mrb[0].mxu0 %v1513
        %v2968 = vpop.f32.mrb[0].mxu0
        %v2969 = vadd.f32 %v2616, %v2968
        %v2970 = vpop.f32.mrb[0].mxu0
        %v2971 = vadd.f32 %v2618, %v2970
        %v2972 = vpop.f32.mrb[0].mxu0
        %v2973 = vadd.f32 %v2620, %v2972
        %v2974 = vpop.f32.mrb[0].mxu0
        %v2975 = vadd.f32 %v2622, %v2974
        %2976 = vmatprep.mubr.bf16.mxu0 %v1518
        %2977 = vmatmul.mubr.bf16.gmra.mrb[0].mxu0 %v1517
        %v2978 = vpop.f32.mrb[0].mxu0
        %v2979 = vadd.f32 %v2626, %v2978
        %v2980 = vpop.f32.mrb[0].mxu0
        %v2981 = vadd.f32 %v2628, %v2980
        %v2982 = vpop.f32.mrb[0].mxu0
        %v2983 = vadd.f32 %v2630, %v2982
        %v2984 = vpop.f32.mrb[0].mxu0
        %v2985 = vadd.f32 %v2632, %v2984
        %2986 = vmatprep.mubr.bf16.mxu0 %v1522
        %2987 = vmatmul.mubr.bf16.gmra.mrb[0].mxu0 %v1521
        %v2988 = vpop.f32.mrb[0].mxu0
        %v2989 = vadd.f32 %v2636, %v2988
        %v2990 = vpop.f32.mrb[0].mxu0
        %v2991 = vadd.f32 %v2638, %v2990
        %v2992 = vpop.f32.mrb[0].mxu0
        %v2993 = vadd.f32 %v2640, %v2992
        %v2994 = vpop.f32.mrb[0].mxu0
        %v2995 = vadd.f32 %v2642, %v2994
        %2996 = vdwg.mxu0
        %2997 = vmatprep.subr.bf16.mxu0 %v2038
        %2998 = vmatpush1.bf16.msra.mxu0 %v2037
        %2999 = vmatprep.subr.bf16.mxu0 %v2042
        %3000 = vmatpush1.bf16.msra.mxu0 %v2041
        %3001 = vmatprep.subr.bf16.mxu0 %v2046
        %3002 = vmatpush1.bf16.msra.mxu0 %v2045
        %3003 = vmatprep.subr.bf16.mxu0 %v2050
        %3004 = vmatpush1.bf16.msra.mxu0 %v2049
        %3005 = vmatprep.subr.bf16.mxu0 %v2054
        %3006 = vmatpush1.bf16.msra.mxu0 %v2053
        %3007 = vmatprep.subr.bf16.mxu0 %v2058
        %3008 = vmatpush1.bf16.msra.mxu0 %v2057
        %3009 = vmatprep.subr.bf16.mxu0 %v2062
        %3010 = vmatpush1.bf16.msra.mxu0 %v2061
        %3011 = vmatprep.subr.bf16.mxu0 %v2066
        %3012 = vmatpush1.bf16.msra.mxu0 %v2065
        %3013 = vmatprep.subr.bf16.mxu0 %v2070
        %3014 = vmatpush1.bf16.msra.mxu0 %v2069
        %3015 = vmatprep.subr.bf16.mxu0 %v2074
        %3016 = vmatpush1.bf16.msra.mxu0 %v2073
        %3017 = vmatprep.subr.bf16.mxu0 %v2078
        %3018 = vmatpush1.bf16.msra.mxu0 %v2077
        %3019 = vmatprep.subr.bf16.mxu0 %v2082
        %3020 = vmatpush1.bf16.msra.mxu0 %v2081
        %3021 = vmatprep.subr.bf16.mxu0 %v2086
        %3022 = vmatpush1.bf16.msra.mxu0 %v2085
        %3023 = vmatprep.subr.bf16.mxu0 %v2090
        %3024 = vmatpush1.bf16.msra.mxu0 %v2089
        %3025 = vmatprep.subr.bf16.mxu0 %v2094
        %3026 = vmatpush1.bf16.msra.mxu0 %v2093
        %3027 = vmatprep.subr.bf16.mxu0 %v2098
        %3028 = vmatpush1.bf16.msra.mxu0 %v2097
        %3029 = vmatprep.mubr.bf16.mxu0 %v1396
        %3030 = vmatmul.mubr.bf16.gmra.mrb[0].mxu0 %v1395
        %v3031 = vpop.f32.mrb[0].mxu0
        %v3032 = vadd.f32 0.0, %v3031
        %v3033 = vpop.f32.mrb[0].mxu0
        %v3034 = vadd.f32 0.0, %v3033
        %v3035 = vpop.f32.mrb[0].mxu0
        %v3036 = vadd.f32 0.0, %v3035
        %v3037 = vpop.f32.mrb[0].mxu0
        %v3038 = vadd.f32 0.0, %v3037
        %3039 = vmatprep.mubr.bf16.mxu0 %v1400
        %3040 = vmatmul.mubr.bf16.gmra.mrb[0].mxu0 %v1399
        %v3041 = vpop.f32.mrb[0].mxu0
        %v3042 = vadd.f32 0.0, %v3041
        %v3043 = vpop.f32.mrb[0].mxu0
        %v3044 = vadd.f32 0.0, %v3043
        %v3045 = vpop.f32.mrb[0].mxu0
        %v3046 = vadd.f32 0.0, %v3045
        %v3047 = vpop.f32.mrb[0].mxu0
        %v3048 = vadd.f32 0.0, %v3047
        %3049 = vmatprep.mubr.bf16.mxu0 %v1404
        %3050 = vmatmul.mubr.bf16.gmra.mrb[0].mxu0 %v1403
        %v3051 = vpop.f32.mrb[0].mxu0
        %v3052 = vadd.f32 0.0, %v3051
        %v3053 = vpop.f32.mrb[0].mxu0
        %v3054 = vadd.f32 0.0, %v3053
        %v3055 = vpop.f32.mrb[0].mxu0
        %v3056 = vadd.f32 0.0, %v3055
        %v3057 = vpop.f32.mrb[0].mxu0
        %v3058 = vadd.f32 0.0, %v3057
        %3059 = vmatprep.mubr.bf16.mxu0 %v1408
        %3060 = vmatmul.mubr.bf16.gmra.mrb[0].mxu0 %v1407
        %v3061 = vpop.f32.mrb[0].mxu0
        %v3062 = vadd.f32 0.0, %v3061
        %v3063 = vpop.f32.mrb[0].mxu0
        %v3064 = vadd.f32 0.0, %v3063
        %v3065 = vpop.f32.mrb[0].mxu0
        %v3066 = vadd.f32 0.0, %v3065
        %v3067 = vpop.f32.mrb[0].mxu0
        %v3068 = vadd.f32 0.0, %v3067
        %3069 = vmatprep.mubr.bf16.mxu0 %v1412
        %3070 = vmatmul.mubr.bf16.gmra.mrb[0].mxu0 %v1411
        %v3071 = vpop.f32.mrb[0].mxu0
        %v3072 = vadd.f32 0.0, %v3071
        %v3073 = vpop.f32.mrb[0].mxu0
        %v3074 = vadd.f32 0.0, %v3073
        %v3075 = vpop.f32.mrb[0].mxu0
        %v3076 = vadd.f32 0.0, %v3075
        %v3077 = vpop.f32.mrb[0].mxu0
        %v3078 = vadd.f32 0.0, %v3077
        %3079 = vmatprep.mubr.bf16.mxu0 %v1416
        %3080 = vmatmul.mubr.bf16.gmra.mrb[0].mxu0 %v1415
        %v3081 = vpop.f32.mrb[0].mxu0
        %v3082 = vadd.f32 0.0, %v3081
        %v3083 = vpop.f32.mrb[0].mxu0
        %v3084 = vadd.f32 0.0, %v3083
        %v3085 = vpop.f32.mrb[0].mxu0
        %v3086 = vadd.f32 0.0, %v3085
        %v3087 = vpop.f32.mrb[0].mxu0
        %v3088 = vadd.f32 0.0, %v3087
        %3089 = vmatprep.mubr.bf16.mxu0 %v1420
        %3090 = vmatmul.mubr.bf16.gmra.mrb[0].mxu0 %v1419
        %v3091 = vpop.f32.mrb[0].mxu0
        %v3092 = vadd.f32 0.0, %v3091
        %v3093 = vpop.f32.mrb[0].mxu0
        %v3094 = vadd.f32 0.0, %v3093
        %v3095 = vpop.f32.mrb[0].mxu0
        %v3096 = vadd.f32 0.0, %v3095
        %v3097 = vpop.f32.mrb[0].mxu0
        %v3098 = vadd.f32 0.0, %v3097
        %3099 = vmatprep.mubr.bf16.mxu0 %v1424
        %3100 = vmatmul.mubr.bf16.gmra.mrb[0].mxu0 %v1423
        %v3101 = vpop.f32.mrb[0].mxu0
        %v3102 = vadd.f32 0.0, %v3101
        %v3103 = vpop.f32.mrb[0].mxu0
        %v3104 = vadd.f32 0.0, %v3103
        %v3105 = vpop.f32.mrb[0].mxu0
        %v3106 = vadd.f32 0.0, %v3105
        %v3107 = vpop.f32.mrb[0].mxu0
        %v3108 = vadd.f32 0.0, %v3107
        %3109 = vmatprep.mubr.bf16.mxu0 %v1428
        %3110 = vmatmul.mubr.bf16.gmra.mrb[0].mxu0 %v1427
        %v3111 = vpop.f32.mrb[0].mxu0
        %v3112 = vadd.f32 0.0, %v3111
        %v3113 = vpop.f32.mrb[0].mxu0
        %v3114 = vadd.f32 0.0, %v3113
        %v3115 = vpop.f32.mrb[0].mxu0
        %v3116 = vadd.f32 0.0, %v3115
        %v3117 = vpop.f32.mrb[0].mxu0
        %v3118 = vadd.f32 0.0, %v3117
        %3119 = vmatprep.mubr.bf16.mxu0 %v1432
        %3120 = vmatmul.mubr.bf16.gmra.mrb[0].mxu0 %v1431
        %v3121 = vpop.f32.mrb[0].mxu0
        %v3122 = vadd.f32 0.0, %v3121
        %v3123 = vpop.f32.mrb[0].mxu0
        %v3124 = vadd.f32 0.0, %v3123
        %v3125 = vpop.f32.mrb[0].mxu0
        %v3126 = vadd.f32 0.0, %v3125
        %v3127 = vpop.f32.mrb[0].mxu0
        %v3128 = vadd.f32 0.0, %v3127
        %3129 = vmatprep.mubr.bf16.mxu0 %v1436
        %3130 = vmatmul.mubr.bf16.gmra.mrb[0].mxu0 %v1435
        %v3131 = vpop.f32.mrb[0].mxu0
        %v3132 = vadd.f32 0.0, %v3131
        %v3133 = vpop.f32.mrb[0].mxu0
        %v3134 = vadd.f32 0.0, %v3133
        %v3135 = vpop.f32.mrb[0].mxu0
        %v3136 = vadd.f32 0.0, %v3135
        %v3137 = vpop.f32.mrb[0].mxu0
        %v3138 = vadd.f32 0.0, %v3137
        %3139 = vmatprep.mubr.bf16.mxu0 %v1440
        %3140 = vmatmul.mubr.bf16.gmra.mrb[0].mxu0 %v1439
        %v3141 = vpop.f32.mrb[0].mxu0
        %v3142 = vadd.f32 0.0, %v3141
        %v3143 = vpop.f32.mrb[0].mxu0
        %v3144 = vadd.f32 0.0, %v3143
        %v3145 = vpop.f32.mrb[0].mxu0
        %v3146 = vadd.f32 0.0, %v3145
        %v3147 = vpop.f32.mrb[0].mxu0
        %v3148 = vadd.f32 0.0, %v3147
        %3149 = vmatprep.mubr.bf16.mxu0 %v1444
        %3150 = vmatmul.mubr.bf16.gmra.mrb[0].mxu0 %v1443
        %v3151 = vpop.f32.mrb[0].mxu0
        %v3152 = vadd.f32 0.0, %v3151
        %v3153 = vpop.f32.mrb[0].mxu0
        %v3154 = vadd.f32 0.0, %v3153
        %v3155 = vpop.f32.mrb[0].mxu0
        %v3156 = vadd.f32 0.0, %v3155
        %v3157 = vpop.f32.mrb[0].mxu0
        %v3158 = vadd.f32 0.0, %v3157
        %3159 = vmatprep.mubr.bf16.mxu0 %v1448
        %3160 = vmatmul.mubr.bf16.gmra.mrb[0].mxu0 %v1447
        %v3161 = vpop.f32.mrb[0].mxu0
        %v3162 = vadd.f32 0.0, %v3161
        %v3163 = vpop.f32.mrb[0].mxu0
        %v3164 = vadd.f32 0.0, %v3163
        %v3165 = vpop.f32.mrb[0].mxu0
        %v3166 = vadd.f32 0.0, %v3165
        %v3167 = vpop.f32.mrb[0].mxu0
        %v3168 = vadd.f32 0.0, %v3167
        %3169 = vmatprep.mubr.bf16.mxu0 %v1452
        %3170 = vmatmul.mubr.bf16.gmra.mrb[0].mxu0 %v1451
        %v3171 = vpop.f32.mrb[0].mxu0
        %v3172 = vadd.f32 0.0, %v3171
        %v3173 = vpop.f32.mrb[0].mxu0
        %v3174 = vadd.f32 0.0, %v3173
        %v3175 = vpop.f32.mrb[0].mxu0
        %v3176 = vadd.f32 0.0, %v3175
        %v3177 = vpop.f32.mrb[0].mxu0
        %v3178 = vadd.f32 0.0, %v3177
        %3179 = vmatprep.mubr.bf16.mxu0 %v1456
        %3180 = vmatmul.mubr.bf16.gmra.mrb[0].mxu0 %v1455
        %v3181 = vpop.f32.mrb[0].mxu0
        %v3182 = vadd.f32 0.0, %v3181
        %v3183 = vpop.f32.mrb[0].mxu0
        %v3184 = vadd.f32 0.0, %v3183
        %v3185 = vpop.f32.mrb[0].mxu0
        %v3186 = vadd.f32 0.0, %v3185
        %v3187 = vpop.f32.mrb[0].mxu0
        %v3188 = vadd.f32 0.0, %v3187
        %3189 = vmatprep.mubr.bf16.mxu0 %v1460
        %3190 = vmatmul.mubr.bf16.gmra.mrb[0].mxu0 %v1459
        %v3191 = vpop.f32.mrb[0].mxu0
        %v3192 = vadd.f32 0.0, %v3191
        %v3193 = vpop.f32.mrb[0].mxu0
        %v3194 = vadd.f32 0.0, %v3193
        %v3195 = vpop.f32.mrb[0].mxu0
        %v3196 = vadd.f32 0.0, %v3195
        %v3197 = vpop.f32.mrb[0].mxu0
        %v3198 = vadd.f32 0.0, %v3197
        %3199 = vmatprep.mubr.bf16.mxu0 %v1464
        %3200 = vmatmul.mubr.bf16.gmra.mrb[0].mxu0 %v1463
        %v3201 = vpop.f32.mrb[0].mxu0
        %v3202 = vadd.f32 0.0, %v3201
        %v3203 = vpop.f32.mrb[0].mxu0
        %v3204 = vadd.f32 0.0, %v3203
        %v3205 = vpop.f32.mrb[0].mxu0
        %v3206 = vadd.f32 0.0, %v3205
        %v3207 = vpop.f32.mrb[0].mxu0
        %v3208 = vadd.f32 0.0, %v3207
        %3209 = vmatprep.mubr.bf16.mxu0 %v1468
        %3210 = vmatmul.mubr.bf16.gmra.mrb[0].mxu0 %v1467
        %v3211 = vpop.f32.mrb[0].mxu0
        %v3212 = vadd.f32 0.0, %v3211
        %v3213 = vpop.f32.mrb[0].mxu0
        %v3214 = vadd.f32 0.0, %v3213
        %v3215 = vpop.f32.mrb[0].mxu0
        %v3216 = vadd.f32 0.0, %v3215
        %v3217 = vpop.f32.mrb[0].mxu0
        %v3218 = vadd.f32 0.0, %v3217
        %3219 = vmatprep.mubr.bf16.mxu0 %v1472
        %3220 = vmatmul.mubr.bf16.gmra.mrb[0].mxu0 %v1471
        %v3221 = vpop.f32.mrb[0].mxu0
        %v3222 = vadd.f32 0.0, %v3221
        %v3223 = vpop.f32.mrb[0].mxu0
        %v3224 = vadd.f32 0.0, %v3223
        %v3225 = vpop.f32.mrb[0].mxu0
        %v3226 = vadd.f32 0.0, %v3225
        %v3227 = vpop.f32.mrb[0].mxu0
        %v3228 = vadd.f32 0.0, %v3227
        %3229 = vmatprep.mubr.bf16.mxu0 %v1476
        %3230 = vmatmul.mubr.bf16.gmra.mrb[0].mxu0 %v1475
        %v3231 = vpop.f32.mrb[0].mxu0
        %v3232 = vadd.f32 0.0, %v3231
        %v3233 = vpop.f32.mrb[0].mxu0
        %v3234 = vadd.f32 0.0, %v3233
        %v3235 = vpop.f32.mrb[0].mxu0
        %v3236 = vadd.f32 0.0, %v3235
        %v3237 = vpop.f32.mrb[0].mxu0
        %v3238 = vadd.f32 0.0, %v3237
        %3239 = vmatprep.mubr.bf16.mxu0 %v1480
        %3240 = vmatmul.mubr.bf16.gmra.mrb[0].mxu0 %v1479
        %v3241 = vpop.f32.mrb[0].mxu0
        %v3242 = vadd.f32 0.0, %v3241
        %v3243 = vpop.f32.mrb[0].mxu0
        %v3244 = vadd.f32 0.0, %v3243
        %v3245 = vpop.f32.mrb[0].mxu0
        %v3246 = vadd.f32 0.0, %v3245
        %v3247 = vpop.f32.mrb[0].mxu0
        %v3248 = vadd.f32 0.0, %v3247
        %3249 = vmatprep.mubr.bf16.mxu0 %v1484
        %3250 = vmatmul.mubr.bf16.gmra.mrb[0].mxu0 %v1483
        %v3251 = vpop.f32.mrb[0].mxu0
        %v3252 = vadd.f32 0.0, %v3251
        %v3253 = vpop.f32.mrb[0].mxu0
        %v3254 = vadd.f32 0.0, %v3253
        %v3255 = vpop.f32.mrb[0].mxu0
        %v3256 = vadd.f32 0.0, %v3255
        %v3257 = vpop.f32.mrb[0].mxu0
        %v3258 = vadd.f32 0.0, %v3257
        %3259 = vmatprep.mubr.bf16.mxu0 %v1488
        %3260 = vmatmul.mubr.bf16.gmra.mrb[0].mxu0 %v1487
        %v3261 = vpop.f32.mrb[0].mxu0
        %v3262 = vadd.f32 0.0, %v3261
        %v3263 = vpop.f32.mrb[0].mxu0
        %v3264 = vadd.f32 0.0, %v3263
        %v3265 = vpop.f32.mrb[0].mxu0
        %v3266 = vadd.f32 0.0, %v3265
        %v3267 = vpop.f32.mrb[0].mxu0
        %v3268 = vadd.f32 0.0, %v3267
        %3269 = vmatprep.mubr.bf16.mxu0 %v1492
        %3270 = vmatmul.mubr.bf16.gmra.mrb[0].mxu0 %v1491
        %v3271 = vpop.f32.mrb[0].mxu0
        %v3272 = vadd.f32 0.0, %v3271
        %v3273 = vpop.f32.mrb[0].mxu0
        %v3274 = vadd.f32 0.0, %v3273
        %v3275 = vpop.f32.mrb[0].mxu0
        %v3276 = vadd.f32 0.0, %v3275
        %v3277 = vpop.f32.mrb[0].mxu0
        %v3278 = vadd.f32 0.0, %v3277
        %3279 = vmatprep.mubr.bf16.mxu0 %v1496
        %3280 = vmatmul.mubr.bf16.gmra.mrb[0].mxu0 %v1495
        %v3281 = vpop.f32.mrb[0].mxu0
        %v3282 = vadd.f32 0.0, %v3281
        %v3283 = vpop.f32.mrb[0].mxu0
        %v3284 = vadd.f32 0.0, %v3283
        %v3285 = vpop.f32.mrb[0].mxu0
        %v3286 = vadd.f32 0.0, %v3285
        %v3287 = vpop.f32.mrb[0].mxu0
        %v3288 = vadd.f32 0.0, %v3287
        %3289 = vmatprep.mubr.bf16.mxu0 %v1500
        %3290 = vmatmul.mubr.bf16.gmra.mrb[0].mxu0 %v1499
        %v3291 = vpop.f32.mrb[0].mxu0
        %v3292 = vadd.f32 0.0, %v3291
        %v3293 = vpop.f32.mrb[0].mxu0
        %v3294 = vadd.f32 0.0, %v3293
        %v3295 = vpop.f32.mrb[0].mxu0
        %v3296 = vadd.f32 0.0, %v3295
        %v3297 = vpop.f32.mrb[0].mxu0
        %v3298 = vadd.f32 0.0, %v3297
        %3299 = vmatprep.mubr.bf16.mxu0 %v1504
        %3300 = vmatmul.mubr.bf16.gmra.mrb[0].mxu0 %v1503
        %v3301 = vpop.f32.mrb[0].mxu0
        %v3302 = vadd.f32 0.0, %v3301
        %v3303 = vpop.f32.mrb[0].mxu0
        %v3304 = vadd.f32 0.0, %v3303
        %v3305 = vpop.f32.mrb[0].mxu0
        %v3306 = vadd.f32 0.0, %v3305
        %v3307 = vpop.f32.mrb[0].mxu0
        %v3308 = vadd.f32 0.0, %v3307
        %3309 = vmatprep.mubr.bf16.mxu0 %v1508
        %3310 = vmatmul.mubr.bf16.gmra.mrb[0].mxu0 %v1507
        %v3311 = vpop.f32.mrb[0].mxu0
        %v3312 = vadd.f32 0.0, %v3311
        %v3313 = vpop.f32.mrb[0].mxu0
        %v3314 = vadd.f32 0.0, %v3313
        %v3315 = vpop.f32.mrb[0].mxu0
        %v3316 = vadd.f32 0.0, %v3315
        %v3317 = vpop.f32.mrb[0].mxu0
        %v3318 = vadd.f32 0.0, %v3317
        %3319 = vmatprep.mubr.bf16.mxu0 %v1512
        %3320 = vmatmul.mubr.bf16.gmra.mrb[0].mxu0 %v1511
        %v3321 = vpop.f32.mrb[0].mxu0
        %v3322 = vadd.f32 0.0, %v3321
        %v3323 = vpop.f32.mrb[0].mxu0
        %v3324 = vadd.f32 0.0, %v3323
        %v3325 = vpop.f32.mrb[0].mxu0
        %v3326 = vadd.f32 0.0, %v3325
        %v3327 = vpop.f32.mrb[0].mxu0
        %v3328 = vadd.f32 0.0, %v3327
        %3329 = vmatprep.mubr.bf16.mxu0 %v1516
        %3330 = vmatmul.mubr.bf16.gmra.mrb[0].mxu0 %v1515
        %v3331 = vpop.f32.mrb[0].mxu0
        %v3332 = vadd.f32 0.0, %v3331
        %v3333 = vpop.f32.mrb[0].mxu0
        %v3334 = vadd.f32 0.0, %v3333
        %v3335 = vpop.f32.mrb[0].mxu0
        %v3336 = vadd.f32 0.0, %v3335
        %v3337 = vpop.f32.mrb[0].mxu0
        %v3338 = vadd.f32 0.0, %v3337
        %3339 = vmatprep.mubr.bf16.mxu0 %v1520
        %3340 = vmatmul.mubr.bf16.gmra.mrb[0].mxu0 %v1519
        %v3341 = vpop.f32.mrb[0].mxu0
        %v3342 = vadd.f32 0.0, %v3341
        %v3343 = vpop.f32.mrb[0].mxu0
        %v3344 = vadd.f32 0.0, %v3343
        %v3345 = vpop.f32.mrb[0].mxu0
        %v3346 = vadd.f32 0.0, %v3345
        %v3347 = vpop.f32.mrb[0].mxu0
        %v3348 = vadd.f32 0.0, %v3347
        %3349 = vdwg.mxu0
        %3350 = vmatprep.subr.bf16.mxu0 %v2102
        %3351 = vmatpush1.bf16.msra.mxu0 %v2101
        %3352 = vmatprep.subr.bf16.mxu0 %v2106
        %3353 = vmatpush1.bf16.msra.mxu0 %v2105
        %3354 = vmatprep.subr.bf16.mxu0 %v2110
        %3355 = vmatpush1.bf16.msra.mxu0 %v2109
        %3356 = vmatprep.subr.bf16.mxu0 %v2114
        %3357 = vmatpush1.bf16.msra.mxu0 %v2113
        %3358 = vmatprep.subr.bf16.mxu0 %v2118
        %3359 = vmatpush1.bf16.msra.mxu0 %v2117
        %3360 = vmatprep.subr.bf16.mxu0 %v2122
        %3361 = vmatpush1.bf16.msra.mxu0 %v2121
        %3362 = vmatprep.subr.bf16.mxu0 %v2126
        %3363 = vmatpush1.bf16.msra.mxu0 %v2125
        %3364 = vmatprep.subr.bf16.mxu0 %v2130
        %3365 = vmatpush1.bf16.msra.mxu0 %v2129
        %3366 = vmatprep.subr.bf16.mxu0 %v2134
        %3367 = vmatpush1.bf16.msra.mxu0 %v2133
        %3368 = vmatprep.subr.bf16.mxu0 %v2138
        %3369 = vmatpush1.bf16.msra.mxu0 %v2137
        %3370 = vmatprep.subr.bf16.mxu0 %v2142
        %3371 = vmatpush1.bf16.msra.mxu0 %v2141
        %3372 = vmatprep.subr.bf16.mxu0 %v2146
        %3373 = vmatpush1.bf16.msra.mxu0 %v2145
        %3374 = vmatprep.subr.bf16.mxu0 %v2150
        %3375 = vmatpush1.bf16.msra.mxu0 %v2149
        %3376 = vmatprep.subr.bf16.mxu0 %v2154
        %3377 = vmatpush1.bf16.msra.mxu0 %v2153
        %3378 = vmatprep.subr.bf16.mxu0 %v2158
        %3379 = vmatpush1.bf16.msra.mxu0 %v2157
        %3380 = vmatprep.subr.bf16.mxu0 %v2162
        %3381 = vmatpush1.bf16.msra.mxu0 %v2161
        %3382 = vmatprep.mubr.bf16.mxu0 %v1398
        %3383 = vmatmul.mubr.bf16.gmra.mrb[0].mxu0 %v1397
        %v3384 = vpop.f32.mrb[0].mxu0
        %v3385 = vadd.f32 %v3032, %v3384
        %v3386 = vpop.f32.mrb[0].mxu0
        %v3387 = vadd.f32 %v3034, %v3386
        %v3388 = vpop.f32.mrb[0].mxu0
        %v3389 = vadd.f32 %v3036, %v3388
        %v3390 = vpop.f32.mrb[0].mxu0
        %v3391 = vadd.f32 %v3038, %v3390
        %3392 = vmatprep.mubr.bf16.mxu0 %v1402
        %3393 = vmatmul.mubr.bf16.gmra.mrb[0].mxu0 %v1401
        %v3394 = vpop.f32.mrb[0].mxu0
        %v3395 = vadd.f32 %v3042, %v3394
        %v3396 = vpop.f32.mrb[0].mxu0
        %v3397 = vadd.f32 %v3044, %v3396
        %v3398 = vpop.f32.mrb[0].mxu0
        %v3399 = vadd.f32 %v3046, %v3398
        %v3400 = vpop.f32.mrb[0].mxu0
        %v3401 = vadd.f32 %v3048, %v3400
        %3402 = vmatprep.mubr.bf16.mxu0 %v1406
        %3403 = vmatmul.mubr.bf16.gmra.mrb[0].mxu0 %v1405
        %v3404 = vpop.f32.mrb[0].mxu0
        %v3405 = vadd.f32 %v3052, %v3404
        %v3406 = vpop.f32.mrb[0].mxu0
        %v3407 = vadd.f32 %v3054, %v3406
        %v3408 = vpop.f32.mrb[0].mxu0
        %v3409 = vadd.f32 %v3056, %v3408
        %v3410 = vpop.f32.mrb[0].mxu0
        %v3411 = vadd.f32 %v3058, %v3410
        %3412 = vmatprep.mubr.bf16.mxu0 %v1410
        %3413 = vmatmul.mubr.bf16.gmra.mrb[0].mxu0 %v1409
        %v3414 = vpop.f32.mrb[0].mxu0
        %v3415 = vadd.f32 %v3062, %v3414
        %v3416 = vpop.f32.mrb[0].mxu0
        %v3417 = vadd.f32 %v3064, %v3416
        %v3418 = vpop.f32.mrb[0].mxu0
        %v3419 = vadd.f32 %v3066, %v3418
        %v3420 = vpop.f32.mrb[0].mxu0
        %v3421 = vadd.f32 %v3068, %v3420
        %3422 = vmatprep.mubr.bf16.mxu0 %v1414
        %3423 = vmatmul.mubr.bf16.gmra.mrb[0].mxu0 %v1413
        %v3424 = vpop.f32.mrb[0].mxu0
        %v3425 = vadd.f32 %v3072, %v3424
        %v3426 = vpop.f32.mrb[0].mxu0
        %v3427 = vadd.f32 %v3074, %v3426
        %v3428 = vpop.f32.mrb[0].mxu0
        %v3429 = vadd.f32 %v3076, %v3428
        %v3430 = vpop.f32.mrb[0].mxu0
        %v3431 = vadd.f32 %v3078, %v3430
        %3432 = vmatprep.mubr.bf16.mxu0 %v1418
        %3433 = vmatmul.mubr.bf16.gmra.mrb[0].mxu0 %v1417
        %v3434 = vpop.f32.mrb[0].mxu0
        %v3435 = vadd.f32 %v3082, %v3434
        %v3436 = vpop.f32.mrb[0].mxu0
        %v3437 = vadd.f32 %v3084, %v3436
        %v3438 = vpop.f32.mrb[0].mxu0
        %v3439 = vadd.f32 %v3086, %v3438
        %v3440 = vpop.f32.mrb[0].mxu0
        %v3441 = vadd.f32 %v3088, %v3440
        %3442 = vmatprep.mubr.bf16.mxu0 %v1422
        %3443 = vmatmul.mubr.bf16.gmra.mrb[0].mxu0 %v1421
        %v3444 = vpop.f32.mrb[0].mxu0
        %v3445 = vadd.f32 %v3092, %v3444
        %v3446 = vpop.f32.mrb[0].mxu0
        %v3447 = vadd.f32 %v3094, %v3446
        %v3448 = vpop.f32.mrb[0].mxu0
        %v3449 = vadd.f32 %v3096, %v3448
        %v3450 = vpop.f32.mrb[0].mxu0
        %v3451 = vadd.f32 %v3098, %v3450
        %3452 = vmatprep.mubr.bf16.mxu0 %v1426
        %3453 = vmatmul.mubr.bf16.gmra.mrb[0].mxu0 %v1425
        %v3454 = vpop.f32.mrb[0].mxu0
        %v3455 = vadd.f32 %v3102, %v3454
        %v3456 = vpop.f32.mrb[0].mxu0
        %v3457 = vadd.f32 %v3104, %v3456
        %v3458 = vpop.f32.mrb[0].mxu0
        %v3459 = vadd.f32 %v3106, %v3458
        %v3460 = vpop.f32.mrb[0].mxu0
        %v3461 = vadd.f32 %v3108, %v3460
        %3462 = vmatprep.mubr.bf16.mxu0 %v1430
        %3463 = vmatmul.mubr.bf16.gmra.mrb[0].mxu0 %v1429
        %v3464 = vpop.f32.mrb[0].mxu0
        %v3465 = vadd.f32 %v3112, %v3464
        %v3466 = vpop.f32.mrb[0].mxu0
        %v3467 = vadd.f32 %v3114, %v3466
        %v3468 = vpop.f32.mrb[0].mxu0
        %v3469 = vadd.f32 %v3116, %v3468
        %v3470 = vpop.f32.mrb[0].mxu0
        %v3471 = vadd.f32 %v3118, %v3470
        %3472 = vmatprep.mubr.bf16.mxu0 %v1434
        %3473 = vmatmul.mubr.bf16.gmra.mrb[0].mxu0 %v1433
        %v3474 = vpop.f32.mrb[0].mxu0
        %v3475 = vadd.f32 %v3122, %v3474
        %v3476 = vpop.f32.mrb[0].mxu0
        %v3477 = vadd.f32 %v3124, %v3476
        %v3478 = vpop.f32.mrb[0].mxu0
        %v3479 = vadd.f32 %v3126, %v3478
        %v3480 = vpop.f32.mrb[0].mxu0
        %v3481 = vadd.f32 %v3128, %v3480
        %3482 = vmatprep.mubr.bf16.mxu0 %v1438
        %3483 = vmatmul.mubr.bf16.gmra.mrb[0].mxu0 %v1437
        %v3484 = vpop.f32.mrb[0].mxu0
        %v3485 = vadd.f32 %v3132, %v3484
        %v3486 = vpop.f32.mrb[0].mxu0
        %v3487 = vadd.f32 %v3134, %v3486
        %v3488 = vpop.f32.mrb[0].mxu0
        %v3489 = vadd.f32 %v3136, %v3488
        %v3490 = vpop.f32.mrb[0].mxu0
        %v3491 = vadd.f32 %v3138, %v3490
        %3492 = vmatprep.mubr.bf16.mxu0 %v1442
        %3493 = vmatmul.mubr.bf16.gmra.mrb[0].mxu0 %v1441
        %v3494 = vpop.f32.mrb[0].mxu0
        %v3495 = vadd.f32 %v3142, %v3494
        %v3496 = vpop.f32.mrb[0].mxu0
        %v3497 = vadd.f32 %v3144, %v3496
        %v3498 = vpop.f32.mrb[0].mxu0
        %v3499 = vadd.f32 %v3146, %v3498
        %v3500 = vpop.f32.mrb[0].mxu0
        %v3501 = vadd.f32 %v3148, %v3500
        %3502 = vmatprep.mubr.bf16.mxu0 %v1446
        %3503 = vmatmul.mubr.bf16.gmra.mrb[0].mxu0 %v1445
        %v3504 = vpop.f32.mrb[0].mxu0
        %v3505 = vadd.f32 %v3152, %v3504
        %v3506 = vpop.f32.mrb[0].mxu0
        %v3507 = vadd.f32 %v3154, %v3506
        %v3508 = vpop.f32.mrb[0].mxu0
        %v3509 = vadd.f32 %v3156, %v3508
        %v3510 = vpop.f32.mrb[0].mxu0
        %v3511 = vadd.f32 %v3158, %v3510
        %3512 = vmatprep.mubr.bf16.mxu0 %v1450
        %3513 = vmatmul.mubr.bf16.gmra.mrb[0].mxu0 %v1449
        %v3514 = vpop.f32.mrb[0].mxu0
        %v3515 = vadd.f32 %v3162, %v3514
        %v3516 = vpop.f32.mrb[0].mxu0
        %v3517 = vadd.f32 %v3164, %v3516
        %v3518 = vpop.f32.mrb[0].mxu0
        %v3519 = vadd.f32 %v3166, %v3518
        %v3520 = vpop.f32.mrb[0].mxu0
        %v3521 = vadd.f32 %v3168, %v3520
        %3522 = vmatprep.mubr.bf16.mxu0 %v1454
        %3523 = vmatmul.mubr.bf16.gmra.mrb[0].mxu0 %v1453
        %v3524 = vpop.f32.mrb[0].mxu0
        %v3525 = vadd.f32 %v3172, %v3524
        %v3526 = vpop.f32.mrb[0].mxu0
        %v3527 = vadd.f32 %v3174, %v3526
        %v3528 = vpop.f32.mrb[0].mxu0
        %v3529 = vadd.f32 %v3176, %v3528
        %v3530 = vpop.f32.mrb[0].mxu0
        %v3531 = vadd.f32 %v3178, %v3530
        %3532 = vmatprep.mubr.bf16.mxu0 %v1458
        %3533 = vmatmul.mubr.bf16.gmra.mrb[0].mxu0 %v1457
        %v3534 = vpop.f32.mrb[0].mxu0
        %v3535 = vadd.f32 %v3182, %v3534
        %v3536 = vpop.f32.mrb[0].mxu0
        %v3537 = vadd.f32 %v3184, %v3536
        %v3538 = vpop.f32.mrb[0].mxu0
        %v3539 = vadd.f32 %v3186, %v3538
        %v3540 = vpop.f32.mrb[0].mxu0
        %v3541 = vadd.f32 %v3188, %v3540
        %3542 = vmatprep.mubr.bf16.mxu0 %v1462
        %3543 = vmatmul.mubr.bf16.gmra.mrb[0].mxu0 %v1461
        %v3544 = vpop.f32.mrb[0].mxu0
        %v3545 = vadd.f32 %v3192, %v3544
        %v3546 = vpop.f32.mrb[0].mxu0
        %v3547 = vadd.f32 %v3194, %v3546
        %v3548 = vpop.f32.mrb[0].mxu0
        %v3549 = vadd.f32 %v3196, %v3548
        %v3550 = vpop.f32.mrb[0].mxu0
        %v3551 = vadd.f32 %v3198, %v3550
        %3552 = vmatprep.mubr.bf16.mxu0 %v1466
        %3553 = vmatmul.mubr.bf16.gmra.mrb[0].mxu0 %v1465
        %v3554 = vpop.f32.mrb[0].mxu0
        %v3555 = vadd.f32 %v3202, %v3554
        %v3556 = vpop.f32.mrb[0].mxu0
        %v3557 = vadd.f32 %v3204, %v3556
        %v3558 = vpop.f32.mrb[0].mxu0
        %v3559 = vadd.f32 %v3206, %v3558
        %v3560 = vpop.f32.mrb[0].mxu0
        %v3561 = vadd.f32 %v3208, %v3560
        %3562 = vmatprep.mubr.bf16.mxu0 %v1470
        %3563 = vmatmul.mubr.bf16.gmra.mrb[0].mxu0 %v1469
        %v3564 = vpop.f32.mrb[0].mxu0
        %v3565 = vadd.f32 %v3212, %v3564
        %v3566 = vpop.f32.mrb[0].mxu0
        %v3567 = vadd.f32 %v3214, %v3566
        %v3568 = vpop.f32.mrb[0].mxu0
        %v3569 = vadd.f32 %v3216, %v3568
        %v3570 = vpop.f32.mrb[0].mxu0
        %v3571 = vadd.f32 %v3218, %v3570
        %3572 = vmatprep.mubr.bf16.mxu0 %v1474
        %3573 = vmatmul.mubr.bf16.gmra.mrb[0].mxu0 %v1473
        %v3574 = vpop.f32.mrb[0].mxu0
        %v3575 = vadd.f32 %v3222, %v3574
        %v3576 = vpop.f32.mrb[0].mxu0
        %v3577 = vadd.f32 %v3224, %v3576
        %v3578 = vpop.f32.mrb[0].mxu0
        %v3579 = vadd.f32 %v3226, %v3578
        %v3580 = vpop.f32.mrb[0].mxu0
        %v3581 = vadd.f32 %v3228, %v3580
        %3582 = vmatprep.mubr.bf16.mxu0 %v1478
        %3583 = vmatmul.mubr.bf16.gmra.mrb[0].mxu0 %v1477
        %v3584 = vpop.f32.mrb[0].mxu0
        %v3585 = vadd.f32 %v3232, %v3584
        %v3586 = vpop.f32.mrb[0].mxu0
        %v3587 = vadd.f32 %v3234, %v3586
        %v3588 = vpop.f32.mrb[0].mxu0
        %v3589 = vadd.f32 %v3236, %v3588
        %v3590 = vpop.f32.mrb[0].mxu0
        %v3591 = vadd.f32 %v3238, %v3590
        %3592 = vmatprep.mubr.bf16.mxu0 %v1482
        %3593 = vmatmul.mubr.bf16.gmra.mrb[0].mxu0 %v1481
        %v3594 = vpop.f32.mrb[0].mxu0
        %v3595 = vadd.f32 %v3242, %v3594
        %v3596 = vpop.f32.mrb[0].mxu0
        %v3597 = vadd.f32 %v3244, %v3596
        %v3598 = vpop.f32.mrb[0].mxu0
        %v3599 = vadd.f32 %v3246, %v3598
        %v3600 = vpop.f32.mrb[0].mxu0
        %v3601 = vadd.f32 %v3248, %v3600
        %3602 = vmatprep.mubr.bf16.mxu0 %v1486
        %3603 = vmatmul.mubr.bf16.gmra.mrb[0].mxu0 %v1485
        %v3604 = vpop.f32.mrb[0].mxu0
        %v3605 = vadd.f32 %v3252, %v3604
        %v3606 = vpop.f32.mrb[0].mxu0
        %v3607 = vadd.f32 %v3254, %v3606
        %v3608 = vpop.f32.mrb[0].mxu0
        %v3609 = vadd.f32 %v3256, %v3608
        %v3610 = vpop.f32.mrb[0].mxu0
        %v3611 = vadd.f32 %v3258, %v3610
        %3612 = vmatprep.mubr.bf16.mxu0 %v1490
        %3613 = vmatmul.mubr.bf16.gmra.mrb[0].mxu0 %v1489
        %v3614 = vpop.f32.mrb[0].mxu0
        %v3615 = vadd.f32 %v3262, %v3614
        %v3616 = vpop.f32.mrb[0].mxu0
        %v3617 = vadd.f32 %v3264, %v3616
        %v3618 = vpop.f32.mrb[0].mxu0
        %v3619 = vadd.f32 %v3266, %v3618
        %v3620 = vpop.f32.mrb[0].mxu0
        %v3621 = vadd.f32 %v3268, %v3620
        %3622 = vmatprep.mubr.bf16.mxu0 %v1494
        %3623 = vmatmul.mubr.bf16.gmra.mrb[0].mxu0 %v1493
        %v3624 = vpop.f32.mrb[0].mxu0
        %v3625 = vadd.f32 %v3272, %v3624
        %v3626 = vpop.f32.mrb[0].mxu0
        %v3627 = vadd.f32 %v3274, %v3626
        %v3628 = vpop.f32.mrb[0].mxu0
        %v3629 = vadd.f32 %v3276, %v3628
        %v3630 = vpop.f32.mrb[0].mxu0
        %v3631 = vadd.f32 %v3278, %v3630
        %3632 = vmatprep.mubr.bf16.mxu0 %v1498
        %3633 = vmatmul.mubr.bf16.gmra.mrb[0].mxu0 %v1497
        %v3634 = vpop.f32.mrb[0].mxu0
        %v3635 = vadd.f32 %v3282, %v3634
        %v3636 = vpop.f32.mrb[0].mxu0
        %v3637 = vadd.f32 %v3284, %v3636
        %v3638 = vpop.f32.mrb[0].mxu0
        %v3639 = vadd.f32 %v3286, %v3638
        %v3640 = vpop.f32.mrb[0].mxu0
        %v3641 = vadd.f32 %v3288, %v3640
        %3642 = vmatprep.mubr.bf16.mxu0 %v1502
        %3643 = vmatmul.mubr.bf16.gmra.mrb[0].mxu0 %v1501
        %v3644 = vpop.f32.mrb[0].mxu0
        %v3645 = vadd.f32 %v3292, %v3644
        %v3646 = vpop.f32.mrb[0].mxu0
        %v3647 = vadd.f32 %v3294, %v3646
        %v3648 = vpop.f32.mrb[0].mxu0
        %v3649 = vadd.f32 %v3296, %v3648
        %v3650 = vpop.f32.mrb[0].mxu0
        %v3651 = vadd.f32 %v3298, %v3650
        %3652 = vmatprep.mubr.bf16.mxu0 %v1506
        %3653 = vmatmul.mubr.bf16.gmra.mrb[0].mxu0 %v1505
        %v3654 = vpop.f32.mrb[0].mxu0
        %v3655 = vadd.f32 %v3302, %v3654
        %v3656 = vpop.f32.mrb[0].mxu0
        %v3657 = vadd.f32 %v3304, %v3656
        %v3658 = vpop.f32.mrb[0].mxu0
        %v3659 = vadd.f32 %v3306, %v3658
        %v3660 = vpop.f32.mrb[0].mxu0
        %v3661 = vadd.f32 %v3308, %v3660
        %3662 = vmatprep.mubr.bf16.mxu0 %v1510
        %3663 = vmatmul.mubr.bf16.gmra.mrb[0].mxu0 %v1509
        %v3664 = vpop.f32.mrb[0].mxu0
        %v3665 = vadd.f32 %v3312, %v3664
        %v3666 = vpop.f32.mrb[0].mxu0
        %v3667 = vadd.f32 %v3314, %v3666
        %v3668 = vpop.f32.mrb[0].mxu0
        %v3669 = vadd.f32 %v3316, %v3668
        %v3670 = vpop.f32.mrb[0].mxu0
        %v3671 = vadd.f32 %v3318, %v3670
        %3672 = vmatprep.mubr.bf16.mxu0 %v1514
        %3673 = vmatmul.mubr.bf16.gmra.mrb[0].mxu0 %v1513
        %v3674 = vpop.f32.mrb[0].mxu0
        %v3675 = vadd.f32 %v3322, %v3674
        %v3676 = vpop.f32.mrb[0].mxu0
        %v3677 = vadd.f32 %v3324, %v3676
        %v3678 = vpop.f32.mrb[0].mxu0
        %v3679 = vadd.f32 %v3326, %v3678
        %v3680 = vpop.f32.mrb[0].mxu0
        %v3681 = vadd.f32 %v3328, %v3680
        %3682 = vmatprep.mubr.bf16.mxu0 %v1518
        %3683 = vmatmul.mubr.bf16.gmra.mrb[0].mxu0 %v1517
        %v3684 = vpop.f32.mrb[0].mxu0
        %v3685 = vadd.f32 %v3332, %v3684
        %v3686 = vpop.f32.mrb[0].mxu0
        %v3687 = vadd.f32 %v3334, %v3686
        %v3688 = vpop.f32.mrb[0].mxu0
        %v3689 = vadd.f32 %v3336, %v3688
        %v3690 = vpop.f32.mrb[0].mxu0
        %v3691 = vadd.f32 %v3338, %v3690
        %3692 = vmatprep.mubr.bf16.mxu0 %v1522
        %3693 = vmatmul.mubr.bf16.gmra.mrb[0].mxu0 %v1521
        %v3694 = vpop.f32.mrb[0].mxu0
        %v3695 = vadd.f32 %v3342, %v3694
        %v3696 = vpop.f32.mrb[0].mxu0
        %v3697 = vadd.f32 %v3344, %v3696
        %v3698 = vpop.f32.mrb[0].mxu0
        %v3699 = vadd.f32 %v3346, %v3698
        %v3700 = vpop.f32.mrb[0].mxu0
        %v3701 = vadd.f32 %v3348, %v3700
        %3702 = vdwg.mxu0
        %v3703 = vadd.f32 %v499, %v2679
        %v3704 = vadd.f32 %v500, %v2681
        %v3705 = vadd.f32 %v501, %v3385
        %v3706 = vadd.f32 %v502, %v3387
        %v3707 = vadd.f32 %v503, %v2683
        %v3708 = vadd.f32 %v504, %v2685
        %v3709 = vadd.f32 %v505, %v3389
        %v3710 = vadd.f32 %v506, %v3391
        %v3711 = vadd.f32 %v507, %v2689
        %v3712 = vadd.f32 %v508, %v2691
        %v3713 = vadd.f32 %v509, %v3395
        %v3714 = vadd.f32 %v510, %v3397
        %v3715 = vadd.f32 %v511, %v2693
        %v3716 = vadd.f32 %v512, %v2695
        %v3717 = vadd.f32 %v513, %v3399
        %v3718 = vadd.f32 %v514, %v3401
        %v3719 = vadd.f32 %v515, %v2699
        %v3720 = vadd.f32 %v516, %v2701
        %v3721 = vadd.f32 %v517, %v3405
        %v3722 = vadd.f32 %v518, %v3407
        %v3723 = vadd.f32 %v519, %v2703
        %v3724 = vadd.f32 %v520, %v2705
        %v3725 = vadd.f32 %v521, %v3409
        %v3726 = vadd.f32 %v522, %v3411
        %v3727 = vadd.f32 %v523, %v2709
        %v3728 = vadd.f32 %v524, %v2711
        %v3729 = vadd.f32 %v525, %v3415
        %v3730 = vadd.f32 %v526, %v3417
        %v3731 = vadd.f32 %v527, %v2713
        %v3732 = vadd.f32 %v528, %v2715
        %v3733 = vadd.f32 %v529, %v3419
        %v3734 = vadd.f32 %v530, %v3421
        %v3735 = vadd.f32 %v531, %v2719
        %v3736 = vadd.f32 %v532, %v2721
        %v3737 = vadd.f32 %v533, %v3425
        %v3738 = vadd.f32 %v534, %v3427
        %v3739 = vadd.f32 %v535, %v2723
        %v3740 = vadd.f32 %v536, %v2725
        %v3741 = vadd.f32 %v537, %v3429
        %v3742 = vadd.f32 %v538, %v3431
        %v3743 = vadd.f32 %v539, %v2729
        %v3744 = vadd.f32 %v540, %v2731
        %v3745 = vadd.f32 %v541, %v3435
        %v3746 = vadd.f32 %v542, %v3437
        %v3747 = vadd.f32 %v543, %v2733
        %v3748 = vadd.f32 %v544, %v2735
        %v3749 = vadd.f32 %v545, %v3439
        %v3750 = vadd.f32 %v546, %v3441
        %v3751 = vadd.f32 %v547, %v2739
        %v3752 = vadd.f32 %v548, %v2741
        %v3753 = vadd.f32 %v549, %v3445
        %v3754 = vadd.f32 %v550, %v3447
        %v3755 = vadd.f32 %v551, %v2743
        %v3756 = vadd.f32 %v552, %v2745
        %v3757 = vadd.f32 %v553, %v3449
        %v3758 = vadd.f32 %v554, %v3451
        %v3759 = vadd.f32 %v555, %v2749
        %v3760 = vadd.f32 %v556, %v2751
        %v3761 = vadd.f32 %v557, %v3455
        %v3762 = vadd.f32 %v558, %v3457
        %v3763 = vadd.f32 %v559, %v2753
        %v3764 = vadd.f32 %v560, %v2755
        %v3765 = vadd.f32 %v561, %v3459
        %v3766 = vadd.f32 %v562, %v3461
        %v3767 = vadd.f32 %v563, %v2759
        %v3768 = vadd.f32 %v564, %v2761
        %v3769 = vadd.f32 %v565, %v3465
        %v3770 = vadd.f32 %v566, %v3467
        %v3771 = vadd.f32 %v567, %v2763
        %v3772 = vadd.f32 %v568, %v2765
        %v3773 = vadd.f32 %v569, %v3469
        %v3774 = vadd.f32 %v570, %v3471
        %v3775 = vadd.f32 %v571, %v2769
        %v3776 = vadd.f32 %v572, %v2771
        %v3777 = vadd.f32 %v573, %v3475
        %v3778 = vadd.f32 %v574, %v3477
        %v3779 = vadd.f32 %v575, %v2773
        %v3780 = vadd.f32 %v576, %v2775
        %v3781 = vadd.f32 %v577, %v3479
        %v3782 = vadd.f32 %v578, %v3481
        %v3783 = vadd.f32 %v579, %v2779
        %v3784 = vadd.f32 %v580, %v2781
        %v3785 = vadd.f32 %v581, %v3485
        %v3786 = vadd.f32 %v582, %v3487
        %v3787 = vadd.f32 %v583, %v2783
        %v3788 = vadd.f32 %v584, %v2785
        %v3789 = vadd.f32 %v585, %v3489
        %v3790 = vadd.f32 %v586, %v3491
        %v3791 = vadd.f32 %v587, %v2789
        %v3792 = vadd.f32 %v588, %v2791
        %v3793 = vadd.f32 %v589, %v3495
        %v3794 = vadd.f32 %v590, %v3497
        %v3795 = vadd.f32 %v591, %v2793
        %v3796 = vadd.f32 %v592, %v2795
        %v3797 = vadd.f32 %v593, %v3499
        %v3798 = vadd.f32 %v594, %v3501
        %v3799 = vadd.f32 %v595, %v2799
        %v3800 = vadd.f32 %v596, %v2801
        %v3801 = vadd.f32 %v597, %v3505
        %v3802 = vadd.f32 %v598, %v3507
        %v3803 = vadd.f32 %v599, %v2803
        %v3804 = vadd.f32 %v600, %v2805
        %v3805 = vadd.f32 %v601, %v3509
        %v3806 = vadd.f32 %v602, %v3511
        %v3807 = vadd.f32 %v603, %v2809
        %v3808 = vadd.f32 %v604, %v2811
        %v3809 = vadd.f32 %v605, %v3515
        %v3810 = vadd.f32 %v606, %v3517
        %v3811 = vadd.f32 %v607, %v2813
        %v3812 = vadd.f32 %v608, %v2815
        %v3813 = vadd.f32 %v609, %v3519
        %v3814 = vadd.f32 %v610, %v3521
        %v3815 = vadd.f32 %v611, %v2819
        %v3816 = vadd.f32 %v612, %v2821
        %v3817 = vadd.f32 %v613, %v3525
        %v3818 = vadd.f32 %v614, %v3527
        %v3819 = vadd.f32 %v615, %v2823
        %v3820 = vadd.f32 %v616, %v2825
        %v3821 = vadd.f32 %v617, %v3529
        %v3822 = vadd.f32 %v618, %v3531
        %v3823 = vadd.f32 %v619, %v2829
        %v3824 = vadd.f32 %v620, %v2831
        %v3825 = vadd.f32 %v621, %v3535
        %v3826 = vadd.f32 %v622, %v3537
        %v3827 = vadd.f32 %v623, %v2833
        %v3828 = vadd.f32 %v624, %v2835
        %v3829 = vadd.f32 %v625, %v3539
        %v3830 = vadd.f32 %v626, %v3541
        %v3831 = vadd.f32 %v627, %v2839
        %v3832 = vadd.f32 %v628, %v2841
        %v3833 = vadd.f32 %v629, %v3545
        %v3834 = vadd.f32 %v630, %v3547
        %v3835 = vadd.f32 %v631, %v2843
        %v3836 = vadd.f32 %v632, %v2845
        %v3837 = vadd.f32 %v633, %v3549
        %v3838 = vadd.f32 %v634, %v3551
        %v3839 = vadd.f32 %v635, %v2849
        %v3840 = vadd.f32 %v636, %v2851
        %v3841 = vadd.f32 %v637, %v3555
        %v3842 = vadd.f32 %v638, %v3557
        %v3843 = vadd.f32 %v639, %v2853
        %v3844 = vadd.f32 %v640, %v2855
        %v3845 = vadd.f32 %v641, %v3559
        %v3846 = vadd.f32 %v642, %v3561
        %v3847 = vadd.f32 %v643, %v2859
        %v3848 = vadd.f32 %v644, %v2861
        %v3849 = vadd.f32 %v645, %v3565
        %v3850 = vadd.f32 %v646, %v3567
        %v3851 = vadd.f32 %v647, %v2863
        %v3852 = vadd.f32 %v648, %v2865
        %v3853 = vadd.f32 %v649, %v3569
        %v3854 = vadd.f32 %v650, %v3571
        %v3855 = vadd.f32 %v651, %v2869
        %v3856 = vadd.f32 %v652, %v2871
        %v3857 = vadd.f32 %v653, %v3575
        %v3858 = vadd.f32 %v654, %v3577
        %v3859 = vadd.f32 %v655, %v2873
        %v3860 = vadd.f32 %v656, %v2875
        %v3861 = vadd.f32 %v657, %v3579
        %v3862 = vadd.f32 %v658, %v3581
        %v3863 = vadd.f32 %v659, %v2879
        %v3864 = vadd.f32 %v660, %v2881
        %v3865 = vadd.f32 %v661, %v3585
        %v3866 = vadd.f32 %v662, %v3587
        %v3867 = vadd.f32 %v663, %v2883
        %v3868 = vadd.f32 %v664, %v2885
        %v3869 = vadd.f32 %v665, %v3589
        %v3870 = vadd.f32 %v666, %v3591
        %v3871 = vadd.f32 %v667, %v2889
        %v3872 = vadd.f32 %v668, %v2891
        %v3873 = vadd.f32 %v669, %v3595
        %v3874 = vadd.f32 %v670, %v3597
        %v3875 = vadd.f32 %v671, %v2893
        %v3876 = vadd.f32 %v672, %v2895
        %v3877 = vadd.f32 %v673, %v3599
        %v3878 = vadd.f32 %v674, %v3601
        %v3879 = vadd.f32 %v675, %v2899
        %v3880 = vadd.f32 %v676, %v2901
        %v3881 = vadd.f32 %v677, %v3605
        %v3882 = vadd.f32 %v678, %v3607
        %v3883 = vadd.f32 %v679, %v2903
        %v3884 = vadd.f32 %v680, %v2905
        %v3885 = vadd.f32 %v681, %v3609
        %v3886 = vadd.f32 %v682, %v3611
        %v3887 = vadd.f32 %v683, %v2909
        %v3888 = vadd.f32 %v684, %v2911
        %v3889 = vadd.f32 %v685, %v3615
        %v3890 = vadd.f32 %v686, %v3617
        %v3891 = vadd.f32 %v687, %v2913
        %v3892 = vadd.f32 %v688, %v2915
        %v3893 = vadd.f32 %v689, %v3619
        %v3894 = vadd.f32 %v690, %v3621
        %v3895 = vadd.f32 %v691, %v2919
        %v3896 = vadd.f32 %v692, %v2921
        %v3897 = vadd.f32 %v693, %v3625
        %v3898 = vadd.f32 %v694, %v3627
        %v3899 = vadd.f32 %v695, %v2923
        %v3900 = vadd.f32 %v696, %v2925
        %v3901 = vadd.f32 %v697, %v3629
        %v3902 = vadd.f32 %v698, %v3631
        %v3903 = vadd.f32 %v699, %v2929
        %v3904 = vadd.f32 %v700, %v2931
        %v3905 = vadd.f32 %v701, %v3635
        %v3906 = vadd.f32 %v702, %v3637
        %v3907 = vadd.f32 %v703, %v2933
        %v3908 = vadd.f32 %v704, %v2935
        %v3909 = vadd.f32 %v705, %v3639
        %v3910 = vadd.f32 %v706, %v3641
        %v3911 = vadd.f32 %v707, %v2939
        %v3912 = vadd.f32 %v708, %v2941
        %v3913 = vadd.f32 %v709, %v3645
        %v3914 = vadd.f32 %v710, %v3647
        %v3915 = vadd.f32 %v711, %v2943
        %v3916 = vadd.f32 %v712, %v2945
        %v3917 = vadd.f32 %v713, %v3649
        %v3918 = vadd.f32 %v714, %v3651
        %v3919 = vadd.f32 %v715, %v2949
        %v3920 = vadd.f32 %v716, %v2951
        %v3921 = vadd.f32 %v717, %v3655
        %v3922 = vadd.f32 %v718, %v3657
        %v3923 = vadd.f32 %v719, %v2953
        %v3924 = vadd.f32 %v720, %v2955
        %v3925 = vadd.f32 %v721, %v3659
        %v3926 = vadd.f32 %v722, %v3661
        %v3927 = vadd.f32 %v723, %v2959
        %v3928 = vadd.f32 %v724, %v2961
        %v3929 = vadd.f32 %v725, %v3665
        %v3930 = vadd.f32 %v726, %v3667
        %v3931 = vadd.f32 %v727, %v2963
        %v3932 = vadd.f32 %v728, %v2965
        %v3933 = vadd.f32 %v729, %v3669
        %v3934 = vadd.f32 %v730, %v3671
        %v3935 = vadd.f32 %v731, %v2969
        %v3936 = vadd.f32 %v732, %v2971
        %v3937 = vadd.f32 %v733, %v3675
        %v3938 = vadd.f32 %v734, %v3677
        %v3939 = vadd.f32 %v735, %v2973
        %v3940 = vadd.f32 %v736, %v2975
        %v3941 = vadd.f32 %v737, %v3679
        %v3942 = vadd.f32 %v738, %v3681
        %v3943 = vadd.f32 %v739, %v2979
        %v3944 = vadd.f32 %v740, %v2981
        %v3945 = vadd.f32 %v741, %v3685
        %v3946 = vadd.f32 %v742, %v3687
        %v3947 = vadd.f32 %v743, %v2983
        %v3948 = vadd.f32 %v744, %v2985
        %v3949 = vadd.f32 %v745, %v3689
        %v3950 = vadd.f32 %v746, %v3691
        %v3951 = vadd.f32 %v747, %v2989
        %v3952 = vadd.f32 %v748, %v2991
        %v3953 = vadd.f32 %v749, %v3695
        %v3954 = vadd.f32 %v750, %v3697
        %v3955 = vadd.f32 %v751, %v2993
        %v3956 = vadd.f32 %v752, %v2995
        %v3957 = vadd.f32 %v753, %v3699
        %v3958 = vadd.f32 %v754, %v3701
        %3959 = vst [vmem:[#allocation2] sm:$0xff] %v3703
        %3960 = vst [vmem:[#allocation2 + $0x8] sm:$0xff] %v3704
        %3961 = vst [vmem:[#allocation2 + $0x10] sm:$0xff] %v3705
        %3962 = vst [vmem:[#allocation2 + $0x18] sm:$0xff] %v3706
        %3963 = vst [vmem:[#allocation2 + $0x20] sm:$0xff] %v3707
        %3964 = vst [vmem:[#allocation2 + $0x28] sm:$0xff] %v3708
        %3965 = vst [vmem:[#allocation2 + $0x30] sm:$0xff] %v3709
        %3966 = vst [vmem:[#allocation2 + $0x38] sm:$0xff] %v3710
        %3967 = vst [vmem:[#allocation2 + $0x40] sm:$0xff] %v3711
        %3968 = vst [vmem:[#allocation2 + $0x48] sm:$0xff] %v3712
        %3969 = vst [vmem:[#allocation2 + $0x50] sm:$0xff] %v3713
        %3970 = vst [vmem:[#allocation2 + $0x58] sm:$0xff] %v3714
        %3971 = vst [vmem:[#allocation2 + $0x60] sm:$0xff] %v3715
        %3972 = vst [vmem:[#allocation2 + $0x68] sm:$0xff] %v3716
        %3973 = vst [vmem:[#allocation2 + $0x70] sm:$0xff] %v3717
        %3974 = vst [vmem:[#allocation2 + $0x78] sm:$0xff] %v3718
        %3975 = vst [vmem:[#allocation2 + $0x80] sm:$0xff] %v3719
        %3976 = vst [vmem:[#allocation2 + $0x88] sm:$0xff] %v3720
        %3977 = vst [vmem:[#allocation2 + $0x90] sm:$0xff] %v3721
        %3978 = vst [vmem:[#allocation2 + $0x98] sm:$0xff] %v3722
        %3979 = vst [vmem:[#allocation2 + $0xa0] sm:$0xff] %v3723
        %3980 = vst [vmem:[#allocation2 + $0xa8] sm:$0xff] %v3724
        %3981 = vst [vmem:[#allocation2 + $0xb0] sm:$0xff] %v3725
        %3982 = vst [vmem:[#allocation2 + $0xb8] sm:$0xff] %v3726
        %3983 = vst [vmem:[#allocation2 + $0xc0] sm:$0xff] %v3727
        %3984 = vst [vmem:[#allocation2 + $0xc8] sm:$0xff] %v3728
        %3985 = vst [vmem:[#allocation2 + $0xd0] sm:$0xff] %v3729
        %3986 = vst [vmem:[#allocation2 + $0xd8] sm:$0xff] %v3730
        %3987 = vst [vmem:[#allocation2 + $0xe0] sm:$0xff] %v3731
        %3988 = vst [vmem:[#allocation2 + $0xe8] sm:$0xff] %v3732
        %3989 = vst [vmem:[#allocation2 + $0xf0] sm:$0xff] %v3733
        %3990 = vst [vmem:[#allocation2 + $0xf8] sm:$0xff] %v3734
        %3991 = vst [vmem:[#allocation2 + $0x100] sm:$0xff] %v3735
        %3992 = vst [vmem:[#allocation2 + $0x108] sm:$0xff] %v3736
        %3993 = vst [vmem:[#allocation2 + $0x110] sm:$0xff] %v3737
        %3994 = vst [vmem:[#allocation2 + $0x118] sm:$0xff] %v3738
        %3995 = vst [vmem:[#allocation2 + $0x120] sm:$0xff] %v3739
        %3996 = vst [vmem:[#allocation2 + $0x128] sm:$0xff] %v3740
        %3997 = vst [vmem:[#allocation2 + $0x130] sm:$0xff] %v3741
        %3998 = vst [vmem:[#allocation2 + $0x138] sm:$0xff] %v3742
        %3999 = vst [vmem:[#allocation2 + $0x140] sm:$0xff] %v3743
        %4000 = vst [vmem:[#allocation2 + $0x148] sm:$0xff] %v3744
        %4001 = vst [vmem:[#allocation2 + $0x150] sm:$0xff] %v3745
        %4002 = vst [vmem:[#allocation2 + $0x158] sm:$0xff] %v3746
        %4003 = vst [vmem:[#allocation2 + $0x160] sm:$0xff] %v3747
        %4004 = vst [vmem:[#allocation2 + $0x168] sm:$0xff] %v3748
        %4005 = vst [vmem:[#allocation2 + $0x170] sm:$0xff] %v3749
        %4006 = vst [vmem:[#allocation2 + $0x178] sm:$0xff] %v3750
        %4007 = vst [vmem:[#allocation2 + $0x180] sm:$0xff] %v3751
        %4008 = vst [vmem:[#allocation2 + $0x188] sm:$0xff] %v3752
        %4009 = vst [vmem:[#allocation2 + $0x190] sm:$0xff] %v3753
        %4010 = vst [vmem:[#allocation2 + $0x198] sm:$0xff] %v3754
        %4011 = vst [vmem:[#allocation2 + $0x1a0] sm:$0xff] %v3755
        %4012 = vst [vmem:[#allocation2 + $0x1a8] sm:$0xff] %v3756
        %4013 = vst [vmem:[#allocation2 + $0x1b0] sm:$0xff] %v3757
        %4014 = vst [vmem:[#allocation2 + $0x1b8] sm:$0xff] %v3758
        %4015 = vst [vmem:[#allocation2 + $0x1c0] sm:$0xff] %v3759
        %4016 = vst [vmem:[#allocation2 + $0x1c8] sm:$0xff] %v3760
        %4017 = vst [vmem:[#allocation2 + $0x1d0] sm:$0xff] %v3761
        %4018 = vst [vmem:[#allocation2 + $0x1d8] sm:$0xff] %v3762
        %4019 = vst [vmem:[#allocation2 + $0x1e0] sm:$0xff] %v3763
        %4020 = vst [vmem:[#allocation2 + $0x1e8] sm:$0xff] %v3764
        %4021 = vst [vmem:[#allocation2 + $0x1f0] sm:$0xff] %v3765
        %4022 = vst [vmem:[#allocation2 + $0x1f8] sm:$0xff] %v3766
        %4023 = vst [vmem:[#allocation2 + $0x200] sm:$0xff] %v3767
        %4024 = vst [vmem:[#allocation2 + $0x208] sm:$0xff] %v3768
        %4025 = vst [vmem:[#allocation2 + $0x210] sm:$0xff] %v3769
        %4026 = vst [vmem:[#allocation2 + $0x218] sm:$0xff] %v3770
        %4027 = vst [vmem:[#allocation2 + $0x220] sm:$0xff] %v3771
        %4028 = vst [vmem:[#allocation2 + $0x228] sm:$0xff] %v3772
        %4029 = vst [vmem:[#allocation2 + $0x230] sm:$0xff] %v3773
        %4030 = vst [vmem:[#allocation2 + $0x238] sm:$0xff] %v3774
        %4031 = vst [vmem:[#allocation2 + $0x240] sm:$0xff] %v3775
        %4032 = vst [vmem:[#allocation2 + $0x248] sm:$0xff] %v3776
        %4033 = vst [vmem:[#allocation2 + $0x250] sm:$0xff] %v3777
        %4034 = vst [vmem:[#allocation2 + $0x258] sm:$0xff] %v3778
        %4035 = vst [vmem:[#allocation2 + $0x260] sm:$0xff] %v3779
        %4036 = vst [vmem:[#allocation2 + $0x268] sm:$0xff] %v3780
        %4037 = vst [vmem:[#allocation2 + $0x270] sm:$0xff] %v3781
        %4038 = vst [vmem:[#allocation2 + $0x278] sm:$0xff] %v3782
        %4039 = vst [vmem:[#allocation2 + $0x280] sm:$0xff] %v3783
        %4040 = vst [vmem:[#allocation2 + $0x288] sm:$0xff] %v3784
        %4041 = vst [vmem:[#allocation2 + $0x290] sm:$0xff] %v3785
        %4042 = vst [vmem:[#allocation2 + $0x298] sm:$0xff] %v3786
        %4043 = vst [vmem:[#allocation2 + $0x2a0] sm:$0xff] %v3787
        %4044 = vst [vmem:[#allocation2 + $0x2a8] sm:$0xff] %v3788
        %4045 = vst [vmem:[#allocation2 + $0x2b0] sm:$0xff] %v3789
        %4046 = vst [vmem:[#allocation2 + $0x2b8] sm:$0xff] %v3790
        %4047 = vst [vmem:[#allocation2 + $0x2c0] sm:$0xff] %v3791
        %4048 = vst [vmem:[#allocation2 + $0x2c8] sm:$0xff] %v3792
        %4049 = vst [vmem:[#allocation2 + $0x2d0] sm:$0xff] %v3793
        %4050 = vst [vmem:[#allocation2 + $0x2d8] sm:$0xff] %v3794
        %4051 = vst [vmem:[#allocation2 + $0x2e0] sm:$0xff] %v3795
        %4052 = vst [vmem:[#allocation2 + $0x2e8] sm:$0xff] %v3796
        %4053 = vst [vmem:[#allocation2 + $0x2f0] sm:$0xff] %v3797
        %4054 = vst [vmem:[#allocation2 + $0x2f8] sm:$0xff] %v3798
        %4055 = vst [vmem:[#allocation2 + $0x300] sm:$0xff] %v3799
        %4056 = vst [vmem:[#allocation2 + $0x308] sm:$0xff] %v3800
        %4057 = vst [vmem:[#allocation2 + $0x310] sm:$0xff] %v3801
        %4058 = vst [vmem:[#allocation2 + $0x318] sm:$0xff] %v3802
        %4059 = vst [vmem:[#allocation2 + $0x320] sm:$0xff] %v3803
        %4060 = vst [vmem:[#allocation2 + $0x328] sm:$0xff] %v3804
        %4061 = vst [vmem:[#allocation2 + $0x330] sm:$0xff] %v3805
        %4062 = vst [vmem:[#allocation2 + $0x338] sm:$0xff] %v3806
        %4063 = vst [vmem:[#allocation2 + $0x340] sm:$0xff] %v3807
        %4064 = vst [vmem:[#allocation2 + $0x348] sm:$0xff] %v3808
        %4065 = vst [vmem:[#allocation2 + $0x350] sm:$0xff] %v3809
        %4066 = vst [vmem:[#allocation2 + $0x358] sm:$0xff] %v3810
        %4067 = vst [vmem:[#allocation2 + $0x360] sm:$0xff] %v3811
        %4068 = vst [vmem:[#allocation2 + $0x368] sm:$0xff] %v3812
        %4069 = vst [vmem:[#allocation2 + $0x370] sm:$0xff] %v3813
        %4070 = vst [vmem:[#allocation2 + $0x378] sm:$0xff] %v3814
        %4071 = vst [vmem:[#allocation2 + $0x380] sm:$0xff] %v3815
        %4072 = vst [vmem:[#allocation2 + $0x388] sm:$0xff] %v3816
        %4073 = vst [vmem:[#allocation2 + $0x390] sm:$0xff] %v3817
        %4074 = vst [vmem:[#allocation2 + $0x398] sm:$0xff] %v3818
        %4075 = vst [vmem:[#allocation2 + $0x3a0] sm:$0xff] %v3819
        %4076 = vst [vmem:[#allocation2 + $0x3a8] sm:$0xff] %v3820
        %4077 = vst [vmem:[#allocation2 + $0x3b0] sm:$0xff] %v3821
        %4078 = vst [vmem:[#allocation2 + $0x3b8] sm:$0xff] %v3822
        %4079 = vst [vmem:[#allocation2 + $0x3c0] sm:$0xff] %v3823
        %4080 = vst [vmem:[#allocation2 + $0x3c8] sm:$0xff] %v3824
        %4081 = vst [vmem:[#allocation2 + $0x3d0] sm:$0xff] %v3825
        %4082 = vst [vmem:[#allocation2 + $0x3d8] sm:$0xff] %v3826
        %4083 = vst [vmem:[#allocation2 + $0x3e0] sm:$0xff] %v3827
        %4084 = vst [vmem:[#allocation2 + $0x3e8] sm:$0xff] %v3828
        %4085 = vst [vmem:[#allocation2 + $0x3f0] sm:$0xff] %v3829
        %4086 = vst [vmem:[#allocation2 + $0x3f8] sm:$0xff] %v3830
        %4087 = vst [vmem:[#allocation2 + $0x400] sm:$0xff] %v3831
        %4088 = vst [vmem:[#allocation2 + $0x408] sm:$0xff] %v3832
        %4089 = vst [vmem:[#allocation2 + $0x410] sm:$0xff] %v3833
        %4090 = vst [vmem:[#allocation2 + $0x418] sm:$0xff] %v3834
        %4091 = vst [vmem:[#allocation2 + $0x420] sm:$0xff] %v3835
        %4092 = vst [vmem:[#allocation2 + $0x428] sm:$0xff] %v3836
        %4093 = vst [vmem:[#allocation2 + $0x430] sm:$0xff] %v3837
        %4094 = vst [vmem:[#allocation2 + $0x438] sm:$0xff] %v3838
        %4095 = vst [vmem:[#allocation2 + $0x440] sm:$0xff] %v3839
        %4096 = vst [vmem:[#allocation2 + $0x448] sm:$0xff] %v3840
        %4097 = vst [vmem:[#allocation2 + $0x450] sm:$0xff] %v3841
        %4098 = vst [vmem:[#allocation2 + $0x458] sm:$0xff] %v3842
        %4099 = vst [vmem:[#allocation2 + $0x460] sm:$0xff] %v3843
        %4100 = vst [vmem:[#allocation2 + $0x468] sm:$0xff] %v3844
        %4101 = vst [vmem:[#allocation2 + $0x470] sm:$0xff] %v3845
        %4102 = vst [vmem:[#allocation2 + $0x478] sm:$0xff] %v3846
        %4103 = vst [vmem:[#allocation2 + $0x480] sm:$0xff] %v3847
        %4104 = vst [vmem:[#allocation2 + $0x488] sm:$0xff] %v3848
        %4105 = vst [vmem:[#allocation2 + $0x490] sm:$0xff] %v3849
        %4106 = vst [vmem:[#allocation2 + $0x498] sm:$0xff] %v3850
        %4107 = vst [vmem:[#allocation2 + $0x4a0] sm:$0xff] %v3851
        %4108 = vst [vmem:[#allocation2 + $0x4a8] sm:$0xff] %v3852
        %4109 = vst [vmem:[#allocation2 + $0x4b0] sm:$0xff] %v3853
        %4110 = vst [vmem:[#allocation2 + $0x4b8] sm:$0xff] %v3854
        %4111 = vst [vmem:[#allocation2 + $0x4c0] sm:$0xff] %v3855
        %4112 = vst [vmem:[#allocation2 + $0x4c8] sm:$0xff] %v3856
        %4113 = vst [vmem:[#allocation2 + $0x4d0] sm:$0xff] %v3857
        %4114 = vst [vmem:[#allocation2 + $0x4d8] sm:$0xff] %v3858
        %4115 = vst [vmem:[#allocation2 + $0x4e0] sm:$0xff] %v3859
        %4116 = vst [vmem:[#allocation2 + $0x4e8] sm:$0xff] %v3860
        %4117 = vst [vmem:[#allocation2 + $0x4f0] sm:$0xff] %v3861
        %4118 = vst [vmem:[#allocation2 + $0x4f8] sm:$0xff] %v3862
        %4119 = vst [vmem:[#allocation2 + $0x500] sm:$0xff] %v3863
        %4120 = vst [vmem:[#allocation2 + $0x508] sm:$0xff] %v3864
        %4121 = vst [vmem:[#allocation2 + $0x510] sm:$0xff] %v3865
        %4122 = vst [vmem:[#allocation2 + $0x518] sm:$0xff] %v3866
        %4123 = vst [vmem:[#allocation2 + $0x520] sm:$0xff] %v3867
        %4124 = vst [vmem:[#allocation2 + $0x528] sm:$0xff] %v3868
        %4125 = vst [vmem:[#allocation2 + $0x530] sm:$0xff] %v3869
        %4126 = vst [vmem:[#allocation2 + $0x538] sm:$0xff] %v3870
        %4127 = vst [vmem:[#allocation2 + $0x540] sm:$0xff] %v3871
        %4128 = vst [vmem:[#allocation2 + $0x548] sm:$0xff] %v3872
        %4129 = vst [vmem:[#allocation2 + $0x550] sm:$0xff] %v3873
        %4130 = vst [vmem:[#allocation2 + $0x558] sm:$0xff] %v3874
        %4131 = vst [vmem:[#allocation2 + $0x560] sm:$0xff] %v3875
        %4132 = vst [vmem:[#allocation2 + $0x568] sm:$0xff] %v3876
        %4133 = vst [vmem:[#allocation2 + $0x570] sm:$0xff] %v3877
        %4134 = vst [vmem:[#allocation2 + $0x578] sm:$0xff] %v3878
        %4135 = vst [vmem:[#allocation2 + $0x580] sm:$0xff] %v3879
        %4136 = vst [vmem:[#allocation2 + $0x588] sm:$0xff] %v3880
        %4137 = vst [vmem:[#allocation2 + $0x590] sm:$0xff] %v3881
        %4138 = vst [vmem:[#allocation2 + $0x598] sm:$0xff] %v3882
        %4139 = vst [vmem:[#allocation2 + $0x5a0] sm:$0xff] %v3883
        %4140 = vst [vmem:[#allocation2 + $0x5a8] sm:$0xff] %v3884
        %4141 = vst [vmem:[#allocation2 + $0x5b0] sm:$0xff] %v3885
        %4142 = vst [vmem:[#allocation2 + $0x5b8] sm:$0xff] %v3886
        %4143 = vst [vmem:[#allocation2 + $0x5c0] sm:$0xff] %v3887
        %4144 = vst [vmem:[#allocation2 + $0x5c8] sm:$0xff] %v3888
        %4145 = vst [vmem:[#allocation2 + $0x5d0] sm:$0xff] %v3889
        %4146 = vst [vmem:[#allocation2 + $0x5d8] sm:$0xff] %v3890
        %4147 = vst [vmem:[#allocation2 + $0x5e0] sm:$0xff] %v3891
        %4148 = vst [vmem:[#allocation2 + $0x5e8] sm:$0xff] %v3892
        %4149 = vst [vmem:[#allocation2 + $0x5f0] sm:$0xff] %v3893
        %4150 = vst [vmem:[#allocation2 + $0x5f8] sm:$0xff] %v3894
        %4151 = vst [vmem:[#allocation2 + $0x600] sm:$0xff] %v3895
        %4152 = vst [vmem:[#allocation2 + $0x608] sm:$0xff] %v3896
        %4153 = vst [vmem:[#allocation2 + $0x610] sm:$0xff] %v3897
        %4154 = vst [vmem:[#allocation2 + $0x618] sm:$0xff] %v3898
        %4155 = vst [vmem:[#allocation2 + $0x620] sm:$0xff] %v3899
        %4156 = vst [vmem:[#allocation2 + $0x628] sm:$0xff] %v3900
        %4157 = vst [vmem:[#allocation2 + $0x630] sm:$0xff] %v3901
        %4158 = vst [vmem:[#allocation2 + $0x638] sm:$0xff] %v3902
        %4159 = vst [vmem:[#allocation2 + $0x640] sm:$0xff] %v3903
        %4160 = vst [vmem:[#allocation2 + $0x648] sm:$0xff] %v3904
        %4161 = vst [vmem:[#allocation2 + $0x650] sm:$0xff] %v3905
        %4162 = vst [vmem:[#allocation2 + $0x658] sm:$0xff] %v3906
        %4163 = vst [vmem:[#allocation2 + $0x660] sm:$0xff] %v3907
        %4164 = vst [vmem:[#allocation2 + $0x668] sm:$0xff] %v3908
        %4165 = vst [vmem:[#allocation2 + $0x670] sm:$0xff] %v3909
        %4166 = vst [vmem:[#allocation2 + $0x678] sm:$0xff] %v3910
        %4167 = vst [vmem:[#allocation2 + $0x680] sm:$0xff] %v3911
        %4168 = vst [vmem:[#allocation2 + $0x688] sm:$0xff] %v3912
        %4169 = vst [vmem:[#allocation2 + $0x690] sm:$0xff] %v3913
        %4170 = vst [vmem:[#allocation2 + $0x698] sm:$0xff] %v3914
        %4171 = vst [vmem:[#allocation2 + $0x6a0] sm:$0xff] %v3915
        %4172 = vst [vmem:[#allocation2 + $0x6a8] sm:$0xff] %v3916
        %4173 = vst [vmem:[#allocation2 + $0x6b0] sm:$0xff] %v3917
        %4174 = vst [vmem:[#allocation2 + $0x6b8] sm:$0xff] %v3918
        %4175 = vst [vmem:[#allocation2 + $0x6c0] sm:$0xff] %v3919
        %4176 = vst [vmem:[#allocation2 + $0x6c8] sm:$0xff] %v3920
        %4177 = vst [vmem:[#allocation2 + $0x6d0] sm:$0xff] %v3921
        %4178 = vst [vmem:[#allocation2 + $0x6d8] sm:$0xff] %v3922
        %4179 = vst [vmem:[#allocation2 + $0x6e0] sm:$0xff] %v3923
        %4180 = vst [vmem:[#allocation2 + $0x6e8] sm:$0xff] %v3924
        %4181 = vst [vmem:[#allocation2 + $0x6f0] sm:$0xff] %v3925
        %4182 = vst [vmem:[#allocation2 + $0x6f8] sm:$0xff] %v3926
        %4183 = vst [vmem:[#allocation2 + $0x700] sm:$0xff] %v3927
        %4184 = vst [vmem:[#allocation2 + $0x708] sm:$0xff] %v3928
        %4185 = vst [vmem:[#allocation2 + $0x710] sm:$0xff] %v3929
        %4186 = vst [vmem:[#allocation2 + $0x718] sm:$0xff] %v3930
        %4187 = vst [vmem:[#allocation2 + $0x720] sm:$0xff] %v3931
        %4188 = vst [vmem:[#allocation2 + $0x728] sm:$0xff] %v3932
        %4189 = vst [vmem:[#allocation2 + $0x730] sm:$0xff] %v3933
        %4190 = vst [vmem:[#allocation2 + $0x738] sm:$0xff] %v3934
        %4191 = vst [vmem:[#allocation2 + $0x740] sm:$0xff] %v3935
        %4192 = vst [vmem:[#allocation2 + $0x748] sm:$0xff] %v3936
        %4193 = vst [vmem:[#allocation2 + $0x750] sm:$0xff] %v3937
        %4194 = vst [vmem:[#allocation2 + $0x758] sm:$0xff] %v3938
        %4195 = vst [vmem:[#allocation2 + $0x760] sm:$0xff] %v3939
        %4196 = vst [vmem:[#allocation2 + $0x768] sm:$0xff] %v3940
        %4197 = vst [vmem:[#allocation2 + $0x770] sm:$0xff] %v3941
        %4198 = vst [vmem:[#allocation2 + $0x778] sm:$0xff] %v3942
        %4199 = vst [vmem:[#allocation2 + $0x780] sm:$0xff] %v3943
        %4200 = vst [vmem:[#allocation2 + $0x788] sm:$0xff] %v3944
        %4201 = vst [vmem:[#allocation2 + $0x790] sm:$0xff] %v3945
        %4202 = vst [vmem:[#allocation2 + $0x798] sm:$0xff] %v3946
        %4203 = vst [vmem:[#allocation2 + $0x7a0] sm:$0xff] %v3947
        %4204 = vst [vmem:[#allocation2 + $0x7a8] sm:$0xff] %v3948
        %4205 = vst [vmem:[#allocation2 + $0x7b0] sm:$0xff] %v3949
        %4206 = vst [vmem:[#allocation2 + $0x7b8] sm:$0xff] %v3950
        %4207 = vst [vmem:[#allocation2 + $0x7c0] sm:$0xff] %v3951
        %4208 = vst [vmem:[#allocation2 + $0x7c8] sm:$0xff] %v3952
        %4209 = vst [vmem:[#allocation2 + $0x7d0] sm:$0xff] %v3953
        %4210 = vst [vmem:[#allocation2 + $0x7d8] sm:$0xff] %v3954
        %4211 = vst [vmem:[#allocation2 + $0x7e0] sm:$0xff] %v3955
        %4212 = vst [vmem:[#allocation2 + $0x7e8] sm:$0xff] %v3956
        %4213 = vst [vmem:[#allocation2 + $0x7f0] sm:$0xff] %v3957
        %4214 = vst [vmem:[#allocation2 + $0x7f8] sm:$0xff] %v3958
        // Predicated region
        $region41: #{tpu_custom_call.1} parent=27 // pred_check
          %p4215 = pneg %p239
        $region42: #{tpu_custom_call.1} parent=27 // pred_check_branch
          %4217 = sbr.rel (%p4215) target = $region44
        $region43: #{tpu_custom_call.1} parent=27 // pred_region
          %v4218 = vld [vmem:[#allocation2] sm:$0xff]
          %v4219 = vld [vmem:[#allocation2 + $0x8] sm:$0xff]
          %v4220 = vld [vmem:[#allocation2 + $0x10] sm:$0xff]
          %v4221 = vld [vmem:[#allocation2 + $0x18] sm:$0xff]
          %v4222 = vld [vmem:[#allocation2 + $0x20] sm:$0xff]
          %v4223 = vld [vmem:[#allocation2 + $0x28] sm:$0xff]
          %v4224 = vld [vmem:[#allocation2 + $0x30] sm:$0xff]
          %v4225 = vld [vmem:[#allocation2 + $0x38] sm:$0xff]
          %v4226 = vld [vmem:[#allocation2 + $0x40] sm:$0xff]
          %v4227 = vld [vmem:[#allocation2 + $0x48] sm:$0xff]
          %v4228 = vld [vmem:[#allocation2 + $0x50] sm:$0xff]
          %v4229 = vld [vmem:[#allocation2 + $0x58] sm:$0xff]
          %v4230 = vld [vmem:[#allocation2 + $0x60] sm:$0xff]
          %v4231 = vld [vmem:[#allocation2 + $0x68] sm:$0xff]
          %v4232 = vld [vmem:[#allocation2 + $0x70] sm:$0xff]
          %v4233 = vld [vmem:[#allocation2 + $0x78] sm:$0xff]
          %v4234 = vld [vmem:[#allocation2 + $0x80] sm:$0xff]
          %v4235 = vld [vmem:[#allocation2 + $0x88] sm:$0xff]
          %v4236 = vld [vmem:[#allocation2 + $0x90] sm:$0xff]
          %v4237 = vld [vmem:[#allocation2 + $0x98] sm:$0xff]
          %v4238 = vld [vmem:[#allocation2 + $0xa0] sm:$0xff]
          %v4239 = vld [vmem:[#allocation2 + $0xa8] sm:$0xff]
          %v4240 = vld [vmem:[#allocation2 + $0xb0] sm:$0xff]
          %v4241 = vld [vmem:[#allocation2 + $0xb8] sm:$0xff]
          %v4242 = vld [vmem:[#allocation2 + $0xc0] sm:$0xff]
          %v4243 = vld [vmem:[#allocation2 + $0xc8] sm:$0xff]
          %v4244 = vld [vmem:[#allocation2 + $0xd0] sm:$0xff]
          %v4245 = vld [vmem:[#allocation2 + $0xd8] sm:$0xff]
          %v4246 = vld [vmem:[#allocation2 + $0xe0] sm:$0xff]
          %v4247 = vld [vmem:[#allocation2 + $0xe8] sm:$0xff]
          %v4248 = vld [vmem:[#allocation2 + $0xf0] sm:$0xff]
          %v4249 = vld [vmem:[#allocation2 + $0xf8] sm:$0xff]
          %v4250 = vld [vmem:[#allocation2 + $0x100] sm:$0xff]
          %v4251 = vld [vmem:[#allocation2 + $0x108] sm:$0xff]
          %v4252 = vld [vmem:[#allocation2 + $0x110] sm:$0xff]
          %v4253 = vld [vmem:[#allocation2 + $0x118] sm:$0xff]
          %v4254 = vld [vmem:[#allocation2 + $0x120] sm:$0xff]
          %v4255 = vld [vmem:[#allocation2 + $0x128] sm:$0xff]
          %v4256 = vld [vmem:[#allocation2 + $0x130] sm:$0xff]
          %v4257 = vld [vmem:[#allocation2 + $0x138] sm:$0xff]
          %v4258 = vld [vmem:[#allocation2 + $0x140] sm:$0xff]
          %v4259 = vld [vmem:[#allocation2 + $0x148] sm:$0xff]
          %v4260 = vld [vmem:[#allocation2 + $0x150] sm:$0xff]
          %v4261 = vld [vmem:[#allocation2 + $0x158] sm:$0xff]
          %v4262 = vld [vmem:[#allocation2 + $0x160] sm:$0xff]
          %v4263 = vld [vmem:[#allocation2 + $0x168] sm:$0xff]
          %v4264 = vld [vmem:[#allocation2 + $0x170] sm:$0xff]
          %v4265 = vld [vmem:[#allocation2 + $0x178] sm:$0xff]
          %v4266 = vld [vmem:[#allocation2 + $0x180] sm:$0xff]
          %v4267 = vld [vmem:[#allocation2 + $0x188] sm:$0xff]
          %v4268 = vld [vmem:[#allocation2 + $0x190] sm:$0xff]
          %v4269 = vld [vmem:[#allocation2 + $0x198] sm:$0xff]
          %v4270 = vld [vmem:[#allocation2 + $0x1a0] sm:$0xff]
          %v4271 = vld [vmem:[#allocation2 + $0x1a8] sm:$0xff]
          %v4272 = vld [vmem:[#allocation2 + $0x1b0] sm:$0xff]
          %v4273 = vld [vmem:[#allocation2 + $0x1b8] sm:$0xff]
          %v4274 = vld [vmem:[#allocation2 + $0x1c0] sm:$0xff]
          %v4275 = vld [vmem:[#allocation2 + $0x1c8] sm:$0xff]
          %v4276 = vld [vmem:[#allocation2 + $0x1d0] sm:$0xff]
          %v4277 = vld [vmem:[#allocation2 + $0x1d8] sm:$0xff]
          %v4278 = vld [vmem:[#allocation2 + $0x1e0] sm:$0xff]
          %v4279 = vld [vmem:[#allocation2 + $0x1e8] sm:$0xff]
          %v4280 = vld [vmem:[#allocation2 + $0x1f0] sm:$0xff]
          %v4281 = vld [vmem:[#allocation2 + $0x1f8] sm:$0xff]
          %v4282 = vld [vmem:[#allocation2 + $0x200] sm:$0xff]
          %v4283 = vld [vmem:[#allocation2 + $0x208] sm:$0xff]
          %v4284 = vld [vmem:[#allocation2 + $0x210] sm:$0xff]
          %v4285 = vld [vmem:[#allocation2 + $0x218] sm:$0xff]
          %v4286 = vld [vmem:[#allocation2 + $0x220] sm:$0xff]
          %v4287 = vld [vmem:[#allocation2 + $0x228] sm:$0xff]
          %v4288 = vld [vmem:[#allocation2 + $0x230] sm:$0xff]
          %v4289 = vld [vmem:[#allocation2 + $0x238] sm:$0xff]
          %v4290 = vld [vmem:[#allocation2 + $0x240] sm:$0xff]
          %v4291 = vld [vmem:[#allocation2 + $0x248] sm:$0xff]
          %v4292 = vld [vmem:[#allocation2 + $0x250] sm:$0xff]
          %v4293 = vld [vmem:[#allocation2 + $0x258] sm:$0xff]
          %v4294 = vld [vmem:[#allocation2 + $0x260] sm:$0xff]
          %v4295 = vld [vmem:[#allocation2 + $0x268] sm:$0xff]
          %v4296 = vld [vmem:[#allocation2 + $0x270] sm:$0xff]
          %v4297 = vld [vmem:[#allocation2 + $0x278] sm:$0xff]
          %v4298 = vld [vmem:[#allocation2 + $0x280] sm:$0xff]
          %v4299 = vld [vmem:[#allocation2 + $0x288] sm:$0xff]
          %v4300 = vld [vmem:[#allocation2 + $0x290] sm:$0xff]
          %v4301 = vld [vmem:[#allocation2 + $0x298] sm:$0xff]
          %v4302 = vld [vmem:[#allocation2 + $0x2a0] sm:$0xff]
          %v4303 = vld [vmem:[#allocation2 + $0x2a8] sm:$0xff]
          %v4304 = vld [vmem:[#allocation2 + $0x2b0] sm:$0xff]
          %v4305 = vld [vmem:[#allocation2 + $0x2b8] sm:$0xff]
          %v4306 = vld [vmem:[#allocation2 + $0x2c0] sm:$0xff]
          %v4307 = vld [vmem:[#allocation2 + $0x2c8] sm:$0xff]
          %v4308 = vld [vmem:[#allocation2 + $0x2d0] sm:$0xff]
          %v4309 = vld [vmem:[#allocation2 + $0x2d8] sm:$0xff]
          %v4310 = vld [vmem:[#allocation2 + $0x2e0] sm:$0xff]
          %v4311 = vld [vmem:[#allocation2 + $0x2e8] sm:$0xff]
          %v4312 = vld [vmem:[#allocation2 + $0x2f0] sm:$0xff]
          %v4313 = vld [vmem:[#allocation2 + $0x2f8] sm:$0xff]
          %v4314 = vld [vmem:[#allocation2 + $0x300] sm:$0xff]
          %v4315 = vld [vmem:[#allocation2 + $0x308] sm:$0xff]
          %v4316 = vld [vmem:[#allocation2 + $0x310] sm:$0xff]
          %v4317 = vld [vmem:[#allocation2 + $0x318] sm:$0xff]
          %v4318 = vld [vmem:[#allocation2 + $0x320] sm:$0xff]
          %v4319 = vld [vmem:[#allocation2 + $0x328] sm:$0xff]
          %v4320 = vld [vmem:[#allocation2 + $0x330] sm:$0xff]
          %v4321 = vld [vmem:[#allocation2 + $0x338] sm:$0xff]
          %v4322 = vld [vmem:[#allocation2 + $0x340] sm:$0xff]
          %v4323 = vld [vmem:[#allocation2 + $0x348] sm:$0xff]
          %v4324 = vld [vmem:[#allocation2 + $0x350] sm:$0xff]
          %v4325 = vld [vmem:[#allocation2 + $0x358] sm:$0xff]
          %v4326 = vld [vmem:[#allocation2 + $0x360] sm:$0xff]
          %v4327 = vld [vmem:[#allocation2 + $0x368] sm:$0xff]
          %v4328 = vld [vmem:[#allocation2 + $0x370] sm:$0xff]
          %v4329 = vld [vmem:[#allocation2 + $0x378] sm:$0xff]
          %v4330 = vld [vmem:[#allocation2 + $0x380] sm:$0xff]
          %v4331 = vld [vmem:[#allocation2 + $0x388] sm:$0xff]
          %v4332 = vld [vmem:[#allocation2 + $0x390] sm:$0xff]
          %v4333 = vld [vmem:[#allocation2 + $0x398] sm:$0xff]
          %v4334 = vld [vmem:[#allocation2 + $0x3a0] sm:$0xff]
          %v4335 = vld [vmem:[#allocation2 + $0x3a8] sm:$0xff]
          %v4336 = vld [vmem:[#allocation2 + $0x3b0] sm:$0xff]
          %v4337 = vld [vmem:[#allocation2 + $0x3b8] sm:$0xff]
          %v4338 = vld [vmem:[#allocation2 + $0x3c0] sm:$0xff]
          %v4339 = vld [vmem:[#allocation2 + $0x3c8] sm:$0xff]
          %v4340 = vld [vmem:[#allocation2 + $0x3d0] sm:$0xff]
          %v4341 = vld [vmem:[#allocation2 + $0x3d8] sm:$0xff]
          %v4342 = vld [vmem:[#allocation2 + $0x3e0] sm:$0xff]
          %v4343 = vld [vmem:[#allocation2 + $0x3e8] sm:$0xff]
          %v4344 = vld [vmem:[#allocation2 + $0x3f0] sm:$0xff]
          %v4345 = vld [vmem:[#allocation2 + $0x3f8] sm:$0xff]
          %v4346 = vld [vmem:[#allocation2 + $0x400] sm:$0xff]
          %v4347 = vld [vmem:[#allocation2 + $0x408] sm:$0xff]
          %v4348 = vld [vmem:[#allocation2 + $0x410] sm:$0xff]
          %v4349 = vld [vmem:[#allocation2 + $0x418] sm:$0xff]
          %v4350 = vld [vmem:[#allocation2 + $0x420] sm:$0xff]
          %v4351 = vld [vmem:[#allocation2 + $0x428] sm:$0xff]
          %v4352 = vld [vmem:[#allocation2 + $0x430] sm:$0xff]
          %v4353 = vld [vmem:[#allocation2 + $0x438] sm:$0xff]
          %v4354 = vld [vmem:[#allocation2 + $0x440] sm:$0xff]
          %v4355 = vld [vmem:[#allocation2 + $0x448] sm:$0xff]
          %v4356 = vld [vmem:[#allocation2 + $0x450] sm:$0xff]
          %v4357 = vld [vmem:[#allocation2 + $0x458] sm:$0xff]
          %v4358 = vld [vmem:[#allocation2 + $0x460] sm:$0xff]
          %v4359 = vld [vmem:[#allocation2 + $0x468] sm:$0xff]
          %v4360 = vld [vmem:[#allocation2 + $0x470] sm:$0xff]
          %v4361 = vld [vmem:[#allocation2 + $0x478] sm:$0xff]
          %v4362 = vld [vmem:[#allocation2 + $0x480] sm:$0xff]
          %v4363 = vld [vmem:[#allocation2 + $0x488] sm:$0xff]
          %v4364 = vld [vmem:[#allocation2 + $0x490] sm:$0xff]
          %v4365 = vld [vmem:[#allocation2 + $0x498] sm:$0xff]
          %v4366 = vld [vmem:[#allocation2 + $0x4a0] sm:$0xff]
          %v4367 = vld [vmem:[#allocation2 + $0x4a8] sm:$0xff]
          %v4368 = vld [vmem:[#allocation2 + $0x4b0] sm:$0xff]
          %v4369 = vld [vmem:[#allocation2 + $0x4b8] sm:$0xff]
          %v4370 = vld [vmem:[#allocation2 + $0x4c0] sm:$0xff]
          %v4371 = vld [vmem:[#allocation2 + $0x4c8] sm:$0xff]
          %v4372 = vld [vmem:[#allocation2 + $0x4d0] sm:$0xff]
          %v4373 = vld [vmem:[#allocation2 + $0x4d8] sm:$0xff]
          %v4374 = vld [vmem:[#allocation2 + $0x4e0] sm:$0xff]
          %v4375 = vld [vmem:[#allocation2 + $0x4e8] sm:$0xff]
          %v4376 = vld [vmem:[#allocation2 + $0x4f0] sm:$0xff]
          %v4377 = vld [vmem:[#allocation2 + $0x4f8] sm:$0xff]
          %v4378 = vld [vmem:[#allocation2 + $0x500] sm:$0xff]
          %v4379 = vld [vmem:[#allocation2 + $0x508] sm:$0xff]
          %v4380 = vld [vmem:[#allocation2 + $0x510] sm:$0xff]
          %v4381 = vld [vmem:[#allocation2 + $0x518] sm:$0xff]
          %v4382 = vld [vmem:[#allocation2 + $0x520] sm:$0xff]
          %v4383 = vld [vmem:[#allocation2 + $0x528] sm:$0xff]
          %v4384 = vld [vmem:[#allocation2 + $0x530] sm:$0xff]
          %v4385 = vld [vmem:[#allocation2 + $0x538] sm:$0xff]
          %v4386 = vld [vmem:[#allocation2 + $0x540] sm:$0xff]
          %v4387 = vld [vmem:[#allocation2 + $0x548] sm:$0xff]
          %v4388 = vld [vmem:[#allocation2 + $0x550] sm:$0xff]
          %v4389 = vld [vmem:[#allocation2 + $0x558] sm:$0xff]
          %v4390 = vld [vmem:[#allocation2 + $0x560] sm:$0xff]
          %v4391 = vld [vmem:[#allocation2 + $0x568] sm:$0xff]
          %v4392 = vld [vmem:[#allocation2 + $0x570] sm:$0xff]
          %v4393 = vld [vmem:[#allocation2 + $0x578] sm:$0xff]
          %v4394 = vld [vmem:[#allocation2 + $0x580] sm:$0xff]
          %v4395 = vld [vmem:[#allocation2 + $0x588] sm:$0xff]
          %v4396 = vld [vmem:[#allocation2 + $0x590] sm:$0xff]
          %v4397 = vld [vmem:[#allocation2 + $0x598] sm:$0xff]
          %v4398 = vld [vmem:[#allocation2 + $0x5a0] sm:$0xff]
          %v4399 = vld [vmem:[#allocation2 + $0x5a8] sm:$0xff]
          %v4400 = vld [vmem:[#allocation2 + $0x5b0] sm:$0xff]
          %v4401 = vld [vmem:[#allocation2 + $0x5b8] sm:$0xff]
          %v4402 = vld [vmem:[#allocation2 + $0x5c0] sm:$0xff]
          %v4403 = vld [vmem:[#allocation2 + $0x5c8] sm:$0xff]
          %v4404 = vld [vmem:[#allocation2 + $0x5d0] sm:$0xff]
          %v4405 = vld [vmem:[#allocation2 + $0x5d8] sm:$0xff]
          %v4406 = vld [vmem:[#allocation2 + $0x5e0] sm:$0xff]
          %v4407 = vld [vmem:[#allocation2 + $0x5e8] sm:$0xff]
          %v4408 = vld [vmem:[#allocation2 + $0x5f0] sm:$0xff]
          %v4409 = vld [vmem:[#allocation2 + $0x5f8] sm:$0xff]
          %v4410 = vld [vmem:[#allocation2 + $0x600] sm:$0xff]
          %v4411 = vld [vmem:[#allocation2 + $0x608] sm:$0xff]
          %v4412 = vld [vmem:[#allocation2 + $0x610] sm:$0xff]
          %v4413 = vld [vmem:[#allocation2 + $0x618] sm:$0xff]
          %v4414 = vld [vmem:[#allocation2 + $0x620] sm:$0xff]
          %v4415 = vld [vmem:[#allocation2 + $0x628] sm:$0xff]
          %v4416 = vld [vmem:[#allocation2 + $0x630] sm:$0xff]
          %v4417 = vld [vmem:[#allocation2 + $0x638] sm:$0xff]
          %v4418 = vld [vmem:[#allocation2 + $0x640] sm:$0xff]
          %v4419 = vld [vmem:[#allocation2 + $0x648] sm:$0xff]
          %v4420 = vld [vmem:[#allocation2 + $0x650] sm:$0xff]
          %v4421 = vld [vmem:[#allocation2 + $0x658] sm:$0xff]
          %v4422 = vld [vmem:[#allocation2 + $0x660] sm:$0xff]
          %v4423 = vld [vmem:[#allocation2 + $0x668] sm:$0xff]
          %v4424 = vld [vmem:[#allocation2 + $0x670] sm:$0xff]
          %v4425 = vld [vmem:[#allocation2 + $0x678] sm:$0xff]
          %v4426 = vld [vmem:[#allocation2 + $0x680] sm:$0xff]
          %v4427 = vld [vmem:[#allocation2 + $0x688] sm:$0xff]
          %v4428 = vld [vmem:[#allocation2 + $0x690] sm:$0xff]
          %v4429 = vld [vmem:[#allocation2 + $0x698] sm:$0xff]
          %v4430 = vld [vmem:[#allocation2 + $0x6a0] sm:$0xff]
          %v4431 = vld [vmem:[#allocation2 + $0x6a8] sm:$0xff]
          %v4432 = vld [vmem:[#allocation2 + $0x6b0] sm:$0xff]
          %v4433 = vld [vmem:[#allocation2 + $0x6b8] sm:$0xff]
          %v4434 = vld [vmem:[#allocation2 + $0x6c0] sm:$0xff]
          %v4435 = vld [vmem:[#allocation2 + $0x6c8] sm:$0xff]
          %v4436 = vld [vmem:[#allocation2 + $0x6d0] sm:$0xff]
          %v4437 = vld [vmem:[#allocation2 + $0x6d8] sm:$0xff]
          %v4438 = vld [vmem:[#allocation2 + $0x6e0] sm:$0xff]
          %v4439 = vld [vmem:[#allocation2 + $0x6e8] sm:$0xff]
          %v4440 = vld [vmem:[#allocation2 + $0x6f0] sm:$0xff]
          %v4441 = vld [vmem:[#allocation2 + $0x6f8] sm:$0xff]
          %v4442 = vld [vmem:[#allocation2 + $0x700] sm:$0xff]
          %v4443 = vld [vmem:[#allocation2 + $0x708] sm:$0xff]
          %v4444 = vld [vmem:[#allocation2 + $0x710] sm:$0xff]
          %v4445 = vld [vmem:[#allocation2 + $0x718] sm:$0xff]
          %v4446 = vld [vmem:[#allocation2 + $0x720] sm:$0xff]
          %v4447 = vld [vmem:[#allocation2 + $0x728] sm:$0xff]
          %v4448 = vld [vmem:[#allocation2 + $0x730] sm:$0xff]
          %v4449 = vld [vmem:[#allocation2 + $0x738] sm:$0xff]
          %v4450 = vld [vmem:[#allocation2 + $0x740] sm:$0xff]
          %v4451 = vld [vmem:[#allocation2 + $0x748] sm:$0xff]
          %v4452 = vld [vmem:[#allocation2 + $0x750] sm:$0xff]
          %v4453 = vld [vmem:[#allocation2 + $0x758] sm:$0xff]
          %v4454 = vld [vmem:[#allocation2 + $0x760] sm:$0xff]
          %v4455 = vld [vmem:[#allocation2 + $0x768] sm:$0xff]
          %v4456 = vld [vmem:[#allocation2 + $0x770] sm:$0xff]
          %v4457 = vld [vmem:[#allocation2 + $0x778] sm:$0xff]
          %v4458 = vld [vmem:[#allocation2 + $0x780] sm:$0xff]
          %v4459 = vld [vmem:[#allocation2 + $0x788] sm:$0xff]
          %v4460 = vld [vmem:[#allocation2 + $0x790] sm:$0xff]
          %v4461 = vld [vmem:[#allocation2 + $0x798] sm:$0xff]
          %v4462 = vld [vmem:[#allocation2 + $0x7a0] sm:$0xff]
          %v4463 = vld [vmem:[#allocation2 + $0x7a8] sm:$0xff]
          %v4464 = vld [vmem:[#allocation2 + $0x7b0] sm:$0xff]
          %v4465 = vld [vmem:[#allocation2 + $0x7b8] sm:$0xff]
          %v4466 = vld [vmem:[#allocation2 + $0x7c0] sm:$0xff]
          %v4467 = vld [vmem:[#allocation2 + $0x7c8] sm:$0xff]
          %v4468 = vld [vmem:[#allocation2 + $0x7d0] sm:$0xff]
          %v4469 = vld [vmem:[#allocation2 + $0x7d8] sm:$0xff]
          %v4470 = vld [vmem:[#allocation2 + $0x7e0] sm:$0xff]
          %v4471 = vld [vmem:[#allocation2 + $0x7e8] sm:$0xff]
          %v4472 = vld [vmem:[#allocation2 + $0x7f0] sm:$0xff]
          %v4473 = vld [vmem:[#allocation2 + $0x7f8] sm:$0xff]
          %v4474 = vpack.c.bf16 %v4222, %v4218
          %v4475 = vpack.c.bf16 %v4223, %v4219
          %v4476 = vpack.c.bf16 %v4224, %v4220
          %v4477 = vpack.c.bf16 %v4225, %v4221
          %v4478 = vpack.c.bf16 %v4230, %v4226
          %v4479 = vpack.c.bf16 %v4231, %v4227
          %v4480 = vpack.c.bf16 %v4232, %v4228
          %v4481 = vpack.c.bf16 %v4233, %v4229
          %v4482 = vpack.c.bf16 %v4238, %v4234
          %v4483 = vpack.c.bf16 %v4239, %v4235
          %v4484 = vpack.c.bf16 %v4240, %v4236
          %v4485 = vpack.c.bf16 %v4241, %v4237
          %v4486 = vpack.c.bf16 %v4246, %v4242
          %v4487 = vpack.c.bf16 %v4247, %v4243
          %v4488 = vpack.c.bf16 %v4248, %v4244
          %v4489 = vpack.c.bf16 %v4249, %v4245
          %v4490 = vpack.c.bf16 %v4254, %v4250
          %v4491 = vpack.c.bf16 %v4255, %v4251
          %v4492 = vpack.c.bf16 %v4256, %v4252
          %v4493 = vpack.c.bf16 %v4257, %v4253
          %v4494 = vpack.c.bf16 %v4262, %v4258
          %v4495 = vpack.c.bf16 %v4263, %v4259
          %v4496 = vpack.c.bf16 %v4264, %v4260
          %v4497 = vpack.c.bf16 %v4265, %v4261
          %v4498 = vpack.c.bf16 %v4270, %v4266
          %v4499 = vpack.c.bf16 %v4271, %v4267
          %v4500 = vpack.c.bf16 %v4272, %v4268
          %v4501 = vpack.c.bf16 %v4273, %v4269
          %v4502 = vpack.c.bf16 %v4278, %v4274
          %v4503 = vpack.c.bf16 %v4279, %v4275
          %v4504 = vpack.c.bf16 %v4280, %v4276
          %v4505 = vpack.c.bf16 %v4281, %v4277
          %v4506 = vpack.c.bf16 %v4286, %v4282
          %v4507 = vpack.c.bf16 %v4287, %v4283
          %v4508 = vpack.c.bf16 %v4288, %v4284
          %v4509 = vpack.c.bf16 %v4289, %v4285
          %v4510 = vpack.c.bf16 %v4294, %v4290
          %v4511 = vpack.c.bf16 %v4295, %v4291
          %v4512 = vpack.c.bf16 %v4296, %v4292
          %v4513 = vpack.c.bf16 %v4297, %v4293
          %v4514 = vpack.c.bf16 %v4302, %v4298
          %v4515 = vpack.c.bf16 %v4303, %v4299
          %v4516 = vpack.c.bf16 %v4304, %v4300
          %v4517 = vpack.c.bf16 %v4305, %v4301
          %v4518 = vpack.c.bf16 %v4310, %v4306
          %v4519 = vpack.c.bf16 %v4311, %v4307
          %v4520 = vpack.c.bf16 %v4312, %v4308
          %v4521 = vpack.c.bf16 %v4313, %v4309
          %v4522 = vpack.c.bf16 %v4318, %v4314
          %v4523 = vpack.c.bf16 %v4319, %v4315
          %v4524 = vpack.c.bf16 %v4320, %v4316
          %v4525 = vpack.c.bf16 %v4321, %v4317
          %v4526 = vpack.c.bf16 %v4326, %v4322
          %v4527 = vpack.c.bf16 %v4327, %v4323
          %v4528 = vpack.c.bf16 %v4328, %v4324
          %v4529 = vpack.c.bf16 %v4329, %v4325
          %v4530 = vpack.c.bf16 %v4334, %v4330
          %v4531 = vpack.c.bf16 %v4335, %v4331
          %v4532 = vpack.c.bf16 %v4336, %v4332
          %v4533 = vpack.c.bf16 %v4337, %v4333
          %v4534 = vpack.c.bf16 %v4342, %v4338
          %v4535 = vpack.c.bf16 %v4343, %v4339
          %v4536 = vpack.c.bf16 %v4344, %v4340
          %v4537 = vpack.c.bf16 %v4345, %v4341
          %v4538 = vpack.c.bf16 %v4350, %v4346
          %v4539 = vpack.c.bf16 %v4351, %v4347
          %v4540 = vpack.c.bf16 %v4352, %v4348
          %v4541 = vpack.c.bf16 %v4353, %v4349
          %v4542 = vpack.c.bf16 %v4358, %v4354
          %v4543 = vpack.c.bf16 %v4359, %v4355
          %v4544 = vpack.c.bf16 %v4360, %v4356
          %v4545 = vpack.c.bf16 %v4361, %v4357
          %v4546 = vpack.c.bf16 %v4366, %v4362
          %v4547 = vpack.c.bf16 %v4367, %v4363
          %v4548 = vpack.c.bf16 %v4368, %v4364
          %v4549 = vpack.c.bf16 %v4369, %v4365
          %v4550 = vpack.c.bf16 %v4374, %v4370
          %v4551 = vpack.c.bf16 %v4375, %v4371
          %v4552 = vpack.c.bf16 %v4376, %v4372
          %v4553 = vpack.c.bf16 %v4377, %v4373
          %v4554 = vpack.c.bf16 %v4382, %v4378
          %v4555 = vpack.c.bf16 %v4383, %v4379
          %v4556 = vpack.c.bf16 %v4384, %v4380
          %v4557 = vpack.c.bf16 %v4385, %v4381
          %v4558 = vpack.c.bf16 %v4390, %v4386
          %v4559 = vpack.c.bf16 %v4391, %v4387
          %v4560 = vpack.c.bf16 %v4392, %v4388
          %v4561 = vpack.c.bf16 %v4393, %v4389
          %v4562 = vpack.c.bf16 %v4398, %v4394
          %v4563 = vpack.c.bf16 %v4399, %v4395
          %v4564 = vpack.c.bf16 %v4400, %v4396
          %v4565 = vpack.c.bf16 %v4401, %v4397
          %v4566 = vpack.c.bf16 %v4406, %v4402
          %v4567 = vpack.c.bf16 %v4407, %v4403
          %v4568 = vpack.c.bf16 %v4408, %v4404
          %v4569 = vpack.c.bf16 %v4409, %v4405
          %v4570 = vpack.c.bf16 %v4414, %v4410
          %v4571 = vpack.c.bf16 %v4415, %v4411
          %v4572 = vpack.c.bf16 %v4416, %v4412
          %v4573 = vpack.c.bf16 %v4417, %v4413
          %v4574 = vpack.c.bf16 %v4422, %v4418
          %v4575 = vpack.c.bf16 %v4423, %v4419
          %v4576 = vpack.c.bf16 %v4424, %v4420
          %v4577 = vpack.c.bf16 %v4425, %v4421
          %v4578 = vpack.c.bf16 %v4430, %v4426
          %v4579 = vpack.c.bf16 %v4431, %v4427
          %v4580 = vpack.c.bf16 %v4432, %v4428
          %v4581 = vpack.c.bf16 %v4433, %v4429
          %v4582 = vpack.c.bf16 %v4438, %v4434
          %v4583 = vpack.c.bf16 %v4439, %v4435
          %v4584 = vpack.c.bf16 %v4440, %v4436
          %v4585 = vpack.c.bf16 %v4441, %v4437
          %v4586 = vpack.c.bf16 %v4446, %v4442
          %v4587 = vpack.c.bf16 %v4447, %v4443
          %v4588 = vpack.c.bf16 %v4448, %v4444
          %v4589 = vpack.c.bf16 %v4449, %v4445
          %v4590 = vpack.c.bf16 %v4454, %v4450
          %v4591 = vpack.c.bf16 %v4455, %v4451
          %v4592 = vpack.c.bf16 %v4456, %v4452
          %v4593 = vpack.c.bf16 %v4457, %v4453
          %v4594 = vpack.c.bf16 %v4462, %v4458
          %v4595 = vpack.c.bf16 %v4463, %v4459
          %v4596 = vpack.c.bf16 %v4464, %v4460
          %v4597 = vpack.c.bf16 %v4465, %v4461
          %v4598 = vpack.c.bf16 %v4470, %v4466
          %v4599 = vpack.c.bf16 %v4471, %v4467
          %v4600 = vpack.c.bf16 %v4472, %v4468
          %v4601 = vpack.c.bf16 %v4473, %v4469
          %v4730 = vunpack.c.l.b16 %v4474
          %v4731 = vunpack.c.l.b16 %v4475
          %v4732 = vunpack.c.l.b16 %v4476
          %v4733 = vunpack.c.l.b16 %v4477
          %v4734 = vunpack.c.h.b16 %v4474
          %v4735 = vunpack.c.h.b16 %v4475
          %v4736 = vunpack.c.h.b16 %v4476
          %v4737 = vunpack.c.h.b16 %v4477
          %v4738 = vunpack.c.l.b16 %v4478
          %v4739 = vunpack.c.l.b16 %v4479
          %v4740 = vunpack.c.l.b16 %v4480
          %v4741 = vunpack.c.l.b16 %v4481
          %v4742 = vunpack.c.h.b16 %v4478
          %v4743 = vunpack.c.h.b16 %v4479
          %v4744 = vunpack.c.h.b16 %v4480
          %v4745 = vunpack.c.h.b16 %v4481
          %v4746 = vunpack.c.l.b16 %v4482
          %v4747 = vunpack.c.l.b16 %v4483
          %v4748 = vunpack.c.l.b16 %v4484
          %v4749 = vunpack.c.l.b16 %v4485
          %v4750 = vunpack.c.h.b16 %v4482
          %v4751 = vunpack.c.h.b16 %v4483
          %v4752 = vunpack.c.h.b16 %v4484
          %v4753 = vunpack.c.h.b16 %v4485
          %v4754 = vunpack.c.l.b16 %v4486
          %v4755 = vunpack.c.l.b16 %v4487
          %v4756 = vunpack.c.l.b16 %v4488
          %v4757 = vunpack.c.l.b16 %v4489
          %v4758 = vunpack.c.h.b16 %v4486
          %v4759 = vunpack.c.h.b16 %v4487
          %v4760 = vunpack.c.h.b16 %v4488
          %v4761 = vunpack.c.h.b16 %v4489
          %v4762 = vunpack.c.l.b16 %v4490
          %v4763 = vunpack.c.l.b16 %v4491
          %v4764 = vunpack.c.l.b16 %v4492
          %v4765 = vunpack.c.l.b16 %v4493
          %v4766 = vunpack.c.h.b16 %v4490
          %v4767 = vunpack.c.h.b16 %v4491
          %v4768 = vunpack.c.h.b16 %v4492
          %v4769 = vunpack.c.h.b16 %v4493
          %v4770 = vunpack.c.l.b16 %v4494
          %v4771 = vunpack.c.l.b16 %v4495
          %v4772 = vunpack.c.l.b16 %v4496
          %v4773 = vunpack.c.l.b16 %v4497
          %v4774 = vunpack.c.h.b16 %v4494
          %v4775 = vunpack.c.h.b16 %v4495
          %v4776 = vunpack.c.h.b16 %v4496
          %v4777 = vunpack.c.h.b16 %v4497
          %v4778 = vunpack.c.l.b16 %v4498
          %v4779 = vunpack.c.l.b16 %v4499
          %v4780 = vunpack.c.l.b16 %v4500
          %v4781 = vunpack.c.l.b16 %v4501
          %v4782 = vunpack.c.h.b16 %v4498
          %v4783 = vunpack.c.h.b16 %v4499
          %v4784 = vunpack.c.h.b16 %v4500
          %v4785 = vunpack.c.h.b16 %v4501
          %v4786 = vunpack.c.l.b16 %v4502
          %v4787 = vunpack.c.l.b16 %v4503
          %v4788 = vunpack.c.l.b16 %v4504
          %v4789 = vunpack.c.l.b16 %v4505
          %v4790 = vunpack.c.h.b16 %v4502
          %v4791 = vunpack.c.h.b16 %v4503
          %v4792 = vunpack.c.h.b16 %v4504
          %v4793 = vunpack.c.h.b16 %v4505
          %v4794 = vunpack.c.l.b16 %v4506
          %v4795 = vunpack.c.l.b16 %v4507
          %v4796 = vunpack.c.l.b16 %v4508
          %v4797 = vunpack.c.l.b16 %v4509
          %v4798 = vunpack.c.h.b16 %v4506
          %v4799 = vunpack.c.h.b16 %v4507
          %v4800 = vunpack.c.h.b16 %v4508
          %v4801 = vunpack.c.h.b16 %v4509
          %v4802 = vunpack.c.l.b16 %v4510
          %v4803 = vunpack.c.l.b16 %v4511
          %v4804 = vunpack.c.l.b16 %v4512
          %v4805 = vunpack.c.l.b16 %v4513
          %v4806 = vunpack.c.h.b16 %v4510
          %v4807 = vunpack.c.h.b16 %v4511
          %v4808 = vunpack.c.h.b16 %v4512
          %v4809 = vunpack.c.h.b16 %v4513
          %v4810 = vunpack.c.l.b16 %v4514
          %v4811 = vunpack.c.l.b16 %v4515
          %v4812 = vunpack.c.l.b16 %v4516
          %v4813 = vunpack.c.l.b16 %v4517
          %v4814 = vunpack.c.h.b16 %v4514
          %v4815 = vunpack.c.h.b16 %v4515
          %v4816 = vunpack.c.h.b16 %v4516
          %v4817 = vunpack.c.h.b16 %v4517
          %v4818 = vunpack.c.l.b16 %v4518
          %v4819 = vunpack.c.l.b16 %v4519
          %v4820 = vunpack.c.l.b16 %v4520
          %v4821 = vunpack.c.l.b16 %v4521
          %v4822 = vunpack.c.h.b16 %v4518
          %v4823 = vunpack.c.h.b16 %v4519
          %v4824 = vunpack.c.h.b16 %v4520
          %v4825 = vunpack.c.h.b16 %v4521
          %v4826 = vunpack.c.l.b16 %v4522
          %v4827 = vunpack.c.l.b16 %v4523
          %v4828 = vunpack.c.l.b16 %v4524
          %v4829 = vunpack.c.l.b16 %v4525
          %v4830 = vunpack.c.h.b16 %v4522
          %v4831 = vunpack.c.h.b16 %v4523
          %v4832 = vunpack.c.h.b16 %v4524
          %v4833 = vunpack.c.h.b16 %v4525
          %v4834 = vunpack.c.l.b16 %v4526
          %v4835 = vunpack.c.l.b16 %v4527
          %v4836 = vunpack.c.l.b16 %v4528
          %v4837 = vunpack.c.l.b16 %v4529
          %v4838 = vunpack.c.h.b16 %v4526
          %v4839 = vunpack.c.h.b16 %v4527
          %v4840 = vunpack.c.h.b16 %v4528
          %v4841 = vunpack.c.h.b16 %v4529
          %v4842 = vunpack.c.l.b16 %v4530
          %v4843 = vunpack.c.l.b16 %v4531
          %v4844 = vunpack.c.l.b16 %v4532
          %v4845 = vunpack.c.l.b16 %v4533
          %v4846 = vunpack.c.h.b16 %v4530
          %v4847 = vunpack.c.h.b16 %v4531
          %v4848 = vunpack.c.h.b16 %v4532
          %v4849 = vunpack.c.h.b16 %v4533
          %v4850 = vunpack.c.l.b16 %v4534
          %v4851 = vunpack.c.l.b16 %v4535
          %v4852 = vunpack.c.l.b16 %v4536
          %v4853 = vunpack.c.l.b16 %v4537
          %v4854 = vunpack.c.h.b16 %v4534
          %v4855 = vunpack.c.h.b16 %v4535
          %v4856 = vunpack.c.h.b16 %v4536
          %v4857 = vunpack.c.h.b16 %v4537
          %v4858 = vunpack.c.l.b16 %v4538
          %v4859 = vunpack.c.l.b16 %v4539
          %v4860 = vunpack.c.l.b16 %v4540
          %v4861 = vunpack.c.l.b16 %v4541
          %v4862 = vunpack.c.h.b16 %v4538
          %v4863 = vunpack.c.h.b16 %v4539
          %v4864 = vunpack.c.h.b16 %v4540
          %v4865 = vunpack.c.h.b16 %v4541
          %v4866 = vunpack.c.l.b16 %v4542
          %v4867 = vunpack.c.l.b16 %v4543
          %v4868 = vunpack.c.l.b16 %v4544
          %v4869 = vunpack.c.l.b16 %v4545
          %v4870 = vunpack.c.h.b16 %v4542
          %v4871 = vunpack.c.h.b16 %v4543
          %v4872 = vunpack.c.h.b16 %v4544
          %v4873 = vunpack.c.h.b16 %v4545
          %v4874 = vunpack.c.l.b16 %v4546
          %v4875 = vunpack.c.l.b16 %v4547
          %v4876 = vunpack.c.l.b16 %v4548
          %v4877 = vunpack.c.l.b16 %v4549
          %v4878 = vunpack.c.h.b16 %v4546
          %v4879 = vunpack.c.h.b16 %v4547
          %v4880 = vunpack.c.h.b16 %v4548
          %v4881 = vunpack.c.h.b16 %v4549
          %v4882 = vunpack.c.l.b16 %v4550
          %v4883 = vunpack.c.l.b16 %v4551
          %v4884 = vunpack.c.l.b16 %v4552
          %v4885 = vunpack.c.l.b16 %v4553
          %v4886 = vunpack.c.h.b16 %v4550
          %v4887 = vunpack.c.h.b16 %v4551
          %v4888 = vunpack.c.h.b16 %v4552
          %v4889 = vunpack.c.h.b16 %v4553
          %v4890 = vunpack.c.l.b16 %v4554
          %v4891 = vunpack.c.l.b16 %v4555
          %v4892 = vunpack.c.l.b16 %v4556
          %v4893 = vunpack.c.l.b16 %v4557
          %v4894 = vunpack.c.h.b16 %v4554
          %v4895 = vunpack.c.h.b16 %v4555
          %v4896 = vunpack.c.h.b16 %v4556
          %v4897 = vunpack.c.h.b16 %v4557
          %v4898 = vunpack.c.l.b16 %v4558
          %v4899 = vunpack.c.l.b16 %v4559
          %v4900 = vunpack.c.l.b16 %v4560
          %v4901 = vunpack.c.l.b16 %v4561
          %v4902 = vunpack.c.h.b16 %v4558
          %v4903 = vunpack.c.h.b16 %v4559
          %v4904 = vunpack.c.h.b16 %v4560
          %v4905 = vunpack.c.h.b16 %v4561
          %v4906 = vunpack.c.l.b16 %v4562
          %v4907 = vunpack.c.l.b16 %v4563
          %v4908 = vunpack.c.l.b16 %v4564
          %v4909 = vunpack.c.l.b16 %v4565
          %v4910 = vunpack.c.h.b16 %v4562
          %v4911 = vunpack.c.h.b16 %v4563
          %v4912 = vunpack.c.h.b16 %v4564
          %v4913 = vunpack.c.h.b16 %v4565
          %v4914 = vunpack.c.l.b16 %v4566
          %v4915 = vunpack.c.l.b16 %v4567
          %v4916 = vunpack.c.l.b16 %v4568
          %v4917 = vunpack.c.l.b16 %v4569
          %v4918 = vunpack.c.h.b16 %v4566
          %v4919 = vunpack.c.h.b16 %v4567
          %v4920 = vunpack.c.h.b16 %v4568
          %v4921 = vunpack.c.h.b16 %v4569
          %v4922 = vunpack.c.l.b16 %v4570
          %v4923 = vunpack.c.l.b16 %v4571
          %v4924 = vunpack.c.l.b16 %v4572
          %v4925 = vunpack.c.l.b16 %v4573
          %v4926 = vunpack.c.h.b16 %v4570
          %v4927 = vunpack.c.h.b16 %v4571
          %v4928 = vunpack.c.h.b16 %v4572
          %v4929 = vunpack.c.h.b16 %v4573
          %v4930 = vunpack.c.l.b16 %v4574
          %v4931 = vunpack.c.l.b16 %v4575
          %v4932 = vunpack.c.l.b16 %v4576
          %v4933 = vunpack.c.l.b16 %v4577
          %v4934 = vunpack.c.h.b16 %v4574
          %v4935 = vunpack.c.h.b16 %v4575
          %v4936 = vunpack.c.h.b16 %v4576
          %v4937 = vunpack.c.h.b16 %v4577
          %v4938 = vunpack.c.l.b16 %v4578
          %v4939 = vunpack.c.l.b16 %v4579
          %v4940 = vunpack.c.l.b16 %v4580
          %v4941 = vunpack.c.l.b16 %v4581
          %v4942 = vunpack.c.h.b16 %v4578
          %v4943 = vunpack.c.h.b16 %v4579
          %v4944 = vunpack.c.h.b16 %v4580
          %v4945 = vunpack.c.h.b16 %v4581
          %v4946 = vunpack.c.l.b16 %v4582
          %v4947 = vunpack.c.l.b16 %v4583
          %v4948 = vunpack.c.l.b16 %v4584
          %v4949 = vunpack.c.l.b16 %v4585
          %v4950 = vunpack.c.h.b16 %v4582
          %v4951 = vunpack.c.h.b16 %v4583
          %v4952 = vunpack.c.h.b16 %v4584
          %v4953 = vunpack.c.h.b16 %v4585
          %v4954 = vunpack.c.l.b16 %v4586
          %v4955 = vunpack.c.l.b16 %v4587
          %v4956 = vunpack.c.l.b16 %v4588
          %v4957 = vunpack.c.l.b16 %v4589
          %v4958 = vunpack.c.h.b16 %v4586
          %v4959 = vunpack.c.h.b16 %v4587
          %v4960 = vunpack.c.h.b16 %v4588
          %v4961 = vunpack.c.h.b16 %v4589
          %v4962 = vunpack.c.l.b16 %v4590
          %v4963 = vunpack.c.l.b16 %v4591
          %v4964 = vunpack.c.l.b16 %v4592
          %v4965 = vunpack.c.l.b16 %v4593
          %v4966 = vunpack.c.h.b16 %v4590
          %v4967 = vunpack.c.h.b16 %v4591
          %v4968 = vunpack.c.h.b16 %v4592
          %v4969 = vunpack.c.h.b16 %v4593
          %v4970 = vunpack.c.l.b16 %v4594
          %v4971 = vunpack.c.l.b16 %v4595
          %v4972 = vunpack.c.l.b16 %v4596
          %v4973 = vunpack.c.l.b16 %v4597
          %v4974 = vunpack.c.h.b16 %v4594
          %v4975 = vunpack.c.h.b16 %v4595
          %v4976 = vunpack.c.h.b16 %v4596
          %v4977 = vunpack.c.h.b16 %v4597
          %v4978 = vunpack.c.l.b16 %v4598
          %v4979 = vunpack.c.l.b16 %v4599
          %v4980 = vunpack.c.l.b16 %v4600
          %v4981 = vunpack.c.l.b16 %v4601
          %v4982 = vunpack.c.h.b16 %v4598
          %v4983 = vunpack.c.h.b16 %v4599
          %v4984 = vunpack.c.h.b16 %v4600
          %v4985 = vunpack.c.h.b16 %v4601
          %v4986 = vpack.c.b16 %v4731, %v4730
          %v4987 = vpack.c.b16 %v4733, %v4732
          %v4988 = vpack.c.b16 %v4735, %v4734
          %v4989 = vpack.c.b16 %v4737, %v4736
          %v4990 = vpack.c.b16 %v4739, %v4738
          %v4991 = vpack.c.b16 %v4741, %v4740
          %v4992 = vpack.c.b16 %v4743, %v4742
          %v4993 = vpack.c.b16 %v4745, %v4744
          %v4994 = vpack.c.b16 %v4747, %v4746
          %v4995 = vpack.c.b16 %v4749, %v4748
          %v4996 = vpack.c.b16 %v4751, %v4750
          %v4997 = vpack.c.b16 %v4753, %v4752
          %v4998 = vpack.c.b16 %v4755, %v4754
          %v4999 = vpack.c.b16 %v4757, %v4756
          %v5000 = vpack.c.b16 %v4759, %v4758
          %v5001 = vpack.c.b16 %v4761, %v4760
          %v5002 = vpack.c.b16 %v4763, %v4762
          %v5003 = vpack.c.b16 %v4765, %v4764
          %v5004 = vpack.c.b16 %v4767, %v4766
          %v5005 = vpack.c.b16 %v4769, %v4768
          %v5006 = vpack.c.b16 %v4771, %v4770
          %v5007 = vpack.c.b16 %v4773, %v4772
          %v5008 = vpack.c.b16 %v4775, %v4774
          %v5009 = vpack.c.b16 %v4777, %v4776
          %v5010 = vpack.c.b16 %v4779, %v4778
          %v5011 = vpack.c.b16 %v4781, %v4780
          %v5012 = vpack.c.b16 %v4783, %v4782
          %v5013 = vpack.c.b16 %v4785, %v4784
          %v5014 = vpack.c.b16 %v4787, %v4786
          %v5015 = vpack.c.b16 %v4789, %v4788
          %v5016 = vpack.c.b16 %v4791, %v4790
          %v5017 = vpack.c.b16 %v4793, %v4792
          %v5018 = vpack.c.b16 %v4795, %v4794
          %v5019 = vpack.c.b16 %v4797, %v4796
          %v5020 = vpack.c.b16 %v4799, %v4798
          %v5021 = vpack.c.b16 %v4801, %v4800
          %v5022 = vpack.c.b16 %v4803, %v4802
          %v5023 = vpack.c.b16 %v4805, %v4804
          %v5024 = vpack.c.b16 %v4807, %v4806
          %v5025 = vpack.c.b16 %v4809, %v4808
          %v5026 = vpack.c.b16 %v4811, %v4810
          %v5027 = vpack.c.b16 %v4813, %v4812
          %v5028 = vpack.c.b16 %v4815, %v4814
          %v5029 = vpack.c.b16 %v4817, %v4816
          %v5030 = vpack.c.b16 %v4819, %v4818
          %v5031 = vpack.c.b16 %v4821, %v4820
          %v5032 = vpack.c.b16 %v4823, %v4822
          %v5033 = vpack.c.b16 %v4825, %v4824
          %v5034 = vpack.c.b16 %v4827, %v4826
          %v5035 = vpack.c.b16 %v4829, %v4828
          %v5036 = vpack.c.b16 %v4831, %v4830
          %v5037 = vpack.c.b16 %v4833, %v4832
          %v5038 = vpack.c.b16 %v4835, %v4834
          %v5039 = vpack.c.b16 %v4837, %v4836
          %v5040 = vpack.c.b16 %v4839, %v4838
          %v5041 = vpack.c.b16 %v4841, %v4840
          %v5042 = vpack.c.b16 %v4843, %v4842
          %v5043 = vpack.c.b16 %v4845, %v4844
          %v5044 = vpack.c.b16 %v4847, %v4846
          %v5045 = vpack.c.b16 %v4849, %v4848
          %v5046 = vpack.c.b16 %v4851, %v4850
          %v5047 = vpack.c.b16 %v4853, %v4852
          %v5048 = vpack.c.b16 %v4855, %v4854
          %v5049 = vpack.c.b16 %v4857, %v4856
          %v5050 = vpack.c.b16 %v4859, %v4858
          %v5051 = vpack.c.b16 %v4861, %v4860
          %v5052 = vpack.c.b16 %v4863, %v4862
          %v5053 = vpack.c.b16 %v4865, %v4864
          %v5054 = vpack.c.b16 %v4867, %v4866
          %v5055 = vpack.c.b16 %v4869, %v4868
          %v5056 = vpack.c.b16 %v4871, %v4870
          %v5057 = vpack.c.b16 %v4873, %v4872
          %v5058 = vpack.c.b16 %v4875, %v4874
          %v5059 = vpack.c.b16 %v4877, %v4876
          %v5060 = vpack.c.b16 %v4879, %v4878
          %v5061 = vpack.c.b16 %v4881, %v4880
          %v5062 = vpack.c.b16 %v4883, %v4882
          %v5063 = vpack.c.b16 %v4885, %v4884
          %v5064 = vpack.c.b16 %v4887, %v4886
          %v5065 = vpack.c.b16 %v4889, %v4888
          %v5066 = vpack.c.b16 %v4891, %v4890
          %v5067 = vpack.c.b16 %v4893, %v4892
          %v5068 = vpack.c.b16 %v4895, %v4894
          %v5069 = vpack.c.b16 %v4897, %v4896
          %v5070 = vpack.c.b16 %v4899, %v4898
          %v5071 = vpack.c.b16 %v4901, %v4900
          %v5072 = vpack.c.b16 %v4903, %v4902
          %v5073 = vpack.c.b16 %v4905, %v4904
          %v5074 = vpack.c.b16 %v4907, %v4906
          %v5075 = vpack.c.b16 %v4909, %v4908
          %v5076 = vpack.c.b16 %v4911, %v4910
          %v5077 = vpack.c.b16 %v4913, %v4912
          %v5078 = vpack.c.b16 %v4915, %v4914
          %v5079 = vpack.c.b16 %v4917, %v4916
          %v5080 = vpack.c.b16 %v4919, %v4918
          %v5081 = vpack.c.b16 %v4921, %v4920
          %v5082 = vpack.c.b16 %v4923, %v4922
          %v5083 = vpack.c.b16 %v4925, %v4924
          %v5084 = vpack.c.b16 %v4927, %v4926
          %v5085 = vpack.c.b16 %v4929, %v4928
          %v5086 = vpack.c.b16 %v4931, %v4930
          %v5087 = vpack.c.b16 %v4933, %v4932
          %v5088 = vpack.c.b16 %v4935, %v4934
          %v5089 = vpack.c.b16 %v4937, %v4936
          %v5090 = vpack.c.b16 %v4939, %v4938
          %v5091 = vpack.c.b16 %v4941, %v4940
          %v5092 = vpack.c.b16 %v4943, %v4942
          %v5093 = vpack.c.b16 %v4945, %v4944
          %v5094 = vpack.c.b16 %v4947, %v4946
          %v5095 = vpack.c.b16 %v4949, %v4948
          %v5096 = vpack.c.b16 %v4951, %v4950
          %v5097 = vpack.c.b16 %v4953, %v4952
          %v5098 = vpack.c.b16 %v4955, %v4954
          %v5099 = vpack.c.b16 %v4957, %v4956
          %v5100 = vpack.c.b16 %v4959, %v4958
          %v5101 = vpack.c.b16 %v4961, %v4960
          %v5102 = vpack.c.b16 %v4963, %v4962
          %v5103 = vpack.c.b16 %v4965, %v4964
          %v5104 = vpack.c.b16 %v4967, %v4966
          %v5105 = vpack.c.b16 %v4969, %v4968
          %v5106 = vpack.c.b16 %v4971, %v4970
          %v5107 = vpack.c.b16 %v4973, %v4972
          %v5108 = vpack.c.b16 %v4975, %v4974
          %v5109 = vpack.c.b16 %v4977, %v4976
          %v5110 = vpack.c.b16 %v4979, %v4978
          %v5111 = vpack.c.b16 %v4981, %v4980
          %v5112 = vpack.c.b16 %v4983, %v4982
          %v5113 = vpack.c.b16 %v4985, %v4984
          %5242 = vst [vmem:[%s232] sm:$0xff] %v4986
          %5243 = vst [vmem:[%s232 + $0x8] sm:$0xff] %v4987
          %5244 = vst [vmem:[%s232 + $0x10] sm:$0xff] %v4988
          %5245 = vst [vmem:[%s232 + $0x18] sm:$0xff] %v4989
          %5246 = vst [vmem:[%s232 + $0x20] sm:$0xff] %v4990
          %5247 = vst [vmem:[%s232 + $0x28] sm:$0xff] %v4991
          %5248 = vst [vmem:[%s232 + $0x30] sm:$0xff] %v4992
          %5249 = vst [vmem:[%s232 + $0x38] sm:$0xff] %v4993
          %5250 = vst [vmem:[%s232 + $0x40] sm:$0xff] %v4994
          %5251 = vst [vmem:[%s232 + $0x48] sm:$0xff] %v4995
          %5252 = vst [vmem:[%s232 + $0x50] sm:$0xff] %v4996
          %5253 = vst [vmem:[%s232 + $0x58] sm:$0xff] %v4997
          %5254 = vst [vmem:[%s232 + $0x60] sm:$0xff] %v4998
          %5255 = vst [vmem:[%s232 + $0x68] sm:$0xff] %v4999
          %5256 = vst [vmem:[%s232 + $0x70] sm:$0xff] %v5000
          %5257 = vst [vmem:[%s232 + $0x78] sm:$0xff] %v5001
          %5258 = vst [vmem:[%s232 + $0x80] sm:$0xff] %v5002
          %5259 = vst [vmem:[%s232 + $0x88] sm:$0xff] %v5003
          %5260 = vst [vmem:[%s232 + $0x90] sm:$0xff] %v5004
          %5261 = vst [vmem:[%s232 + $0x98] sm:$0xff] %v5005
          %5262 = vst [vmem:[%s232 + $0xa0] sm:$0xff] %v5006
          %5263 = vst [vmem:[%s232 + $0xa8] sm:$0xff] %v5007
          %5264 = vst [vmem:[%s232 + $0xb0] sm:$0xff] %v5008
          %5265 = vst [vmem:[%s232 + $0xb8] sm:$0xff] %v5009
          %5266 = vst [vmem:[%s232 + $0xc0] sm:$0xff] %v5010
          %5267 = vst [vmem:[%s232 + $0xc8] sm:$0xff] %v5011
          %5268 = vst [vmem:[%s232 + $0xd0] sm:$0xff] %v5012
          %5269 = vst [vmem:[%s232 + $0xd8] sm:$0xff] %v5013
          %5270 = vst [vmem:[%s232 + $0xe0] sm:$0xff] %v5014
          %5271 = vst [vmem:[%s232 + $0xe8] sm:$0xff] %v5015
          %5272 = vst [vmem:[%s232 + $0xf0] sm:$0xff] %v5016
          %5273 = vst [vmem:[%s232 + $0xf8] sm:$0xff] %v5017
          %5274 = vst [vmem:[%s232 + $0x100] sm:$0xff] %v5018
          %5275 = vst [vmem:[%s232 + $0x108] sm:$0xff] %v5019
          %5276 = vst [vmem:[%s232 + $0x110] sm:$0xff] %v5020
          %5277 = vst [vmem:[%s232 + $0x118] sm:$0xff] %v5021
          %5278 = vst [vmem:[%s232 + $0x120] sm:$0xff] %v5022
          %5279 = vst [vmem:[%s232 + $0x128] sm:$0xff] %v5023
          %5280 = vst [vmem:[%s232 + $0x130] sm:$0xff] %v5024
          %5281 = vst [vmem:[%s232 + $0x138] sm:$0xff] %v5025
          %5282 = vst [vmem:[%s232 + $0x140] sm:$0xff] %v5026
          %5283 = vst [vmem:[%s232 + $0x148] sm:$0xff] %v5027
          %5284 = vst [vmem:[%s232 + $0x150] sm:$0xff] %v5028
          %5285 = vst [vmem:[%s232 + $0x158] sm:$0xff] %v5029
          %5286 = vst [vmem:[%s232 + $0x160] sm:$0xff] %v5030
          %5287 = vst [vmem:[%s232 + $0x168] sm:$0xff] %v5031
          %5288 = vst [vmem:[%s232 + $0x170] sm:$0xff] %v5032
          %5289 = vst [vmem:[%s232 + $0x178] sm:$0xff] %v5033
          %5290 = vst [vmem:[%s232 + $0x180] sm:$0xff] %v5034
          %5291 = vst [vmem:[%s232 + $0x188] sm:$0xff] %v5035
          %5292 = vst [vmem:[%s232 + $0x190] sm:$0xff] %v5036
          %5293 = vst [vmem:[%s232 + $0x198] sm:$0xff] %v5037
          %5294 = vst [vmem:[%s232 + $0x1a0] sm:$0xff] %v5038
          %5295 = vst [vmem:[%s232 + $0x1a8] sm:$0xff] %v5039
          %5296 = vst [vmem:[%s232 + $0x1b0] sm:$0xff] %v5040
          %5297 = vst [vmem:[%s232 + $0x1b8] sm:$0xff] %v5041
          %5298 = vst [vmem:[%s232 + $0x1c0] sm:$0xff] %v5042
          %5299 = vst [vmem:[%s232 + $0x1c8] sm:$0xff] %v5043
          %5300 = vst [vmem:[%s232 + $0x1d0] sm:$0xff] %v5044
          %5301 = vst [vmem:[%s232 + $0x1d8] sm:$0xff] %v5045
          %5302 = vst [vmem:[%s232 + $0x1e0] sm:$0xff] %v5046
          %5303 = vst [vmem:[%s232 + $0x1e8] sm:$0xff] %v5047
          %5304 = vst [vmem:[%s232 + $0x1f0] sm:$0xff] %v5048
          %5305 = vst [vmem:[%s232 + $0x1f8] sm:$0xff] %v5049
          %5306 = vst [vmem:[%s232 + $0x200] sm:$0xff] %v5050
          %5307 = vst [vmem:[%s232 + $0x208] sm:$0xff] %v5051
          %5308 = vst [vmem:[%s232 + $0x210] sm:$0xff] %v5052
          %5309 = vst [vmem:[%s232 + $0x218] sm:$0xff] %v5053
          %5310 = vst [vmem:[%s232 + $0x220] sm:$0xff] %v5054
          %5311 = vst [vmem:[%s232 + $0x228] sm:$0xff] %v5055
          %5312 = vst [vmem:[%s232 + $0x230] sm:$0xff] %v5056
          %5313 = vst [vmem:[%s232 + $0x238] sm:$0xff] %v5057
          %5314 = vst [vmem:[%s232 + $0x240] sm:$0xff] %v5058
          %5315 = vst [vmem:[%s232 + $0x248] sm:$0xff] %v5059
          %5316 = vst [vmem:[%s232 + $0x250] sm:$0xff] %v5060
          %5317 = vst [vmem:[%s232 + $0x258] sm:$0xff] %v5061
          %5318 = vst [vmem:[%s232 + $0x260] sm:$0xff] %v5062
          %5319 = vst [vmem:[%s232 + $0x268] sm:$0xff] %v5063
          %5320 = vst [vmem:[%s232 + $0x270] sm:$0xff] %v5064
          %5321 = vst [vmem:[%s232 + $0x278] sm:$0xff] %v5065
          %5322 = vst [vmem:[%s232 + $0x280] sm:$0xff] %v5066
          %5323 = vst [vmem:[%s232 + $0x288] sm:$0xff] %v5067
          %5324 = vst [vmem:[%s232 + $0x290] sm:$0xff] %v5068
          %5325 = vst [vmem:[%s232 + $0x298] sm:$0xff] %v5069
          %5326 = vst [vmem:[%s232 + $0x2a0] sm:$0xff] %v5070
          %5327 = vst [vmem:[%s232 + $0x2a8] sm:$0xff] %v5071
          %5328 = vst [vmem:[%s232 + $0x2b0] sm:$0xff] %v5072
          %5329 = vst [vmem:[%s232 + $0x2b8] sm:$0xff] %v5073
          %5330 = vst [vmem:[%s232 + $0x2c0] sm:$0xff] %v5074
          %5331 = vst [vmem:[%s232 + $0x2c8] sm:$0xff] %v5075
          %5332 = vst [vmem:[%s232 + $0x2d0] sm:$0xff] %v5076
          %5333 = vst [vmem:[%s232 + $0x2d8] sm:$0xff] %v5077
          %5334 = vst [vmem:[%s232 + $0x2e0] sm:$0xff] %v5078
          %5335 = vst [vmem:[%s232 + $0x2e8] sm:$0xff] %v5079
          %5336 = vst [vmem:[%s232 + $0x2f0] sm:$0xff] %v5080
          %5337 = vst [vmem:[%s232 + $0x2f8] sm:$0xff] %v5081
          %5338 = vst [vmem:[%s232 + $0x300] sm:$0xff] %v5082
          %5339 = vst [vmem:[%s232 + $0x308] sm:$0xff] %v5083
          %5340 = vst [vmem:[%s232 + $0x310] sm:$0xff] %v5084
          %5341 = vst [vmem:[%s232 + $0x318] sm:$0xff] %v5085
          %5342 = vst [vmem:[%s232 + $0x320] sm:$0xff] %v5086
          %5343 = vst [vmem:[%s232 + $0x328] sm:$0xff] %v5087
          %5344 = vst [vmem:[%s232 + $0x330] sm:$0xff] %v5088
          %5345 = vst [vmem:[%s232 + $0x338] sm:$0xff] %v5089
          %5346 = vst [vmem:[%s232 + $0x340] sm:$0xff] %v5090
          %5347 = vst [vmem:[%s232 + $0x348] sm:$0xff] %v5091
          %5348 = vst [vmem:[%s232 + $0x350] sm:$0xff] %v5092
          %5349 = vst [vmem:[%s232 + $0x358] sm:$0xff] %v5093
          %5350 = vst [vmem:[%s232 + $0x360] sm:$0xff] %v5094
          %5351 = vst [vmem:[%s232 + $0x368] sm:$0xff] %v5095
          %5352 = vst [vmem:[%s232 + $0x370] sm:$0xff] %v5096
          %5353 = vst [vmem:[%s232 + $0x378] sm:$0xff] %v5097
          %5354 = vst [vmem:[%s232 + $0x380] sm:$0xff] %v5098
          %5355 = vst [vmem:[%s232 + $0x388] sm:$0xff] %v5099
          %5356 = vst [vmem:[%s232 + $0x390] sm:$0xff] %v5100
          %5357 = vst [vmem:[%s232 + $0x398] sm:$0xff] %v5101
          %5358 = vst [vmem:[%s232 + $0x3a0] sm:$0xff] %v5102
          %5359 = vst [vmem:[%s232 + $0x3a8] sm:$0xff] %v5103
          %5360 = vst [vmem:[%s232 + $0x3b0] sm:$0xff] %v5104
          %5361 = vst [vmem:[%s232 + $0x3b8] sm:$0xff] %v5105
          %5362 = vst [vmem:[%s232 + $0x3c0] sm:$0xff] %v5106
          %5363 = vst [vmem:[%s232 + $0x3c8] sm:$0xff] %v5107
          %5364 = vst [vmem:[%s232 + $0x3d0] sm:$0xff] %v5108
          %5365 = vst [vmem:[%s232 + $0x3d8] sm:$0xff] %v5109
          %5366 = vst [vmem:[%s232 + $0x3e0] sm:$0xff] %v5110
          %5367 = vst [vmem:[%s232 + $0x3e8] sm:$0xff] %v5111
          %5368 = vst [vmem:[%s232 + $0x3f0] sm:$0xff] %v5112
          %5369 = vst [vmem:[%s232 + $0x3f8] sm:$0xff] %v5113
        $region44: #{tpu_custom_call.1} parent=27 // pred_fallthru
          _
        %s5370 = sand.u32 %s107, 1
        %s5371 = scalar_lea.sflag [#allocation5], %s5370
        %s5372 = sand.u32 %s107, 1
        %s5373 = smul.addr %s5372, 1024
        %s5374 = scalar_lea.vmem [#allocation8], %s5373
        // Predicated region
        $region45: #{tpu_custom_call.1} parent=27 // pred_check
          %p5375 = pneg %p117
        $region46: #{tpu_custom_call.1} parent=27 // pred_check_branch
          %5377 = sbr.rel (%p5375) target = $region48
        $region47: #{tpu_custom_call.1} parent=27 // pred_region
          %s5378 = smul.u32 64, %s27
          %s5379 = smul.u32 4, %s28
          %s5381 = ssub.s32 16384, 16384
          %5382 = vsyncadd %s5371, %s5381
          %s5383 = smul.addr %s5378, 8
          %s5384 = sadd.s32 %s5379, %s5383
          %s5385 = smul.addr %s5384, 64
          %s5386 = scalar_lea.hbm %s2, %s5385
          %s5387 = sshll.u32 %s5374, 4
          %s5388 = int_to_ptr.vmem [resolvable:$true] %s5387
          %5393 = dma.vmem_to_hbm [thread:$0]  %s5388, 16384, %s5386, %s5371, 256, 512, 16
        $region48: #{tpu_custom_call.1} parent=27 // pred_fallthru
          _
      $region28: #{tpu_custom_call.1} parent=5 // pred_fallthru
        _
      %p5394 = scmp.le.s32.totalorder 2, %s17
      // Predicated region
      $region49: #{tpu_custom_call.1} parent=5 // pred_check
        %p5395 = pneg %p5394
      $region50: #{tpu_custom_call.1} parent=5 // pred_check_branch
        %5397 = sbr.rel (%p5395) target = $region52
      $region51: #{tpu_custom_call.1} parent=5 // pred_region
        %s5398 = ssub.s32 %s17, 2
        // Predicated region
        $region53: #{tpu_custom_call.1} parent=51 // pred_check
          %p5399 = pneg %p123
        $region54: #{tpu_custom_call.1} parent=51 // pred_check_branch
          %5401 = sbr.rel (%p5399) target = $region56
        $region55: #{tpu_custom_call.1} parent=51 // pred_region
          %s5402 = sand.u32 %s108, 1
          %s5403 = scalar_lea.sflag [#allocation5], %s5402
          %s5404 = sand.u32 %s108, 1
          %s5405 = smul.addr %s5404, 1024
          %s5406 = scalar_lea.vmem [#allocation8], %s5405
          %5407 = dma.done %s5403, 16384
        $region56: #{tpu_custom_call.1} parent=51 // pred_fallthru
          _
      $region52: #{tpu_custom_call.1} parent=5 // pred_fallthru
        _
    $region6: #{tpu_custom_call.1} parent=1 // loop_footer
      %s21 = sadd.s32 1, %s17
    $region7: #{tpu_custom_call.1} parent=1 // loop_footer_branch
      %16 = sbr.rel target = $region3
    $region8: #{tpu_custom_call.1} parent=1 // loop_exit
      _
    %5408 = vsyncpa [#allocation4], 1
    %s5409 = scalar_lea.sflag [#allocation4], 1
    %5410 = vsyncpa %s5409, 1
    %5411 = vsyncpa [#allocation7], 1
    %s5412 = scalar_lea.sflag [#allocation7], 1
    %5413 = vsyncpa %s5412, 1
    %5414 = vsyncpa [#allocation5], 1
    %s5415 = scalar_lea.sflag [#allocation5], 1
    %5416 = vsyncpa %s5415, 1

</llo_original>
